<compile_context>
chip_gen: v7x
topology: tpu7x:2x2x1
jax: 0.10.0
libtpu: 0.0.40
codegen_flags: <defaults>
</compile_context>

<pallas_src>
import functools

import jax
import jax.numpy as jnp
import numpy as np
from jax.experimental import pallas as pl
from jax.experimental.pallas import tpu as pltpu


# ----------------------------------------------------------------------------
# Fused kernel: LSTM layer 0 -> LSTM layer 1 -> FC head -> argmax.
# ----------------------------------------------------------------------------
def _fused_lstm_kernel(T, B,
                       x_ref,                       # (T*B, E) f32, time-major rows
                       wih0_ref, whh0_ref, b0_ref,  # (E,4H) bf16, (H,4H) bf16, (1,4H) f32
                       wih1_ref, whh1_ref, b1_ref,  # (H,4H) bf16, (H,4H) bf16, (1,4H) f32
                       fw1_ref, fb1_ref,            # (H,MID) bf16, (1,MID) f32
                       fw2_ref, fb2_ref,            # (MID,C) bf16, (1,C)  f32
                       logits_ref,                  # (B, C) f32
                       preds_ref,                   # (B, 1) int32
                       xp_sc,                       # VMEM (T*B, 4H) f32  (reused per layer)
                       h1seq_sc):                   # VMEM (T*B, H)  f32  (layer-0 outputs)
    H = whh0_ref.shape[0]

    def cell(gates, c_prev):
        # PyTorch nn.LSTM gate order: i, f, g, o
        i_g = jax.nn.sigmoid(gates[:, 0 * H:1 * H])
        f_g = jax.nn.sigmoid(gates[:, 1 * H:2 * H])
        g_g = jnp.tanh(gates[:, 2 * H:3 * H])
        o_g = jax.nn.sigmoid(gates[:, 3 * H:4 * H])
        c_new = f_g * c_prev + i_g * g_g
        h_new = o_g * jnp.tanh(c_new)
        return h_new, c_new

    # ---- LSTM layer 0: hoisted input projection (one GEMM) + bias ----------
    x_b = x_ref[...].astype(jnp.bfloat16)                        # (T*B, E)
    xp_sc[...] = (jnp.dot(x_b, wih0_ref[...],
                          preferred_element_type=jnp.float32)
                  + b0_ref[...])                                 # (T*B, 4H)

    whh0 = whh0_ref[...]                                         # bf16 (H, 4H)
    h = jnp.zeros((B, H), jnp.float32)
    c = jnp.zeros((B, H), jnp.float32)
    for t in range(T):                                           # serial recurrence
        gates = xp_sc[t * B:(t + 1) * B, :] + jnp.dot(
            h.astype(jnp.bfloat16), whh0, preferred_element_type=jnp.float32)
        h, c = cell(gates, c)
        h1seq_sc[t * B:(t + 1) * B, :] = h
    # inter-layer dropout(0.25) is identity in eval mode

    # ---- LSTM layer 1: hoisted input projection over the stored h1 seq -----
    h1_b = h1seq_sc[...].astype(jnp.bfloat16)                    # (T*B, H)
    xp_sc[...] = (jnp.dot(h1_b, wih1_ref[...],
                          preferred_element_type=jnp.float32)
                  + b1_ref[...])

    whh1 = whh1_ref[...]
    h = jnp.zeros((B, H), jnp.float32)
    c = jnp.zeros((B, H), jnp.float32)
    for t in range(T):
        gates = xp_sc[t * B:(t + 1) * B, :] + jnp.dot(
            h.astype(jnp.bfloat16), whh1, preferred_element_type=jnp.float32)
        h, c = cell(gates, c)
    # h == hn of last layer (only state consumed; no hidden sequence emitted)

    # ---- FC head: Linear -> (Dropout = id at eval) -> Tanh -> Linear -------
    z = jnp.tanh(jnp.dot(h.astype(jnp.bfloat16), fw1_ref[...],
                         preferred_element_type=jnp.float32) + fb1_ref[...])
    logits = jnp.dot(z.astype(jnp.bfloat16), fw2_ref[...],
                     preferred_element_type=jnp.float32) + fb2_ref[...]
    logits_ref[...] = logits.astype(logits_ref.dtype)

    # ---- argmax (first max index, matches torch/jnp argmax) -----------------
    col = jax.lax.broadcasted_iota(jnp.int32, logits.shape, 1)
    max_v = jnp.max(logits, axis=-1, keepdims=True)
    masked = jnp.where(logits == max_v, col, jnp.iinfo(jnp.int32).max)
    preds_ref[...] = jnp.min(masked, axis=-1, keepdims=True)


# ----------------------------------------------------------------------------
# Wrapper: one fused pallas_call, everything resident in VMEM.
# ----------------------------------------------------------------------------
@jax.jit
def lstm_model_forward(embeddings, params):
    """embeddings: (B, T, E) batch-first, like BertEmbedding output."""
    B, T, E = embeddings.shape
    H = params["whh0_t"].shape[0]
    C = params["fw2_t"].shape[1]

    # time-major, flattened to (T*B, E) so the layer-0 input projection is one GEMM
    x_flat = jnp.transpose(embeddings, (1, 0, 2)).reshape(T * B, E)

    vmem_spec = pl.BlockSpec(memory_space=pltpu.MemorySpace.VMEM)

    logits, preds = pl.pallas_call(
        functools.partial(_fused_lstm_kernel, T, B),
        out_shape=(jax.ShapeDtypeStruct((B, C), jnp.float32),
                   jax.ShapeDtypeStruct((B, 1), jnp.int32)),
        in_specs=[vmem_spec] * 11,
        out_specs=(vmem_spec, vmem_spec),
        scratch_shapes=[
            pltpu.VMEM((T * B, 4 * H), jnp.float32),   # hoisted gate projections
            pltpu.VMEM((T * B, H), jnp.float32),       # layer-0 hidden sequence
        ],
    )(x_flat,
      params["wih0_t"], params["whh0_t"], params["b0"],
      params["wih1_t"], params["whh1_t"], params["b1"],
      params["fw1_t"], params["fb1"], params["fw2_t"], params["fb2"])

    return logits, preds[:, 0]


# ----------------------------------------------------------------------------
# Pure-JAX reference (same precision policy: bf16 matmul operands, f32 accum).
# ----------------------------------------------------------------------------
def _reference_forward(embeddings, params):
    def one_layer(x_tbe, wih_t, whh_t, b):
        T, Bb, _ = x_tbe.shape
        H = whh_t.shape[0]

        def step(carry, x_t):
            h, c = carry
            gates = (jnp.dot(x_t.astype(jnp.bfloat16), wih_t,
                             preferred_element_type=jnp.float32)
                     + jnp.dot(h.astype(jnp.bfloat16), whh_t,
                               preferred_element_type=jnp.float32)
                     + b[0])
            i = jax.nn.sigmoid(gates[:, :H])
            f = jax.nn.sigmoid(gates[:, H:2 * H])
            g = jnp.tanh(gates[:, 2 * H:3 * H])
            o = jax.nn.sigmoid(gates[:, 3 * H:])
            c_new = f * c + i * g
            h_new = o * jnp.tanh(c_new)
            return (h_new, c_new), h_new

        init = (jnp.zeros((Bb, H), jnp.float32), jnp.zeros((Bb, H), jnp.float32))
        (hn, _), hs = jax.lax.scan(step, init, x_tbe)
        return hs, hn

    x = jnp.transpose(embeddings, (1, 0, 2))
    h1_seq, _ = one_layer(x, params["wih0_t"], params["whh0_t"], params["b0"])
    _, hn = one_layer(h1_seq, params["wih1_t"], params["whh1_t"], params["b1"])
    z = jnp.tanh(jnp.dot(hn.astype(jnp.bfloat16), params["fw1_t"],
                         preferred_element_type=jnp.float32) + params["fb1"][0])
    logits = jnp.dot(z.astype(jnp.bfloat16), params["fw2_t"],
                     preferred_element_type=jnp.float32) + params["fb2"][0]
    return logits, jnp.argmax(logits, axis=-1)


if __name__ == "__main__":
    # Small shapes consistent with the module structure (scaled: 1024->128, 512->256).
    B, T, E = 2, 8, 128       # batch, seq len, embedding dim
    H, MID, C = 128, 256, 8   # LSTM hidden, fc mid, num classes

    key = jax.random.PRNGKey(0)
    ks = jax.random.split(key, 11)
    s = 0.05

    def w(k, shape):  # bf16 weights (MXU-native)
        return (jax.random.normal(k, shape, dtype=jnp.float32) * s).astype(jnp.bfloat16)

    def bias(k, shape):  # f32 biases
        return (jax.random.normal(k, shape, dtype=jnp.float32) * s).astype(jnp.float32)

    params = {
        # LSTM layer 0: PyTorch weight_ih (4H,E) / weight_hh (4H,H), pre-transposed
        "wih0_t": w(ks[0], (E, 4 * H)),
        "whh0_t": w(ks[1], (H, 4 * H)),
        "b0": bias(ks[2], (1, 4 * H)),          # b_ih + b_hh combined
        # LSTM layer 1
        "wih1_t": w(ks[3], (H, 4 * H)),
        "whh1_t": w(ks[4], (H, 4 * H)),
        "b1": bias(ks[5], (1, 4 * H)),
        # FC head
        "fw1_t": w(ks[6], (H, MID)),
        "fb1": bias(ks[7], (1, MID)),
        "fw2_t": w(ks[8], (MID, C)),
        "fb2": bias(ks[9], (1, C)),
    }

    embeddings = jax.random.normal(ks[10], (B, T, E), dtype=jnp.float32)

    logits, preds = lstm_model_forward(embeddings, params)
    logits, preds = jax.block_until_ready((logits, preds))

    ref_logits, ref_preds = _reference_forward(embeddings, params)
    np.testing.assert_allclose(np.asarray(logits), np.asarray(ref_logits),
                               rtol=1e-3, atol=1e-3)
    assert np.array_equal(np.asarray(preds), np.asarray(ref_preds))
    assert logits.shape == (B, C) and preds.shape == (B,)

    print("KERNEL_OK")
</pallas_src>

<mosaic_0001>
module attributes {stable_mosaic.version = 11 : i64} {
  func.func @_fused_lstm_kernel(%arg0: memref<16x128xf32, #tpu.memory_space<vmem>>, %arg1: memref<128x512xbf16, #tpu.memory_space<vmem>>, %arg2: memref<128x512xbf16, #tpu.memory_space<vmem>>, %arg3: memref<1x512xf32, #tpu.memory_space<vmem>>, %arg4: memref<128x512xbf16, #tpu.memory_space<vmem>>, %arg5: memref<128x512xbf16, #tpu.memory_space<vmem>>, %arg6: memref<1x512xf32, #tpu.memory_space<vmem>>, %arg7: memref<128x256xbf16, #tpu.memory_space<vmem>>, %arg8: memref<1x256xf32, #tpu.memory_space<vmem>>, %arg9: memref<256x8xbf16, #tpu.memory_space<vmem>>, %arg10: memref<1x8xf32, #tpu.memory_space<vmem>>, %arg11: memref<2x8xf32, #tpu.memory_space<vmem>>, %arg12: memref<2x1xi32, #tpu.memory_space<vmem>>, %arg13: memref<16x512xf32, #tpu.memory_space<vmem>>, %arg14: memref<16x128xf32, #tpu.memory_space<vmem>>) attributes {dimension_semantics = [], scalar_prefetch = 0 : i64, scratch_operands = 2 : i64, tpu.core_type = #tpu.core_type<tc>} {
    %c0 = arith.constant 0 : index
    %c0_0 = arith.constant 0 : index
    %0 = vector.load %arg0[%c0, %c0_0] : memref<16x128xf32, #tpu.memory_space<vmem>>, vector<16x128xf32>
    %1 = arith.truncf %0 : vector<16x128xf32> to vector<16x128xbf16>
    %c0_1 = arith.constant 0 : index
    %c0_2 = arith.constant 0 : index
    %2 = vector.load %arg1[%c0_1, %c0_2] : memref<128x512xbf16, #tpu.memory_space<vmem>>, vector<128x512xbf16>
    %cst = arith.constant dense<0.000000e+00> : vector<16x512xf32>
    %3 = tpu.matmul %1, %2, %cst {dimension_numbers = #tpu.dot_dimension_numbers<[1], [0], [0], [1], [0, 0, 1, 1], [], []>} : vector<16x128xbf16>, vector<128x512xbf16>, vector<16x512xf32> -> vector<16x512xf32>
    %c0_3 = arith.constant 0 : index
    %c0_4 = arith.constant 0 : index
    %4 = vector.load %arg3[%c0_3, %c0_4] : memref<1x512xf32, #tpu.memory_space<vmem>>, vector<1x512xf32>
    %5 = vector.broadcast %4 : vector<1x512xf32> to vector<16x512xf32>
    %6 = arith.addf %3, %5 : vector<16x512xf32>
    %c0_5 = arith.constant 0 : index
    %c0_6 = arith.constant 0 : index
    %7 = vector.load %arg13[%c0_5, %c0_6] : memref<16x512xf32, #tpu.memory_space<vmem>>, vector<16x512xf32>
    tpu.vector_store %arg13[%c0_5, %c0_6], %6 {strides = array<i32>} : memref<16x512xf32, #tpu.memory_space<vmem>>, vector<16x512xf32>,
    %c0_7 = arith.constant 0 : index
    %c0_8 = arith.constant 0 : index
    %8 = vector.load %arg2[%c0_7, %c0_8] : memref<128x512xbf16, #tpu.memory_space<vmem>>, vector<128x512xbf16>
    %cst_9 = arith.constant 0.000000e+00 : f32
    %9 = vector.broadcast %cst_9 : f32 to vector<2x128xf32>
    %cst_10 = arith.constant 0.000000e+00 : f32
    %10 = vector.broadcast %cst_10 : f32 to vector<2x128xf32>
    %c0_11 = arith.constant 0 : index
    %c0_12 = arith.constant 0 : index
    %11 = vector.load %arg13[%c0_11, %c0_12] : memref<16x512xf32, #tpu.memory_space<vmem>>, vector<2x512xf32>
    %12 = arith.truncf %9 : vector<2x128xf32> to vector<2x128xbf16>
    %cst_13 = arith.constant dense<0.000000e+00> : vector<2x512xf32>
    %13 = tpu.matmul %12, %8, %cst_13 {dimension_numbers = #tpu.dot_dimension_numbers<[1], [0], [0], [1], [0, 0, 1, 1], [], []>} : vector<2x128xbf16>, vector<128x512xbf16>, vector<2x512xf32> -> vector<2x512xf32>
    %14 = arith.addf %11, %13 : vector<2x512xf32>
    %15 = vector.extract_strided_slice %14 {offsets = [0, 0], sizes = [2, 128], strides = [1, 1]} : vector<2x512xf32> to vector<2x128xf32>
    %16 = arith.negf %15 : vector<2x128xf32>
    %17 = math.exp %16 : vector<2x128xf32>
    %cst_14 = arith.constant 1.000000e+00 : f32
    %18 = vector.broadcast %cst_14 : f32 to vector<2x128xf32>
    %19 = arith.addf %18, %17 : vector<2x128xf32>
    %20 = arith.divf %18, %19 : vector<2x128xf32>
    %21 = vector.extract_strided_slice %14 {offsets = [0, 128], sizes = [2, 128], strides = [1, 1]} : vector<2x512xf32> to vector<2x128xf32>
    %22 = arith.negf %21 : vector<2x128xf32>
    %23 = math.exp %22 : vector<2x128xf32>
    %cst_15 = arith.constant 1.000000e+00 : f32
    %24 = vector.broadcast %cst_15 : f32 to vector<2x128xf32>
    %25 = arith.addf %24, %23 : vector<2x128xf32>
    %26 = arith.divf %24, %25 : vector<2x128xf32>
    %27 = vector.extract_strided_slice %14 {offsets = [0, 256], sizes = [2, 128], strides = [1, 1]} : vector<2x512xf32> to vector<2x128xf32>
    %28 = math.tanh %27 : vector<2x128xf32>
    %29 = vector.extract_strided_slice %14 {offsets = [0, 384], sizes = [2, 128], strides = [1, 1]} : vector<2x512xf32> to vector<2x128xf32>
    %30 = arith.negf %29 : vector<2x128xf32>
    %31 = math.exp %30 : vector<2x128xf32>
    %cst_16 = arith.constant 1.000000e+00 : f32
    %32 = vector.broadcast %cst_16 : f32 to vector<2x128xf32>
    %33 = arith.addf %32, %31 : vector<2x128xf32>
    %34 = arith.divf %32, %33 : vector<2x128xf32>
    %35 = arith.mulf %26, %10 : vector<2x128xf32>
    %36 = arith.mulf %20, %28 : vector<2x128xf32>
    %37 = arith.addf %35, %36 : vector<2x128xf32>
    %38 = math.tanh %37 : vector<2x128xf32>
    %39 = arith.mulf %34, %38 : vector<2x128xf32>
    %c0_17 = arith.constant 0 : index
    %c0_18 = arith.constant 0 : index
    %40 = vector.load %arg14[%c0_17, %c0_18] : memref<16x128xf32, #tpu.memory_space<vmem>>, vector<2x128xf32>
    tpu.vector_store %arg14[%c0_17, %c0_18], %39 {strides = array<i32>} : memref<16x128xf32, #tpu.memory_space<vmem>>, vector<2x128xf32>,
    %c2 = arith.constant 2 : index
    %c0_19 = arith.constant 0 : index
    %41 = vector.load %arg13[%c2, %c0_19] : memref<16x512xf32, #tpu.memory_space<vmem>>, vector<2x512xf32>
    %42 = arith.truncf %39 : vector<2x128xf32> to vector<2x128xbf16>
    %cst_20 = arith.constant dense<0.000000e+00> : vector<2x512xf32>
    %43 = tpu.matmul %42, %8, %cst_20 {dimension_numbers = #tpu.dot_dimension_numbers<[1], [0], [0], [1], [0, 0, 1, 1], [], []>} : vector<2x128xbf16>, vector<128x512xbf16>, vector<2x512xf32> -> vector<2x512xf32>
    %44 = arith.addf %41, %43 : vector<2x512xf32>
    %45 = vector.extract_strided_slice %44 {offsets = [0, 0], sizes = [2, 128], strides = [1, 1]} : vector<2x512xf32> to vector<2x128xf32>
    %46 = arith.negf %45 : vector<2x128xf32>
    %47 = math.exp %46 : vector<2x128xf32>
    %cst_21 = arith.constant 1.000000e+00 : f32
    %48 = vector.broadcast %cst_21 : f32 to vector<2x128xf32>
    %49 = arith.addf %48, %47 : vector<2x128xf32>
    %50 = arith.divf %48, %49 : vector<2x128xf32>
    %51 = vector.extract_strided_slice %44 {offsets = [0, 128], sizes = [2, 128], strides = [1, 1]} : vector<2x512xf32> to vector<2x128xf32>
    %52 = arith.negf %51 : vector<2x128xf32>
    %53 = math.exp %52 : vector<2x128xf32>
    %cst_22 = arith.constant 1.000000e+00 : f32
    %54 = vector.broadcast %cst_22 : f32 to vector<2x128xf32>
    %55 = arith.addf %54, %53 : vector<2x128xf32>
    %56 = arith.divf %54, %55 : vector<2x128xf32>
    %57 = vector.extract_strided_slice %44 {offsets = [0, 256], sizes = [2, 128], strides = [1, 1]} : vector<2x512xf32> to vector<2x128xf32>
    %58 = math.tanh %57 : vector<2x128xf32>
    %59 = vector.extract_strided_slice %44 {offsets = [0, 384], sizes = [2, 128], strides = [1, 1]} : vector<2x512xf32> to vector<2x128xf32>
    %60 = arith.negf %59 : vector<2x128xf32>
    %61 = math.exp %60 : vector<2x128xf32>
    %cst_23 = arith.constant 1.000000e+00 : f32
    %62 = vector.broadcast %cst_23 : f32 to vector<2x128xf32>
    %63 = arith.addf %62, %61 : vector<2x128xf32>
    %64 = arith.divf %62, %63 : vector<2x128xf32>
    %65 = arith.mulf %56, %37 : vector<2x128xf32>
    %66 = arith.mulf %50, %58 : vector<2x128xf32>
    %67 = arith.addf %65, %66 : vector<2x128xf32>
    %68 = math.tanh %67 : vector<2x128xf32>
    %69 = arith.mulf %64, %68 : vector<2x128xf32>
    %c2_24 = arith.constant 2 : index
    %c0_25 = arith.constant 0 : index
    %70 = vector.load %arg14[%c2_24, %c0_25] : memref<16x128xf32, #tpu.memory_space<vmem>>, vector<2x128xf32>
    tpu.vector_store %arg14[%c2_24, %c0_25], %69 {strides = array<i32>} : memref<16x128xf32, #tpu.memory_space<vmem>>, vector<2x128xf32>,
    %c4 = arith.constant 4 : index
    %c0_26 = arith.constant 0 : index
    %71 = vector.load %arg13[%c4, %c0_26] : memref<16x512xf32, #tpu.memory_space<vmem>>, vector<2x512xf32>
    %72 = arith.truncf %69 : vector<2x128xf32> to vector<2x128xbf16>
    %cst_27 = arith.constant dense<0.000000e+00> : vector<2x512xf32>
    %73 = tpu.matmul %72, %8, %cst_27 {dimension_numbers = #tpu.dot_dimension_numbers<[1], [0], [0], [1], [0, 0, 1, 1], [], []>} : vector<2x128xbf16>, vector<128x512xbf16>, vector<2x512xf32> -> vector<2x512xf32>
    %74 = arith.addf %71, %73 : vector<2x512xf32>
    %75 = vector.extract_strided_slice %74 {offsets = [0, 0], sizes = [2, 128], strides = [1, 1]} : vector<2x512xf32> to vector<2x128xf32>
    %76 = arith.negf %75 : vector<2x128xf32>
    %77 = math.exp %76 : vector<2x128xf32>
    %cst_28 = arith.constant 1.000000e+00 : f32
    %78 = vector.broadcast %cst_28 : f32 to vector<2x128xf32>
    %79 = arith.addf %78, %77 : vector<2x128xf32>
    %80 = arith.divf %78, %79 : vector<2x128xf32>
    %81 = vector.extract_strided_slice %74 {offsets = [0, 128], sizes = [2, 128], strides = [1, 1]} : vector<2x512xf32> to vector<2x128xf32>
    %82 = arith.negf %81 : vector<2x128xf32>
    %83 = math.exp %82 : vector<2x128xf32>
    %cst_29 = arith.constant 1.000000e+00 : f32
    %84 = vector.broadcast %cst_29 : f32 to vector<2x128xf32>
    %85 = arith.addf %84, %83 : vector<2x128xf32>
    %86 = arith.divf %84, %85 : vector<2x128xf32>
    %87 = vector.extract_strided_slice %74 {offsets = [0, 256], sizes = [2, 128], strides = [1, 1]} : vector<2x512xf32> to vector<2x128xf32>
    %88 = math.tanh %87 : vector<2x128xf32>
    %89 = vector.extract_strided_slice %74 {offsets = [0, 384], sizes = [2, 128], strides = [1, 1]} : vector<2x512xf32> to vector<2x128xf32>
    %90 = arith.negf %89 : vector<2x128xf32>
    %91 = math.exp %90 : vector<2x128xf32>
    %cst_30 = arith.constant 1.000000e+00 : f32
    %92 = vector.broadcast %cst_30 : f32 to vector<2x128xf32>
    %93 = arith.addf %92, %91 : vector<2x128xf32>
    %94 = arith.divf %92, %93 : vector<2x128xf32>
    %95 = arith.mulf %86, %67 : vector<2x128xf32>
    %96 = arith.mulf %80, %88 : vector<2x128xf32>
    %97 = arith.addf %95, %96 : vector<2x128xf32>
    %98 = math.tanh %97 : vector<2x128xf32>
    %99 = arith.mulf %94, %98 : vector<2x128xf32>
    %c4_31 = arith.constant 4 : index
    %c0_32 = arith.constant 0 : index
    %100 = vector.load %arg14[%c4_31, %c0_32] : memref<16x128xf32, #tpu.memory_space<vmem>>, vector<2x128xf32>
    tpu.vector_store %arg14[%c4_31, %c0_32], %99 {strides = array<i32>} : memref<16x128xf32, #tpu.memory_space<vmem>>, vector<2x128xf32>,
    %c6 = arith.constant 6 : index
    %c0_33 = arith.constant 0 : index
    %101 = vector.load %arg13[%c6, %c0_33] : memref<16x512xf32, #tpu.memory_space<vmem>>, vector<2x512xf32>
    %102 = arith.truncf %99 : vector<2x128xf32> to vector<2x128xbf16>
    %cst_34 = arith.constant dense<0.000000e+00> : vector<2x512xf32>
    %103 = tpu.matmul %102, %8, %cst_34 {dimension_numbers = #tpu.dot_dimension_numbers<[1], [0], [0], [1], [0, 0, 1, 1], [], []>} : vector<2x128xbf16>, vector<128x512xbf16>, vector<2x512xf32> -> vector<2x512xf32>
    %104 = arith.addf %101, %103 : vector<2x512xf32>
    %105 = vector.extract_strided_slice %104 {offsets = [0, 0], sizes = [2, 128], strides = [1, 1]} : vector<2x512xf32> to vector<2x128xf32>
    %106 = arith.negf %105 : vector<2x128xf32>
    %107 = math.exp %106 : vector<2x128xf32>
    %cst_35 = arith.constant 1.000000e+00 : f32
    %108 = vector.broadcast %cst_35 : f32 to vector<2x128xf32>
    %109 = arith.addf %108, %107 : vector<2x128xf32>
    %110 = arith.divf %108, %109 : vector<2x128xf32>
    %111 = vector.extract_strided_slice %104 {offsets = [0, 128], sizes = [2, 128], strides = [1, 1]} : vector<2x512xf32> to vector<2x128xf32>
    %112 = arith.negf %111 : vector<2x128xf32>
    %113 = math.exp %112 : vector<2x128xf32>
    %cst_36 = arith.constant 1.000000e+00 : f32
    %114 = vector.broadcast %cst_36 : f32 to vector<2x128xf32>
    %115 = arith.addf %114, %113 : vector<2x128xf32>
    %116 = arith.divf %114, %115 : vector<2x128xf32>
    %117 = vector.extract_strided_slice %104 {offsets = [0, 256], sizes = [2, 128], strides = [1, 1]} : vector<2x512xf32> to vector<2x128xf32>
    %118 = math.tanh %117 : vector<2x128xf32>
    %119 = vector.extract_strided_slice %104 {offsets = [0, 384], sizes = [2, 128], strides = [1, 1]} : vector<2x512xf32> to vector<2x128xf32>
    %120 = arith.negf %119 : vector<2x128xf32>
    %121 = math.exp %120 : vector<2x128xf32>
    %cst_37 = arith.constant 1.000000e+00 : f32
    %122 = vector.broadcast %cst_37 : f32 to vector<2x128xf32>
    %123 = arith.addf %122, %121 : vector<2x128xf32>
    %124 = arith.divf %122, %123 : vector<2x128xf32>
    %125 = arith.mulf %116, %97 : vector<2x128xf32>
    %126 = arith.mulf %110, %118 : vector<2x128xf32>
    %127 = arith.addf %125, %126 : vector<2x128xf32>
    %128 = math.tanh %127 : vector<2x128xf32>
    %129 = arith.mulf %124, %128 : vector<2x128xf32>
    %c6_38 = arith.constant 6 : index
    %c0_39 = arith.constant 0 : index
    %130 = vector.load %arg14[%c6_38, %c0_39] : memref<16x128xf32, #tpu.memory_space<vmem>>, vector<2x128xf32>
    tpu.vector_store %arg14[%c6_38, %c0_39], %129 {strides = array<i32>} : memref<16x128xf32, #tpu.memory_space<vmem>>, vector<2x128xf32>,
    %c8 = arith.constant 8 : index
    %c0_40 = arith.constant 0 : index
    %131 = vector.load %arg13[%c8, %c0_40] : memref<16x512xf32, #tpu.memory_space<vmem>>, vector<2x512xf32>
    %132 = arith.truncf %129 : vector<2x128xf32> to vector<2x128xbf16>
    %cst_41 = arith.constant dense<0.000000e+00> : vector<2x512xf32>
    %133 = tpu.matmul %132, %8, %cst_41 {dimension_numbers = #tpu.dot_dimension_numbers<[1], [0], [0], [1], [0, 0, 1, 1], [], []>} : vector<2x128xbf16>, vector<128x512xbf16>, vector<2x512xf32> -> vector<2x512xf32>
    %134 = arith.addf %131, %133 : vector<2x512xf32>
    %135 = vector.extract_strided_slice %134 {offsets = [0, 0], sizes = [2, 128], strides = [1, 1]} : vector<2x512xf32> to vector<2x128xf32>
    %136 = arith.negf %135 : vector<2x128xf32>
    %137 = math.exp %136 : vector<2x128xf32>
    %cst_42 = arith.constant 1.000000e+00 : f32
    %138 = vector.broadcast %cst_42 : f32 to vector<2x128xf32>
    %139 = arith.addf %138, %137 : vector<2x128xf32>
    %140 = arith.divf %138, %139 : vector<2x128xf32>
    %141 = vector.extract_strided_slice %134 {offsets = [0, 128], sizes = [2, 128], strides = [1, 1]} : vector<2x512xf32> to vector<2x128xf32>
    %142 = arith.negf %141 : vector<2x128xf32>
    %143 = math.exp %142 : vector<2x128xf32>
    %cst_43 = arith.constant 1.000000e+00 : f32
    %144 = vector.broadcast %cst_43 : f32 to vector<2x128xf32>
    %145 = arith.addf %144, %143 : vector<2x128xf32>
    %146 = arith.divf %144, %145 : vector<2x128xf32>
    %147 = vector.extract_strided_slice %134 {offsets = [0, 256], sizes = [2, 128], strides = [1, 1]} : vector<2x512xf32> to vector<2x128xf32>
    %148 = math.tanh %147 : vector<2x128xf32>
    %149 = vector.extract_strided_slice %134 {offsets = [0, 384], sizes = [2, 128], strides = [1, 1]} : vector<2x512xf32> to vector<2x128xf32>
    %150 = arith.negf %149 : vector<2x128xf32>
    %151 = math.exp %150 : vector<2x128xf32>
    %cst_44 = arith.constant 1.000000e+00 : f32
    %152 = vector.broadcast %cst_44 : f32 to vector<2x128xf32>
    %153 = arith.addf %152, %151 : vector<2x128xf32>
    %154 = arith.divf %152, %153 : vector<2x128xf32>
    %155 = arith.mulf %146, %127 : vector<2x128xf32>
    %156 = arith.mulf %140, %148 : vector<2x128xf32>
    %157 = arith.addf %155, %156 : vector<2x128xf32>
    %158 = math.tanh %157 : vector<2x128xf32>
    %159 = arith.mulf %154, %158 : vector<2x128xf32>
    %c8_45 = arith.constant 8 : index
    %c0_46 = arith.constant 0 : index
    %160 = vector.load %arg14[%c8_45, %c0_46] : memref<16x128xf32, #tpu.memory_space<vmem>>, vector<2x128xf32>
    tpu.vector_store %arg14[%c8_45, %c0_46], %159 {strides = array<i32>} : memref<16x128xf32, #tpu.memory_space<vmem>>, vector<2x128xf32>,
    %c10 = arith.constant 10 : index
    %c0_47 = arith.constant 0 : index
    %161 = vector.load %arg13[%c10, %c0_47] : memref<16x512xf32, #tpu.memory_space<vmem>>, vector<2x512xf32>
    %162 = arith.truncf %159 : vector<2x128xf32> to vector<2x128xbf16>
    %cst_48 = arith.constant dense<0.000000e+00> : vector<2x512xf32>
    %163 = tpu.matmul %162, %8, %cst_48 {dimension_numbers = #tpu.dot_dimension_numbers<[1], [0], [0], [1], [0, 0, 1, 1], [], []>} : vector<2x128xbf16>, vector<128x512xbf16>, vector<2x512xf32> -> vector<2x512xf32>
    %164 = arith.addf %161, %163 : vector<2x512xf32>
    %165 = vector.extract_strided_slice %164 {offsets = [0, 0], sizes = [2, 128], strides = [1, 1]} : vector<2x512xf32> to vector<2x128xf32>
    %166 = arith.negf %165 : vector<2x128xf32>
    %167 = math.exp %166 : vector<2x128xf32>
    %cst_49 = arith.constant 1.000000e+00 : f32
    %168 = vector.broadcast %cst_49 : f32 to vector<2x128xf32>
    %169 = arith.addf %168, %167 : vector<2x128xf32>
    %170 = arith.divf %168, %169 : vector<2x128xf32>
    %171 = vector.extract_strided_slice %164 {offsets = [0, 128], sizes = [2, 128], strides = [1, 1]} : vector<2x512xf32> to vector<2x128xf32>
    %172 = arith.negf %171 : vector<2x128xf32>
    %173 = math.exp %172 : vector<2x128xf32>
    %cst_50 = arith.constant 1.000000e+00 : f32
    %174 = vector.broadcast %cst_50 : f32 to vector<2x128xf32>
    %175 = arith.addf %174, %173 : vector<2x128xf32>
    %176 = arith.divf %174, %175 : vector<2x128xf32>
    %177 = vector.extract_strided_slice %164 {offsets = [0, 256], sizes = [2, 128], strides = [1, 1]} : vector<2x512xf32> to vector<2x128xf32>
    %178 = math.tanh %177 : vector<2x128xf32>
    %179 = vector.extract_strided_slice %164 {offsets = [0, 384], sizes = [2, 128], strides = [1, 1]} : vector<2x512xf32> to vector<2x128xf32>
    %180 = arith.negf %179 : vector<2x128xf32>
    %181 = math.exp %180 : vector<2x128xf32>
    %cst_51 = arith.constant 1.000000e+00 : f32
    %182 = vector.broadcast %cst_51 : f32 to vector<2x128xf32>
    %183 = arith.addf %182, %181 : vector<2x128xf32>
    %184 = arith.divf %182, %183 : vector<2x128xf32>
    %185 = arith.mulf %176, %157 : vector<2x128xf32>
    %186 = arith.mulf %170, %178 : vector<2x128xf32>
    %187 = arith.addf %185, %186 : vector<2x128xf32>
    %188 = math.tanh %187 : vector<2x128xf32>
    %189 = arith.mulf %184, %188 : vector<2x128xf32>
    %c10_52 = arith.constant 10 : index
    %c0_53 = arith.constant 0 : index
    %190 = vector.load %arg14[%c10_52, %c0_53] : memref<16x128xf32, #tpu.memory_space<vmem>>, vector<2x128xf32>
    tpu.vector_store %arg14[%c10_52, %c0_53], %189 {strides = array<i32>} : memref<16x128xf32, #tpu.memory_space<vmem>>, vector<2x128xf32>,
    %c12 = arith.constant 12 : index
    %c0_54 = arith.constant 0 : index
    %191 = vector.load %arg13[%c12, %c0_54] : memref<16x512xf32, #tpu.memory_space<vmem>>, vector<2x512xf32>
    %192 = arith.truncf %189 : vector<2x128xf32> to vector<2x128xbf16>
    %cst_55 = arith.constant dense<0.000000e+00> : vector<2x512xf32>
    %193 = tpu.matmul %192, %8, %cst_55 {dimension_numbers = #tpu.dot_dimension_numbers<[1], [0], [0], [1], [0, 0, 1, 1], [], []>} : vector<2x128xbf16>, vector<128x512xbf16>, vector<2x512xf32> -> vector<2x512xf32>
    %194 = arith.addf %191, %193 : vector<2x512xf32>
    %195 = vector.extract_strided_slice %194 {offsets = [0, 0], sizes = [2, 128], strides = [1, 1]} : vector<2x512xf32> to vector<2x128xf32>
    %196 = arith.negf %195 : vector<2x128xf32>
    %197 = math.exp %196 : vector<2x128xf32>
    %cst_56 = arith.constant 1.000000e+00 : f32
    %198 = vector.broadcast %cst_56 : f32 to vector<2x128xf32>
    %199 = arith.addf %198, %197 : vector<2x128xf32>
    %200 = arith.divf %198, %199 : vector<2x128xf32>
    %201 = vector.extract_strided_slice %194 {offsets = [0, 128], sizes = [2, 128], strides = [1, 1]} : vector<2x512xf32> to vector<2x128xf32>
    %202 = arith.negf %201 : vector<2x128xf32>
    %203 = math.exp %202 : vector<2x128xf32>
    %cst_57 = arith.constant 1.000000e+00 : f32
    %204 = vector.broadcast %cst_57 : f32 to vector<2x128xf32>
    %205 = arith.addf %204, %203 : vector<2x128xf32>
    %206 = arith.divf %204, %205 : vector<2x128xf32>
    %207 = vector.extract_strided_slice %194 {offsets = [0, 256], sizes = [2, 128], strides = [1, 1]} : vector<2x512xf32> to vector<2x128xf32>
    %208 = math.tanh %207 : vector<2x128xf32>
    %209 = vector.extract_strided_slice %194 {offsets = [0, 384], sizes = [2, 128], strides = [1, 1]} : vector<2x512xf32> to vector<2x128xf32>
    %210 = arith.negf %209 : vector<2x128xf32>
    %211 = math.exp %210 : vector<2x128xf32>
    %cst_58 = arith.constant 1.000000e+00 : f32
    %212 = vector.broadcast %cst_58 : f32 to vector<2x128xf32>
    %213 = arith.addf %212, %211 : vector<2x128xf32>
    %214 = arith.divf %212, %213 : vector<2x128xf32>
    %215 = arith.mulf %206, %187 : vector<2x128xf32>
    %216 = arith.mulf %200, %208 : vector<2x128xf32>
    %217 = arith.addf %215, %216 : vector<2x128xf32>
    %218 = math.tanh %217 : vector<2x128xf32>
    %219 = arith.mulf %214, %218 : vector<2x128xf32>
    %c12_59 = arith.constant 12 : index
    %c0_60 = arith.constant 0 : index
    %220 = vector.load %arg14[%c12_59, %c0_60] : memref<16x128xf32, #tpu.memory_space<vmem>>, vector<2x128xf32>
    tpu.vector_store %arg14[%c12_59, %c0_60], %219 {strides = array<i32>} : memref<16x128xf32, #tpu.memory_space<vmem>>, vector<2x128xf32>,
    %c14 = arith.constant 14 : index
    %c0_61 = arith.constant 0 : index
    %221 = vector.load %arg13[%c14, %c0_61] : memref<16x512xf32, #tpu.memory_space<vmem>>, vector<2x512xf32>
    %222 = arith.truncf %219 : vector<2x128xf32> to vector<2x128xbf16>
    %cst_62 = arith.constant dense<0.000000e+00> : vector<2x512xf32>
    %223 = tpu.matmul %222, %8, %cst_62 {dimension_numbers = #tpu.dot_dimension_numbers<[1], [0], [0], [1], [0, 0, 1, 1], [], []>} : vector<2x128xbf16>, vector<128x512xbf16>, vector<2x512xf32> -> vector<2x512xf32>
    %224 = arith.addf %221, %223 : vector<2x512xf32>
    %225 = vector.extract_strided_slice %224 {offsets = [0, 0], sizes = [2, 128], strides = [1, 1]} : vector<2x512xf32> to vector<2x128xf32>
    %226 = arith.negf %225 : vector<2x128xf32>
    %227 = math.exp %226 : vector<2x128xf32>
    %cst_63 = arith.constant 1.000000e+00 : f32
    %228 = vector.broadcast %cst_63 : f32 to vector<2x128xf32>
    %229 = arith.addf %228, %227 : vector<2x128xf32>
    %230 = arith.divf %228, %229 : vector<2x128xf32>
    %231 = vector.extract_strided_slice %224 {offsets = [0, 128], sizes = [2, 128], strides = [1, 1]} : vector<2x512xf32> to vector<2x128xf32>
    %232 = arith.negf %231 : vector<2x128xf32>
    %233 = math.exp %232 : vector<2x128xf32>
    %cst_64 = arith.constant 1.000000e+00 : f32
    %234 = vector.broadcast %cst_64 : f32 to vector<2x128xf32>
    %235 = arith.addf %234, %233 : vector<2x128xf32>
    %236 = arith.divf %234, %235 : vector<2x128xf32>
    %237 = vector.extract_strided_slice %224 {offsets = [0, 256], sizes = [2, 128], strides = [1, 1]} : vector<2x512xf32> to vector<2x128xf32>
    %238 = math.tanh %237 : vector<2x128xf32>
    %239 = vector.extract_strided_slice %224 {offsets = [0, 384], sizes = [2, 128], strides = [1, 1]} : vector<2x512xf32> to vector<2x128xf32>
    %240 = arith.negf %239 : vector<2x128xf32>
    %241 = math.exp %240 : vector<2x128xf32>
    %cst_65 = arith.constant 1.000000e+00 : f32
    %242 = vector.broadcast %cst_65 : f32 to vector<2x128xf32>
    %243 = arith.addf %242, %241 : vector<2x128xf32>
    %244 = arith.divf %242, %243 : vector<2x128xf32>
    %245 = arith.mulf %236, %217 : vector<2x128xf32>
    %246 = arith.mulf %230, %238 : vector<2x128xf32>
    %247 = arith.addf %245, %246 : vector<2x128xf32>
    %248 = math.tanh %247 : vector<2x128xf32>
    %249 = arith.mulf %244, %248 : vector<2x128xf32>
    %c14_66 = arith.constant 14 : index
    %c0_67 = arith.constant 0 : index
    %250 = vector.load %arg14[%c14_66, %c0_67] : memref<16x128xf32, #tpu.memory_space<vmem>>, vector<2x128xf32>
    tpu.vector_store %arg14[%c14_66, %c0_67], %249 {strides = array<i32>} : memref<16x128xf32, #tpu.memory_space<vmem>>, vector<2x128xf32>,
    %c0_68 = arith.constant 0 : index
    %c0_69 = arith.constant 0 : index
    %251 = vector.load %arg14[%c0_68, %c0_69] : memref<16x128xf32, #tpu.memory_space<vmem>>, vector<16x128xf32>
    %252 = arith.truncf %251 : vector<16x128xf32> to vector<16x128xbf16>
    %c0_70 = arith.constant 0 : index
    %c0_71 = arith.constant 0 : index
    %253 = vector.load %arg4[%c0_70, %c0_71] : memref<128x512xbf16, #tpu.memory_space<vmem>>, vector<128x512xbf16>
    %cst_72 = arith.constant dense<0.000000e+00> : vector<16x512xf32>
    %254 = tpu.matmul %252, %253, %cst_72 {dimension_numbers = #tpu.dot_dimension_numbers<[1], [0], [0], [1], [0, 0, 1, 1], [], []>} : vector<16x128xbf16>, vector<128x512xbf16>, vector<16x512xf32> -> vector<16x512xf32>
    %c0_73 = arith.constant 0 : index
    %c0_74 = arith.constant 0 : index
    %255 = vector.load %arg6[%c0_73, %c0_74] : memref<1x512xf32, #tpu.memory_space<vmem>>, vector<1x512xf32>
    %256 = vector.broadcast %255 : vector<1x512xf32> to vector<16x512xf32>
    %257 = arith.addf %254, %256 : vector<16x512xf32>
    %c0_75 = arith.constant 0 : index
    %c0_76 = arith.constant 0 : index
    %258 = vector.load %arg13[%c0_75, %c0_76] : memref<16x512xf32, #tpu.memory_space<vmem>>, vector<16x512xf32>
    tpu.vector_store %arg13[%c0_75, %c0_76], %257 {strides = array<i32>} : memref<16x512xf32, #tpu.memory_space<vmem>>, vector<16x512xf32>,
    %c0_77 = arith.constant 0 : index
    %c0_78 = arith.constant 0 : index
    %259 = vector.load %arg5[%c0_77, %c0_78] : memref<128x512xbf16, #tpu.memory_space<vmem>>, vector<128x512xbf16>
    %cst_79 = arith.constant 0.000000e+00 : f32
    %260 = vector.broadcast %cst_79 : f32 to vector<2x128xf32>
    %cst_80 = arith.constant 0.000000e+00 : f32
    %261 = vector.broadcast %cst_80 : f32 to vector<2x128xf32>
    %c0_81 = arith.constant 0 : index
    %c0_82 = arith.constant 0 : index
    %262 = vector.load %arg13[%c0_81, %c0_82] : memref<16x512xf32, #tpu.memory_space<vmem>>, vector<2x512xf32>
    %263 = arith.truncf %260 : vector<2x128xf32> to vector<2x128xbf16>
    %cst_83 = arith.constant dense<0.000000e+00> : vector<2x512xf32>
    %264 = tpu.matmul %263, %259, %cst_83 {dimension_numbers = #tpu.dot_dimension_numbers<[1], [0], [0], [1], [0, 0, 1, 1], [], []>} : vector<2x128xbf16>, vector<128x512xbf16>, vector<2x512xf32> -> vector<2x512xf32>
    %265 = arith.addf %262, %264 : vector<2x512xf32>
    %266 = vector.extract_strided_slice %265 {offsets = [0, 0], sizes = [2, 128], strides = [1, 1]} : vector<2x512xf32> to vector<2x128xf32>
    %267 = arith.negf %266 : vector<2x128xf32>
    %268 = math.exp %267 : vector<2x128xf32>
    %cst_84 = arith.constant 1.000000e+00 : f32
    %269 = vector.broadcast %cst_84 : f32 to vector<2x128xf32>
    %270 = arith.addf %269, %268 : vector<2x128xf32>
    %271 = arith.divf %269, %270 : vector<2x128xf32>
    %272 = vector.extract_strided_slice %265 {offsets = [0, 128], sizes = [2, 128], strides = [1, 1]} : vector<2x512xf32> to vector<2x128xf32>
    %273 = arith.negf %272 : vector<2x128xf32>
    %274 = math.exp %273 : vector<2x128xf32>
    %cst_85 = arith.constant 1.000000e+00 : f32
    %275 = vector.broadcast %cst_85 : f32 to vector<2x128xf32>
    %276 = arith.addf %275, %274 : vector<2x128xf32>
    %277 = arith.divf %275, %276 : vector<2x128xf32>
    %278 = vector.extract_strided_slice %265 {offsets = [0, 256], sizes = [2, 128], strides = [1, 1]} : vector<2x512xf32> to vector<2x128xf32>
    %279 = math.tanh %278 : vector<2x128xf32>
    %280 = vector.extract_strided_slice %265 {offsets = [0, 384], sizes = [2, 128], strides = [1, 1]} : vector<2x512xf32> to vector<2x128xf32>
    %281 = arith.negf %280 : vector<2x128xf32>
    %282 = math.exp %281 : vector<2x128xf32>
    %cst_86 = arith.constant 1.000000e+00 : f32
    %283 = vector.broadcast %cst_86 : f32 to vector<2x128xf32>
    %284 = arith.addf %283, %282 : vector<2x128xf32>
    %285 = arith.divf %283, %284 : vector<2x128xf32>
    %286 = arith.mulf %277, %261 : vector<2x128xf32>
    %287 = arith.mulf %271, %279 : vector<2x128xf32>
    %288 = arith.addf %286, %287 : vector<2x128xf32>
    %289 = math.tanh %288 : vector<2x128xf32>
    %290 = arith.mulf %285, %289 : vector<2x128xf32>
    %c2_87 = arith.constant 2 : index
    %c0_88 = arith.constant 0 : index
    %291 = vector.load %arg13[%c2_87, %c0_88] : memref<16x512xf32, #tpu.memory_space<vmem>>, vector<2x512xf32>
    %292 = arith.truncf %290 : vector<2x128xf32> to vector<2x128xbf16>
    %cst_89 = arith.constant dense<0.000000e+00> : vector<2x512xf32>
    %293 = tpu.matmul %292, %259, %cst_89 {dimension_numbers = #tpu.dot_dimension_numbers<[1], [0], [0], [1], [0, 0, 1, 1], [], []>} : vector<2x128xbf16>, vector<128x512xbf16>, vector<2x512xf32> -> vector<2x512xf32>
    %294 = arith.addf %291, %293 : vector<2x512xf32>
    %295 = vector.extract_strided_slice %294 {offsets = [0, 0], sizes = [2, 128], strides = [1, 1]} : vector<2x512xf32> to vector<2x128xf32>
    %296 = arith.negf %295 : vector<2x128xf32>
    %297 = math.exp %296 : vector<2x128xf32>
    %cst_90 = arith.constant 1.000000e+00 : f32
    %298 = vector.broadcast %cst_90 : f32 to vector<2x128xf32>
    %299 = arith.addf %298, %297 : vector<2x128xf32>
    %300 = arith.divf %298, %299 : vector<2x128xf32>
    %301 = vector.extract_strided_slice %294 {offsets = [0, 128], sizes = [2, 128], strides = [1, 1]} : vector<2x512xf32> to vector<2x128xf32>
    %302 = arith.negf %301 : vector<2x128xf32>
    %303 = math.exp %302 : vector<2x128xf32>
    %cst_91 = arith.constant 1.000000e+00 : f32
    %304 = vector.broadcast %cst_91 : f32 to vector<2x128xf32>
    %305 = arith.addf %304, %303 : vector<2x128xf32>
    %306 = arith.divf %304, %305 : vector<2x128xf32>
    %307 = vector.extract_strided_slice %294 {offsets = [0, 256], sizes = [2, 128], strides = [1, 1]} : vector<2x512xf32> to vector<2x128xf32>
    %308 = math.tanh %307 : vector<2x128xf32>
    %309 = vector.extract_strided_slice %294 {offsets = [0, 384], sizes = [2, 128], strides = [1, 1]} : vector<2x512xf32> to vector<2x128xf32>
    %310 = arith.negf %309 : vector<2x128xf32>
    %311 = math.exp %310 : vector<2x128xf32>
    %cst_92 = arith.constant 1.000000e+00 : f32
    %312 = vector.broadcast %cst_92 : f32 to vector<2x128xf32>
    %313 = arith.addf %312, %311 : vector<2x128xf32>
    %314 = arith.divf %312, %313 : vector<2x128xf32>
    %315 = arith.mulf %306, %288 : vector<2x128xf32>
    %316 = arith.mulf %300, %308 : vector<2x128xf32>
    %317 = arith.addf %315, %316 : vector<2x128xf32>
    %318 = math.tanh %317 : vector<2x128xf32>
    %319 = arith.mulf %314, %318 : vector<2x128xf32>
    %c4_93 = arith.constant 4 : index
    %c0_94 = arith.constant 0 : index
    %320 = vector.load %arg13[%c4_93, %c0_94] : memref<16x512xf32, #tpu.memory_space<vmem>>, vector<2x512xf32>
    %321 = arith.truncf %319 : vector<2x128xf32> to vector<2x128xbf16>
    %cst_95 = arith.constant dense<0.000000e+00> : vector<2x512xf32>
    %322 = tpu.matmul %321, %259, %cst_95 {dimension_numbers = #tpu.dot_dimension_numbers<[1], [0], [0], [1], [0, 0, 1, 1], [], []>} : vector<2x128xbf16>, vector<128x512xbf16>, vector<2x512xf32> -> vector<2x512xf32>
    %323 = arith.addf %320, %322 : vector<2x512xf32>
    %324 = vector.extract_strided_slice %323 {offsets = [0, 0], sizes = [2, 128], strides = [1, 1]} : vector<2x512xf32> to vector<2x128xf32>
    %325 = arith.negf %324 : vector<2x128xf32>
    %326 = math.exp %325 : vector<2x128xf32>
    %cst_96 = arith.constant 1.000000e+00 : f32
    %327 = vector.broadcast %cst_96 : f32 to vector<2x128xf32>
    %328 = arith.addf %327, %326 : vector<2x128xf32>
    %329 = arith.divf %327, %328 : vector<2x128xf32>
    %330 = vector.extract_strided_slice %323 {offsets = [0, 128], sizes = [2, 128], strides = [1, 1]} : vector<2x512xf32> to vector<2x128xf32>
    %331 = arith.negf %330 : vector<2x128xf32>
    %332 = math.exp %331 : vector<2x128xf32>
    %cst_97 = arith.constant 1.000000e+00 : f32
    %333 = vector.broadcast %cst_97 : f32 to vector<2x128xf32>
    %334 = arith.addf %333, %332 : vector<2x128xf32>
    %335 = arith.divf %333, %334 : vector<2x128xf32>
    %336 = vector.extract_strided_slice %323 {offsets = [0, 256], sizes = [2, 128], strides = [1, 1]} : vector<2x512xf32> to vector<2x128xf32>
    %337 = math.tanh %336 : vector<2x128xf32>
    %338 = vector.extract_strided_slice %323 {offsets = [0, 384], sizes = [2, 128], strides = [1, 1]} : vector<2x512xf32> to vector<2x128xf32>
    %339 = arith.negf %338 : vector<2x128xf32>
    %340 = math.exp %339 : vector<2x128xf32>
    %cst_98 = arith.constant 1.000000e+00 : f32
    %341 = vector.broadcast %cst_98 : f32 to vector<2x128xf32>
    %342 = arith.addf %341, %340 : vector<2x128xf32>
    %343 = arith.divf %341, %342 : vector<2x128xf32>
    %344 = arith.mulf %335, %317 : vector<2x128xf32>
    %345 = arith.mulf %329, %337 : vector<2x128xf32>
    %346 = arith.addf %344, %345 : vector<2x128xf32>
    %347 = math.tanh %346 : vector<2x128xf32>
    %348 = arith.mulf %343, %347 : vector<2x128xf32>
    %c6_99 = arith.constant 6 : index
    %c0_100 = arith.constant 0 : index
    %349 = vector.load %arg13[%c6_99, %c0_100] : memref<16x512xf32, #tpu.memory_space<vmem>>, vector<2x512xf32>
    %350 = arith.truncf %348 : vector<2x128xf32> to vector<2x128xbf16>
    %cst_101 = arith.constant dense<0.000000e+00> : vector<2x512xf32>
    %351 = tpu.matmul %350, %259, %cst_101 {dimension_numbers = #tpu.dot_dimension_numbers<[1], [0], [0], [1], [0, 0, 1, 1], [], []>} : vector<2x128xbf16>, vector<128x512xbf16>, vector<2x512xf32> -> vector<2x512xf32>
    %352 = arith.addf %349, %351 : vector<2x512xf32>
    %353 = vector.extract_strided_slice %352 {offsets = [0, 0], sizes = [2, 128], strides = [1, 1]} : vector<2x512xf32> to vector<2x128xf32>
    %354 = arith.negf %353 : vector<2x128xf32>
    %355 = math.exp %354 : vector<2x128xf32>
    %cst_102 = arith.constant 1.000000e+00 : f32
    %356 = vector.broadcast %cst_102 : f32 to vector<2x128xf32>
    %357 = arith.addf %356, %355 : vector<2x128xf32>
    %358 = arith.divf %356, %357 : vector<2x128xf32>
    %359 = vector.extract_strided_slice %352 {offsets = [0, 128], sizes = [2, 128], strides = [1, 1]} : vector<2x512xf32> to vector<2x128xf32>
    %360 = arith.negf %359 : vector<2x128xf32>
    %361 = math.exp %360 : vector<2x128xf32>
    %cst_103 = arith.constant 1.000000e+00 : f32
    %362 = vector.broadcast %cst_103 : f32 to vector<2x128xf32>
    %363 = arith.addf %362, %361 : vector<2x128xf32>
    %364 = arith.divf %362, %363 : vector<2x128xf32>
    %365 = vector.extract_strided_slice %352 {offsets = [0, 256], sizes = [2, 128], strides = [1, 1]} : vector<2x512xf32> to vector<2x128xf32>
    %366 = math.tanh %365 : vector<2x128xf32>
    %367 = vector.extract_strided_slice %352 {offsets = [0, 384], sizes = [2, 128], strides = [1, 1]} : vector<2x512xf32> to vector<2x128xf32>
    %368 = arith.negf %367 : vector<2x128xf32>
    %369 = math.exp %368 : vector<2x128xf32>
    %cst_104 = arith.constant 1.000000e+00 : f32
    %370 = vector.broadcast %cst_104 : f32 to vector<2x128xf32>
    %371 = arith.addf %370, %369 : vector<2x128xf32>
    %372 = arith.divf %370, %371 : vector<2x128xf32>
    %373 = arith.mulf %364, %346 : vector<2x128xf32>
    %374 = arith.mulf %358, %366 : vector<2x128xf32>
    %375 = arith.addf %373, %374 : vector<2x128xf32>
    %376 = math.tanh %375 : vector<2x128xf32>
    %377 = arith.mulf %372, %376 : vector<2x128xf32>
    %c8_105 = arith.constant 8 : index
    %c0_106 = arith.constant 0 : index
    %378 = vector.load %arg13[%c8_105, %c0_106] : memref<16x512xf32, #tpu.memory_space<vmem>>, vector<2x512xf32>
    %379 = arith.truncf %377 : vector<2x128xf32> to vector<2x128xbf16>
    %cst_107 = arith.constant dense<0.000000e+00> : vector<2x512xf32>
    %380 = tpu.matmul %379, %259, %cst_107 {dimension_numbers = #tpu.dot_dimension_numbers<[1], [0], [0], [1], [0, 0, 1, 1], [], []>} : vector<2x128xbf16>, vector<128x512xbf16>, vector<2x512xf32> -> vector<2x512xf32>
    %381 = arith.addf %378, %380 : vector<2x512xf32>
    %382 = vector.extract_strided_slice %381 {offsets = [0, 0], sizes = [2, 128], strides = [1, 1]} : vector<2x512xf32> to vector<2x128xf32>
    %383 = arith.negf %382 : vector<2x128xf32>
    %384 = math.exp %383 : vector<2x128xf32>
    %cst_108 = arith.constant 1.000000e+00 : f32
    %385 = vector.broadcast %cst_108 : f32 to vector<2x128xf32>
    %386 = arith.addf %385, %384 : vector<2x128xf32>
    %387 = arith.divf %385, %386 : vector<2x128xf32>
    %388 = vector.extract_strided_slice %381 {offsets = [0, 128], sizes = [2, 128], strides = [1, 1]} : vector<2x512xf32> to vector<2x128xf32>
    %389 = arith.negf %388 : vector<2x128xf32>
    %390 = math.exp %389 : vector<2x128xf32>
    %cst_109 = arith.constant 1.000000e+00 : f32
    %391 = vector.broadcast %cst_109 : f32 to vector<2x128xf32>
    %392 = arith.addf %391, %390 : vector<2x128xf32>
    %393 = arith.divf %391, %392 : vector<2x128xf32>
    %394 = vector.extract_strided_slice %381 {offsets = [0, 256], sizes = [2, 128], strides = [1, 1]} : vector<2x512xf32> to vector<2x128xf32>
    %395 = math.tanh %394 : vector<2x128xf32>
    %396 = vector.extract_strided_slice %381 {offsets = [0, 384], sizes = [2, 128], strides = [1, 1]} : vector<2x512xf32> to vector<2x128xf32>
    %397 = arith.negf %396 : vector<2x128xf32>
    %398 = math.exp %397 : vector<2x128xf32>
    %cst_110 = arith.constant 1.000000e+00 : f32
    %399 = vector.broadcast %cst_110 : f32 to vector<2x128xf32>
    %400 = arith.addf %399, %398 : vector<2x128xf32>
    %401 = arith.divf %399, %400 : vector<2x128xf32>
    %402 = arith.mulf %393, %375 : vector<2x128xf32>
    %403 = arith.mulf %387, %395 : vector<2x128xf32>
    %404 = arith.addf %402, %403 : vector<2x128xf32>
    %405 = math.tanh %404 : vector<2x128xf32>
    %406 = arith.mulf %401, %405 : vector<2x128xf32>
    %c10_111 = arith.constant 10 : index
    %c0_112 = arith.constant 0 : index
    %407 = vector.load %arg13[%c10_111, %c0_112] : memref<16x512xf32, #tpu.memory_space<vmem>>, vector<2x512xf32>
    %408 = arith.truncf %406 : vector<2x128xf32> to vector<2x128xbf16>
    %cst_113 = arith.constant dense<0.000000e+00> : vector<2x512xf32>
    %409 = tpu.matmul %408, %259, %cst_113 {dimension_numbers = #tpu.dot_dimension_numbers<[1], [0], [0], [1], [0, 0, 1, 1], [], []>} : vector<2x128xbf16>, vector<128x512xbf16>, vector<2x512xf32> -> vector<2x512xf32>
    %410 = arith.addf %407, %409 : vector<2x512xf32>
    %411 = vector.extract_strided_slice %410 {offsets = [0, 0], sizes = [2, 128], strides = [1, 1]} : vector<2x512xf32> to vector<2x128xf32>
    %412 = arith.negf %411 : vector<2x128xf32>
    %413 = math.exp %412 : vector<2x128xf32>
    %cst_114 = arith.constant 1.000000e+00 : f32
    %414 = vector.broadcast %cst_114 : f32 to vector<2x128xf32>
    %415 = arith.addf %414, %413 : vector<2x128xf32>
    %416 = arith.divf %414, %415 : vector<2x128xf32>
    %417 = vector.extract_strided_slice %410 {offsets = [0, 128], sizes = [2, 128], strides = [1, 1]} : vector<2x512xf32> to vector<2x128xf32>
    %418 = arith.negf %417 : vector<2x128xf32>
    %419 = math.exp %418 : vector<2x128xf32>
    %cst_115 = arith.constant 1.000000e+00 : f32
    %420 = vector.broadcast %cst_115 : f32 to vector<2x128xf32>
    %421 = arith.addf %420, %419 : vector<2x128xf32>
    %422 = arith.divf %420, %421 : vector<2x128xf32>
    %423 = vector.extract_strided_slice %410 {offsets = [0, 256], sizes = [2, 128], strides = [1, 1]} : vector<2x512xf32> to vector<2x128xf32>
    %424 = math.tanh %423 : vector<2x128xf32>
    %425 = vector.extract_strided_slice %410 {offsets = [0, 384], sizes = [2, 128], strides = [1, 1]} : vector<2x512xf32> to vector<2x128xf32>
    %426 = arith.negf %425 : vector<2x128xf32>
    %427 = math.exp %426 : vector<2x128xf32>
    %cst_116 = arith.constant 1.000000e+00 : f32
    %428 = vector.broadcast %cst_116 : f32 to vector<2x128xf32>
    %429 = arith.addf %428, %427 : vector<2x128xf32>
    %430 = arith.divf %428, %429 : vector<2x128xf32>
    %431 = arith.mulf %422, %404 : vector<2x128xf32>
    %432 = arith.mulf %416, %424 : vector<2x128xf32>
    %433 = arith.addf %431, %432 : vector<2x128xf32>
    %434 = math.tanh %433 : vector<2x128xf32>
    %435 = arith.mulf %430, %434 : vector<2x128xf32>
    %c12_117 = arith.constant 12 : index
    %c0_118 = arith.constant 0 : index
    %436 = vector.load %arg13[%c12_117, %c0_118] : memref<16x512xf32, #tpu.memory_space<vmem>>, vector<2x512xf32>
    %437 = arith.truncf %435 : vector<2x128xf32> to vector<2x128xbf16>
    %cst_119 = arith.constant dense<0.000000e+00> : vector<2x512xf32>
    %438 = tpu.matmul %437, %259, %cst_119 {dimension_numbers = #tpu.dot_dimension_numbers<[1], [0], [0], [1], [0, 0, 1, 1], [], []>} : vector<2x128xbf16>, vector<128x512xbf16>, vector<2x512xf32> -> vector<2x512xf32>
    %439 = arith.addf %436, %438 : vector<2x512xf32>
    %440 = vector.extract_strided_slice %439 {offsets = [0, 0], sizes = [2, 128], strides = [1, 1]} : vector<2x512xf32> to vector<2x128xf32>
    %441 = arith.negf %440 : vector<2x128xf32>
    %442 = math.exp %441 : vector<2x128xf32>
    %cst_120 = arith.constant 1.000000e+00 : f32
    %443 = vector.broadcast %cst_120 : f32 to vector<2x128xf32>
    %444 = arith.addf %443, %442 : vector<2x128xf32>
    %445 = arith.divf %443, %444 : vector<2x128xf32>
    %446 = vector.extract_strided_slice %439 {offsets = [0, 128], sizes = [2, 128], strides = [1, 1]} : vector<2x512xf32> to vector<2x128xf32>
    %447 = arith.negf %446 : vector<2x128xf32>
    %448 = math.exp %447 : vector<2x128xf32>
    %cst_121 = arith.constant 1.000000e+00 : f32
    %449 = vector.broadcast %cst_121 : f32 to vector<2x128xf32>
    %450 = arith.addf %449, %448 : vector<2x128xf32>
    %451 = arith.divf %449, %450 : vector<2x128xf32>
    %452 = vector.extract_strided_slice %439 {offsets = [0, 256], sizes = [2, 128], strides = [1, 1]} : vector<2x512xf32> to vector<2x128xf32>
    %453 = math.tanh %452 : vector<2x128xf32>
    %454 = vector.extract_strided_slice %439 {offsets = [0, 384], sizes = [2, 128], strides = [1, 1]} : vector<2x512xf32> to vector<2x128xf32>
    %455 = arith.negf %454 : vector<2x128xf32>
    %456 = math.exp %455 : vector<2x128xf32>
    %cst_122 = arith.constant 1.000000e+00 : f32
    %457 = vector.broadcast %cst_122 : f32 to vector<2x128xf32>
    %458 = arith.addf %457, %456 : vector<2x128xf32>
    %459 = arith.divf %457, %458 : vector<2x128xf32>
    %460 = arith.mulf %451, %433 : vector<2x128xf32>
    %461 = arith.mulf %445, %453 : vector<2x128xf32>
    %462 = arith.addf %460, %461 : vector<2x128xf32>
    %463 = math.tanh %462 : vector<2x128xf32>
    %464 = arith.mulf %459, %463 : vector<2x128xf32>
    %c14_123 = arith.constant 14 : index
    %c0_124 = arith.constant 0 : index
    %465 = vector.load %arg13[%c14_123, %c0_124] : memref<16x512xf32, #tpu.memory_space<vmem>>, vector<2x512xf32>
    %466 = arith.truncf %464 : vector<2x128xf32> to vector<2x128xbf16>
    %cst_125 = arith.constant dense<0.000000e+00> : vector<2x512xf32>
    %467 = tpu.matmul %466, %259, %cst_125 {dimension_numbers = #tpu.dot_dimension_numbers<[1], [0], [0], [1], [0, 0, 1, 1], [], []>} : vector<2x128xbf16>, vector<128x512xbf16>, vector<2x512xf32> -> vector<2x512xf32>
    %468 = arith.addf %465, %467 : vector<2x512xf32>
    %469 = vector.extract_strided_slice %468 {offsets = [0, 0], sizes = [2, 128], strides = [1, 1]} : vector<2x512xf32> to vector<2x128xf32>
    %470 = arith.negf %469 : vector<2x128xf32>
    %471 = math.exp %470 : vector<2x128xf32>
    %cst_126 = arith.constant 1.000000e+00 : f32
    %472 = vector.broadcast %cst_126 : f32 to vector<2x128xf32>
    %473 = arith.addf %472, %471 : vector<2x128xf32>
    %474 = arith.divf %472, %473 : vector<2x128xf32>
    %475 = vector.extract_strided_slice %468 {offsets = [0, 128], sizes = [2, 128], strides = [1, 1]} : vector<2x512xf32> to vector<2x128xf32>
    %476 = arith.negf %475 : vector<2x128xf32>
    %477 = math.exp %476 : vector<2x128xf32>
    %cst_127 = arith.constant 1.000000e+00 : f32
    %478 = vector.broadcast %cst_127 : f32 to vector<2x128xf32>
    %479 = arith.addf %478, %477 : vector<2x128xf32>
    %480 = arith.divf %478, %479 : vector<2x128xf32>
    %481 = vector.extract_strided_slice %468 {offsets = [0, 256], sizes = [2, 128], strides = [1, 1]} : vector<2x512xf32> to vector<2x128xf32>
    %482 = math.tanh %481 : vector<2x128xf32>
    %483 = vector.extract_strided_slice %468 {offsets = [0, 384], sizes = [2, 128], strides = [1, 1]} : vector<2x512xf32> to vector<2x128xf32>
    %484 = arith.negf %483 : vector<2x128xf32>
    %485 = math.exp %484 : vector<2x128xf32>
    %cst_128 = arith.constant 1.000000e+00 : f32
    %486 = vector.broadcast %cst_128 : f32 to vector<2x128xf32>
    %487 = arith.addf %486, %485 : vector<2x128xf32>
    %488 = arith.divf %486, %487 : vector<2x128xf32>
    %489 = arith.mulf %480, %462 : vector<2x128xf32>
    %490 = arith.mulf %474, %482 : vector<2x128xf32>
    %491 = arith.addf %489, %490 : vector<2x128xf32>
    %492 = math.tanh %491 : vector<2x128xf32>
    %493 = arith.mulf %488, %492 : vector<2x128xf32>
    %494 = arith.truncf %493 : vector<2x128xf32> to vector<2x128xbf16>
    %c0_129 = arith.constant 0 : index
    %c0_130 = arith.constant 0 : index
    %495 = vector.load %arg7[%c0_129, %c0_130] : memref<128x256xbf16, #tpu.memory_space<vmem>>, vector<128x256xbf16>
    %cst_131 = arith.constant dense<0.000000e+00> : vector<2x256xf32>
    %496 = tpu.matmul %494, %495, %cst_131 {dimension_numbers = #tpu.dot_dimension_numbers<[1], [0], [0], [1], [0, 0, 1, 1], [], []>} : vector<2x128xbf16>, vector<128x256xbf16>, vector<2x256xf32> -> vector<2x256xf32>
    %c0_132 = arith.constant 0 : index
    %c0_133 = arith.constant 0 : index
    %497 = vector.load %arg8[%c0_132, %c0_133] : memref<1x256xf32, #tpu.memory_space<vmem>>, vector<1x256xf32>
    %498 = vector.broadcast %497 : vector<1x256xf32> to vector<2x256xf32>
    %499 = arith.addf %496, %498 : vector<2x256xf32>
    %500 = math.tanh %499 : vector<2x256xf32>
    %501 = arith.truncf %500 : vector<2x256xf32> to vector<2x256xbf16>
    %c0_134 = arith.constant 0 : index
    %c0_135 = arith.constant 0 : index
    %502 = vector.load %arg9[%c0_134, %c0_135] : memref<256x8xbf16, #tpu.memory_space<vmem>>, vector<256x8xbf16>
    %cst_136 = arith.constant dense<0.000000e+00> : vector<2x8xf32>
    %503 = tpu.matmul %501, %502, %cst_136 {dimension_numbers = #tpu.dot_dimension_numbers<[1], [0], [0], [1], [0, 0, 1, 1], [], []>} : vector<2x256xbf16>, vector<256x8xbf16>, vector<2x8xf32> -> vector<2x8xf32>
    %c0_137 = arith.constant 0 : index
    %c0_138 = arith.constant 0 : index
    %504 = vector.load %arg10[%c0_137, %c0_138] : memref<1x8xf32, #tpu.memory_space<vmem>>, vector<1x8xf32>
    %505 = vector.broadcast %504 : vector<1x8xf32> to vector<2x8xf32>
    %506 = arith.addf %503, %505 : vector<2x8xf32>
    %c0_139 = arith.constant 0 : index
    %c0_140 = arith.constant 0 : index
    %507 = vector.load %arg11[%c0_139, %c0_140] : memref<2x8xf32, #tpu.memory_space<vmem>>, vector<2x8xf32>
    tpu.vector_store %arg11[%c0_139, %c0_140], %506 {strides = array<i32>} : memref<2x8xf32, #tpu.memory_space<vmem>>, vector<2x8xf32>,
    %508 = tpu.iota {dimensions = array<i32: 1>} : vector<2x8xi32>
    %cst_141 = arith.constant dense<0xFF800000> : vector<2xf32>
    %509 = vector.multi_reduction <maximumf>, %506, %cst_141 [1] : vector<2x8xf32> to vector<2xf32>
    %510 = vector.shape_cast %509 : vector<2xf32> to vector<2x1xf32>
    %511 = vector.broadcast %510 : vector<2x1xf32> to vector<2x8xf32>
    %512 = arith.cmpf oeq, %506, %511 : vector<2x8xf32>
    %c2147483647_i32 = arith.constant 2147483647 : i32
    %513 = vector.broadcast %c2147483647_i32 : i32 to vector<2x8xi32>
    %514 = arith.select %512, %508, %513 : vector<2x8xi1>, vector<2x8xi32>
    %cst_142 = arith.constant dense<2147483647> : vector<2xi32>
    %515 = vector.multi_reduction <minsi>, %514, %cst_142 [1] : vector<2x8xi32> to vector<2xi32>
    %516 = vector.shape_cast %515 : vector<2xi32> to vector<2x1xi32>
    %c0_143 = arith.constant 0 : index
    %c0_144 = arith.constant 0 : index
    %517 = vector.load %arg12[%c0_143, %c0_144] : memref<2x1xi32, #tpu.memory_space<vmem>>, vector<2x1xi32>
    tpu.vector_store %arg12[%c0_143, %c0_144], %516 {strides = array<i32>} : memref<2x1xi32, #tpu.memory_space<vmem>>, vector<2x1xi32>,
    return
  }
}

</mosaic_0001>

<llo_original>
// kernel: lstm_model_forward.1
$region0: #{lstm_model_forward.1}
  #allocation0 [shape = 'u32[]', space=smem, size = 0x4, offset = 0x4, fixed_abs, tag = 'smem constant byte address 0x4 - core index']
  #allocation1 [shape = 'u32[144,128]{1,0:T(1,128)}', space=vmem, size = 0x12000, scoped, tag = 'internal scratch']
  #allocation2 [shape = 'f32[16,512]{1,0:T(8,128)}', space=vmem, size = 0x8000, scoped, tag = 'scratch operand']
  #allocation3 [shape = 'f32[16,128]{1,0:T(8,128)}', space=vmem, size = 0x2000, scoped, tag = 'scratch operand']
  %s0 = inlined_call_operand.vmem [shape: f32[16,128], index: 0, kind: input, shape index: {}]
  %s1 = inlined_call_operand.hbm [shape: bf16[128,512], index: 1, kind: input, shape index: {}]
  %s2 = inlined_call_operand.hbm [shape: bf16[128,512], index: 2, kind: input, shape index: {}]
  %s3 = inlined_call_operand.vmem [shape: f32[1,512], index: 3, kind: input, shape index: {}]
  %s4 = inlined_call_operand.hbm [shape: bf16[128,512], index: 4, kind: input, shape index: {}]
  %s5 = inlined_call_operand.hbm [shape: bf16[128,512], index: 5, kind: input, shape index: {}]
  %s6 = inlined_call_operand.vmem [shape: f32[1,512], index: 6, kind: input, shape index: {}]
  %s7 = inlined_call_operand.vmem [shape: bf16[128,256], index: 7, kind: input, shape index: {}]
  %s8 = inlined_call_operand.vmem [shape: f32[1,256], index: 8, kind: input, shape index: {}]
  %s9 = inlined_call_operand.vmem [shape: bf16[256,8], index: 9, kind: input, shape index: {}]
  %s10 = inlined_call_operand.vmem [shape: f32[1,8], index: 10, kind: input, shape index: {}]
  %s11 = inlined_call_operand.hbm [shape: f32[2,8], index: 11, kind: output, shape index: {0}]
  %s12 = inlined_call_operand.vmem [shape: s32[2,1], index: 12, kind: output, shape index: {1}]
  %13 = xla_tuple %s11, %s12
  %s14 = sld [smem:[#allocation0]]
  $region78: #{lstm_model_forward.1} parent=0
    _
  %s16 = ssub.s32 1, %s14
  %s17 = scalar_select 0, %s16, %s14
  $region1: #{lstm_model_forward.1} parent=0
    #allocation4 [shape = 'u8[131072]{0}', space=vmem, size = 0x20000, scoped, tag = 'input window, operand 1, single buffered']
    #allocation5 [shape = 's32[1]{0}', space=sflag, size = 0x4, scoped, tag = 'scoped memory for lstm_model_forward.1']
    #allocation6 [shape = 's32[1]{0}', space=sflag, size = 0x4, scoped, tag = 'scoped memory for lstm_model_forward.1']
    #allocation7 [shape = 'u8[131072]{0}', space=vmem, size = 0x20000, scoped, tag = 'input window, operand 2, single buffered']
    #allocation8 [shape = 's32[1]{0}', space=sflag, size = 0x4, scoped, tag = 'scoped memory for lstm_model_forward.1']
    #allocation9 [shape = 'u8[131072]{0}', space=vmem, size = 0x20000, scoped, tag = 'input window, operand 4, single buffered']
    #allocation10 [shape = 'u8[131072]{0}', space=vmem, size = 0x20000, scoped, tag = 'input window, operand 5, single buffered']
    #allocation11 [shape = 's32[1]{0}', space=sflag, size = 0x4, scoped, tag = 'scoped memory for lstm_model_forward.1']
    #allocation12 [shape = 'u8[1024]{0}', space=vmem, size = 0x400, scoped, tag = 'output window, operand 0, single buffered']
    %18 = vsyncpa [#allocation5], 0
    %19 = vsyncpa [#allocation8], 0
    %20 = vsyncpa [#allocation11], 0
    %21 = vsyncpa [#allocation6], 0
    // Predicated region
    $region2: #{lstm_model_forward.1} parent=1 // pred_check
      _
    $region3: #{lstm_model_forward.1} parent=1 // pred_check_branch
      %23 = sbr.rel (0) target = $region5
    $region4: #{lstm_model_forward.1} parent=1 // pred_region
      _
    $region5: #{lstm_model_forward.1} parent=1 // pred_fallthru
      _
    // Predicated region
    $region6: #{lstm_model_forward.1} parent=1 // pred_check
      _
    $region7: #{lstm_model_forward.1} parent=1 // pred_check_branch
      %25 = sbr.rel (0) target = $region9
    $region8: #{lstm_model_forward.1} parent=1 // pred_region
      %s27 = ssub.s32 4096, 4096
      %28 = vsyncadd [#allocation5], %s27
      %s29 = sshll.u32 [#allocation4], 4
      %s30 = int_to_ptr.vmem [resolvable:$true] %s29
      %35 = dma.hbm_to_vmem [thread:$0]  %s1, 4096, %s30, [#allocation5], 256, 256, 16
    $region9: #{lstm_model_forward.1} parent=1 // pred_fallthru
      _
    // Predicated region
    $region10: #{lstm_model_forward.1} parent=1 // pred_check
      _
    $region11: #{lstm_model_forward.1} parent=1 // pred_check_branch
      %37 = sbr.rel (0) target = $region13
    $region12: #{lstm_model_forward.1} parent=1 // pred_region
      %s39 = ssub.s32 4096, 4096
      %40 = vsyncadd [#allocation8], %s39
      %s41 = sshll.u32 [#allocation7], 4
      %s42 = int_to_ptr.vmem [resolvable:$true] %s41
      %47 = dma.hbm_to_vmem [thread:$0]  %s2, 4096, %s42, [#allocation8], 256, 256, 16
    $region13: #{lstm_model_forward.1} parent=1 // pred_fallthru
      _
    // Predicated region
    $region14: #{lstm_model_forward.1} parent=1 // pred_check
      _
    $region15: #{lstm_model_forward.1} parent=1 // pred_check_branch
      %49 = sbr.rel (0) target = $region17
    $region16: #{lstm_model_forward.1} parent=1 // pred_region
      _
    $region17: #{lstm_model_forward.1} parent=1 // pred_fallthru
      _
    // Predicated region
    $region18: #{lstm_model_forward.1} parent=1 // pred_check
      _
    $region19: #{lstm_model_forward.1} parent=1 // pred_check_branch
      %51 = sbr.rel (0) target = $region21
    $region20: #{lstm_model_forward.1} parent=1 // pred_region
      %s53 = ssub.s32 4096, 4096
      %54 = vsyncadd [#allocation8], %s53
      %s55 = sshll.u32 [#allocation9], 4
      %s56 = int_to_ptr.vmem [resolvable:$true] %s55
      %61 = dma.hbm_to_vmem [thread:$0]  %s4, 4096, %s56, [#allocation8], 256, 256, 16
    $region21: #{lstm_model_forward.1} parent=1 // pred_fallthru
      _
    // Predicated region
    $region22: #{lstm_model_forward.1} parent=1 // pred_check
      _
    $region23: #{lstm_model_forward.1} parent=1 // pred_check_branch
      %63 = sbr.rel (0) target = $region25
    $region24: #{lstm_model_forward.1} parent=1 // pred_region
      %s65 = ssub.s32 4096, 4096
      %66 = vsyncadd [#allocation11], %s65
      %s67 = sshll.u32 [#allocation10], 4
      %s68 = int_to_ptr.vmem [resolvable:$true] %s67
      %73 = dma.hbm_to_vmem [thread:$0]  %s5, 4096, %s68, [#allocation11], 256, 256, 16
    $region25: #{lstm_model_forward.1} parent=1 // pred_fallthru
      _
    // Predicated region
    $region26: #{lstm_model_forward.1} parent=1 // pred_check
      _
    $region27: #{lstm_model_forward.1} parent=1 // pred_check_branch
      %75 = sbr.rel (0) target = $region29
    $region28: #{lstm_model_forward.1} parent=1 // pred_region
      _
    $region29: #{lstm_model_forward.1} parent=1 // pred_fallthru
      _
    // Predicated region
    $region30: #{lstm_model_forward.1} parent=1 // pred_check
      _
    $region31: #{lstm_model_forward.1} parent=1 // pred_check_branch
      %77 = sbr.rel (0) target = $region33
    $region32: #{lstm_model_forward.1} parent=1 // pred_region
      _
    $region33: #{lstm_model_forward.1} parent=1 // pred_fallthru
      _
    // Predicated region
    $region34: #{lstm_model_forward.1} parent=1 // pred_check
      _
    $region35: #{lstm_model_forward.1} parent=1 // pred_check_branch
      %79 = sbr.rel (0) target = $region37
    $region36: #{lstm_model_forward.1} parent=1 // pred_region
      _
    $region37: #{lstm_model_forward.1} parent=1 // pred_fallthru
      _
    // Predicated region
    $region38: #{lstm_model_forward.1} parent=1 // pred_check
      _
    $region39: #{lstm_model_forward.1} parent=1 // pred_check_branch
      %81 = sbr.rel (0) target = $region41
    $region40: #{lstm_model_forward.1} parent=1 // pred_region
      _
    $region41: #{lstm_model_forward.1} parent=1 // pred_fallthru
      _
    // Predicated region
    $region42: #{lstm_model_forward.1} parent=1 // pred_check
      _
    $region43: #{lstm_model_forward.1} parent=1 // pred_check_branch
      %83 = sbr.rel (0) target = $region45
    $region44: #{lstm_model_forward.1} parent=1 // pred_region
      _
    $region45: #{lstm_model_forward.1} parent=1 // pred_fallthru
      _
    // Predicated region
    $region46: #{lstm_model_forward.1} parent=1 // pred_check
      _
    $region47: #{lstm_model_forward.1} parent=1 // pred_check_branch
      %85 = sbr.rel (0) target = $region49
    $region48: #{lstm_model_forward.1} parent=1 // pred_region
      %86 = dma.done [#allocation5], 4096
    $region49: #{lstm_model_forward.1} parent=1 // pred_fallthru
      _
    // Predicated region
    $region50: #{lstm_model_forward.1} parent=1 // pred_check
      _
    $region51: #{lstm_model_forward.1} parent=1 // pred_check_branch
      %88 = sbr.rel (0) target = $region53
    $region52: #{lstm_model_forward.1} parent=1 // pred_region
      %89 = dma.done [#allocation8], 4096
    $region53: #{lstm_model_forward.1} parent=1 // pred_fallthru
      _
    // Predicated region
    $region54: #{lstm_model_forward.1} parent=1 // pred_check
      _
    $region55: #{lstm_model_forward.1} parent=1 // pred_check_branch
      %91 = sbr.rel (0) target = $region57
    $region56: #{lstm_model_forward.1} parent=1 // pred_region
      %92 = dma.done [#allocation8], 4096
    $region57: #{lstm_model_forward.1} parent=1 // pred_fallthru
      _
    // Predicated region
    $region58: #{lstm_model_forward.1} parent=1 // pred_check
      _
    $region59: #{lstm_model_forward.1} parent=1 // pred_check_branch
      %94 = sbr.rel (0) target = $region61
    $region60: #{lstm_model_forward.1} parent=1 // pred_region
      %95 = dma.done [#allocation11], 4096
    $region61: #{lstm_model_forward.1} parent=1 // pred_fallthru
      _
    %v97 = vld [vmem:[%s0] sm:$0xff]
    %v98 = vld [vmem:[%s0 + $0x8] sm:$0xff]
    %v99 = vpack.c.bf16 %v98, %v97
    %v100 = vld [vmem:[#allocation4] sm:$0xff]
    %v101 = vld [vmem:[#allocation4 + $0x8] sm:$0xff]
    %v102 = vld [vmem:[#allocation4 + $0x10] sm:$0xff]
    %v103 = vld [vmem:[#allocation4 + $0x18] sm:$0xff]
    %v104 = vld [vmem:[#allocation4 + $0x20] sm:$0xff]
    %v105 = vld [vmem:[#allocation4 + $0x28] sm:$0xff]
    %v106 = vld [vmem:[#allocation4 + $0x30] sm:$0xff]
    %v107 = vld [vmem:[#allocation4 + $0x38] sm:$0xff]
    %v108 = vld [vmem:[#allocation4 + $0x40] sm:$0xff]
    %v109 = vld [vmem:[#allocation4 + $0x48] sm:$0xff]
    %v110 = vld [vmem:[#allocation4 + $0x50] sm:$0xff]
    %v111 = vld [vmem:[#allocation4 + $0x58] sm:$0xff]
    %v112 = vld [vmem:[#allocation4 + $0x60] sm:$0xff]
    %v113 = vld [vmem:[#allocation4 + $0x68] sm:$0xff]
    %v114 = vld [vmem:[#allocation4 + $0x70] sm:$0xff]
    %v115 = vld [vmem:[#allocation4 + $0x78] sm:$0xff]
    %v116 = vld [vmem:[#allocation4 + $0x80] sm:$0xff]
    %v117 = vld [vmem:[#allocation4 + $0x88] sm:$0xff]
    %v118 = vld [vmem:[#allocation4 + $0x90] sm:$0xff]
    %v119 = vld [vmem:[#allocation4 + $0x98] sm:$0xff]
    %v120 = vld [vmem:[#allocation4 + $0xa0] sm:$0xff]
    %v121 = vld [vmem:[#allocation4 + $0xa8] sm:$0xff]
    %v122 = vld [vmem:[#allocation4 + $0xb0] sm:$0xff]
    %v123 = vld [vmem:[#allocation4 + $0xb8] sm:$0xff]
    %v124 = vld [vmem:[#allocation4 + $0xc0] sm:$0xff]
    %v125 = vld [vmem:[#allocation4 + $0xc8] sm:$0xff]
    %v126 = vld [vmem:[#allocation4 + $0xd0] sm:$0xff]
    %v127 = vld [vmem:[#allocation4 + $0xd8] sm:$0xff]
    %v128 = vld [vmem:[#allocation4 + $0xe0] sm:$0xff]
    %v129 = vld [vmem:[#allocation4 + $0xe8] sm:$0xff]
    %v130 = vld [vmem:[#allocation4 + $0xf0] sm:$0xff]
    %v131 = vld [vmem:[#allocation4 + $0xf8] sm:$0xff]
    %v132 = vld [vmem:[%s3] sm:$0xf]
    %v134 = vlaneseq
    %v135 = vshrl.u32 %v134, 7
    %v136 = vsub.s32 0, %v135
    %v137 = vrot.slane %v132, %v136
    %v138 = vlaneseq
    %v139 = vshrl.u32 %v138, 7
    %v140 = vsub.s32 1, %v139
    %v141 = vrot.slane %v132, %v140
    %v142 = vlaneseq
    %v143 = vshrl.u32 %v142, 7
    %v144 = vsub.s32 2, %v143
    %v145 = vrot.slane %v132, %v144
    %v146 = vlaneseq
    %v147 = vshrl.u32 %v146, 7
    %v148 = vsub.s32 3, %v147
    %v149 = vrot.slane %v132, %v148
    %v186 = vunpack.c.l.b16 %v100
    %v187 = vunpack.c.h.b16 %v100
    %v188 = vunpack.c.l.b16 %v101
    %v189 = vunpack.c.h.b16 %v101
    %v190 = vunpack.c.l.b16 %v102
    %v191 = vunpack.c.h.b16 %v102
    %v192 = vunpack.c.l.b16 %v103
    %v193 = vunpack.c.h.b16 %v103
    %v194 = vunpack.c.l.b16 %v104
    %v195 = vunpack.c.h.b16 %v104
    %v196 = vunpack.c.l.b16 %v105
    %v197 = vunpack.c.h.b16 %v105
    %v198 = vunpack.c.l.b16 %v106
    %v199 = vunpack.c.h.b16 %v106
    %v200 = vunpack.c.l.b16 %v107
    %v201 = vunpack.c.h.b16 %v107
    %v202 = vunpack.c.l.b16 %v108
    %v203 = vunpack.c.h.b16 %v108
    %v204 = vunpack.c.l.b16 %v109
    %v205 = vunpack.c.h.b16 %v109
    %v206 = vunpack.c.l.b16 %v110
    %v207 = vunpack.c.h.b16 %v110
    %v208 = vunpack.c.l.b16 %v111
    %v209 = vunpack.c.h.b16 %v111
    %v210 = vunpack.c.l.b16 %v112
    %v211 = vunpack.c.h.b16 %v112
    %v212 = vunpack.c.l.b16 %v113
    %v213 = vunpack.c.h.b16 %v113
    %v214 = vunpack.c.l.b16 %v114
    %v215 = vunpack.c.h.b16 %v114
    %v216 = vunpack.c.l.b16 %v115
    %v217 = vunpack.c.h.b16 %v115
    %v218 = vunpack.c.l.b16 %v116
    %v219 = vunpack.c.h.b16 %v116
    %v220 = vunpack.c.l.b16 %v117
    %v221 = vunpack.c.h.b16 %v117
    %v222 = vunpack.c.l.b16 %v118
    %v223 = vunpack.c.h.b16 %v118
    %v224 = vunpack.c.l.b16 %v119
    %v225 = vunpack.c.h.b16 %v119
    %v226 = vunpack.c.l.b16 %v120
    %v227 = vunpack.c.h.b16 %v120
    %v228 = vunpack.c.l.b16 %v121
    %v229 = vunpack.c.h.b16 %v121
    %v230 = vunpack.c.l.b16 %v122
    %v231 = vunpack.c.h.b16 %v122
    %v232 = vunpack.c.l.b16 %v123
    %v233 = vunpack.c.h.b16 %v123
    %v234 = vunpack.c.l.b16 %v124
    %v235 = vunpack.c.h.b16 %v124
    %v236 = vunpack.c.l.b16 %v125
    %v237 = vunpack.c.h.b16 %v125
    %v238 = vunpack.c.l.b16 %v126
    %v239 = vunpack.c.h.b16 %v126
    %v240 = vunpack.c.l.b16 %v127
    %v241 = vunpack.c.h.b16 %v127
    %v242 = vunpack.c.l.b16 %v128
    %v243 = vunpack.c.h.b16 %v128
    %v244 = vunpack.c.l.b16 %v129
    %v245 = vunpack.c.h.b16 %v129
    %v246 = vunpack.c.l.b16 %v130
    %v247 = vunpack.c.h.b16 %v130
    %v248 = vunpack.c.l.b16 %v131
    %v249 = vunpack.c.h.b16 %v131
    %v250 = vpack.c.b16 %v190, %v186
    %v251 = vpack.c.b16 %v191, %v187
    %v252 = vpack.c.b16 %v192, %v188
    %v253 = vpack.c.b16 %v193, %v189
    %v254 = vpack.c.b16 %v198, %v194
    %v255 = vpack.c.b16 %v199, %v195
    %v256 = vpack.c.b16 %v200, %v196
    %v257 = vpack.c.b16 %v201, %v197
    %v258 = vpack.c.b16 %v206, %v202
    %v259 = vpack.c.b16 %v207, %v203
    %v260 = vpack.c.b16 %v208, %v204
    %v261 = vpack.c.b16 %v209, %v205
    %v262 = vpack.c.b16 %v214, %v210
    %v263 = vpack.c.b16 %v215, %v211
    %v264 = vpack.c.b16 %v216, %v212
    %v265 = vpack.c.b16 %v217, %v213
    %v266 = vpack.c.b16 %v222, %v218
    %v267 = vpack.c.b16 %v223, %v219
    %v268 = vpack.c.b16 %v224, %v220
    %v269 = vpack.c.b16 %v225, %v221
    %v270 = vpack.c.b16 %v230, %v226
    %v271 = vpack.c.b16 %v231, %v227
    %v272 = vpack.c.b16 %v232, %v228
    %v273 = vpack.c.b16 %v233, %v229
    %v274 = vpack.c.b16 %v238, %v234
    %v275 = vpack.c.b16 %v239, %v235
    %v276 = vpack.c.b16 %v240, %v236
    %v277 = vpack.c.b16 %v241, %v237
    %v278 = vpack.c.b16 %v246, %v242
    %v279 = vpack.c.b16 %v247, %v243
    %v280 = vpack.c.b16 %v248, %v244
    %v281 = vpack.c.b16 %v249, %v245
    %314 = vmatprep.subr.bf16.mxu0 %v251
    %315 = vmatpush1.bf16.msra.mxu0 %v250
    %316 = vmatprep.subr.bf16.mxu0 %v255
    %317 = vmatpush1.bf16.msra.mxu0 %v254
    %318 = vmatprep.subr.bf16.mxu0 %v259
    %319 = vmatpush1.bf16.msra.mxu0 %v258
    %320 = vmatprep.subr.bf16.mxu0 %v263
    %321 = vmatpush1.bf16.msra.mxu0 %v262
    %322 = vmatprep.subr.bf16.mxu0 %v267
    %323 = vmatpush1.bf16.msra.mxu0 %v266
    %324 = vmatprep.subr.bf16.mxu0 %v271
    %325 = vmatpush1.bf16.msra.mxu0 %v270
    %326 = vmatprep.subr.bf16.mxu0 %v275
    %327 = vmatpush1.bf16.msra.mxu0 %v274
    %328 = vmatprep.subr.bf16.mxu0 %v279
    %329 = vmatpush1.bf16.msra.mxu0 %v278
    %330 = vmatprep.subr.bf16.mxu0 0
    %331 = vmatpush1.bf16.msra.mxu0 0
    %332 = vmatprep.subr.bf16.mxu0 0
    %333 = vmatpush1.bf16.msra.mxu0 0
    %334 = vmatprep.subr.bf16.mxu0 0
    %335 = vmatpush1.bf16.msra.mxu0 0
    %336 = vmatprep.subr.bf16.mxu0 0
    %337 = vmatpush1.bf16.msra.mxu0 0
    %338 = vmatprep.subr.bf16.mxu0 0
    %339 = vmatpush1.bf16.msra.mxu0 0
    %340 = vmatprep.subr.bf16.mxu0 0
    %341 = vmatpush1.bf16.msra.mxu0 0
    %342 = vmatprep.subr.bf16.mxu0 0
    %343 = vmatpush1.bf16.msra.mxu0 0
    %344 = vmatprep.subr.bf16.mxu0 0
    %345 = vmatpush1.bf16.msra.mxu0 0
    %346 = vmatprep.mubr.bf16.mxu0 0
    %347 = vmatmul.mubr.bf16.gmra.mrb[0].mxu0 %v99
    %v348 = vpop.f32.mrb[0].mxu0
    %v349 = vadd.f32 %v137, %v348
    %v350 = vpop.f32.mrb[0].mxu0
    %v351 = vadd.f32 %v141, %v350
    %v352 = vpop.f32.mrb[0].mxu0
    %v353 = vadd.f32 %v137, %v352
    %v354 = vpop.f32.mrb[0].mxu0
    %v355 = vadd.f32 %v141, %v354
    %356 = vdwg.mxu0
    %357 = vmatprep.subr.bf16.mxu0 %v253
    %358 = vmatpush1.bf16.msra.mxu0 %v252
    %359 = vmatprep.subr.bf16.mxu0 %v257
    %360 = vmatpush1.bf16.msra.mxu0 %v256
    %361 = vmatprep.subr.bf16.mxu0 %v261
    %362 = vmatpush1.bf16.msra.mxu0 %v260
    %363 = vmatprep.subr.bf16.mxu0 %v265
    %364 = vmatpush1.bf16.msra.mxu0 %v264
    %365 = vmatprep.subr.bf16.mxu0 %v269
    %366 = vmatpush1.bf16.msra.mxu0 %v268
    %367 = vmatprep.subr.bf16.mxu0 %v273
    %368 = vmatpush1.bf16.msra.mxu0 %v272
    %369 = vmatprep.subr.bf16.mxu0 %v277
    %370 = vmatpush1.bf16.msra.mxu0 %v276
    %371 = vmatprep.subr.bf16.mxu0 %v281
    %372 = vmatpush1.bf16.msra.mxu0 %v280
    %373 = vmatprep.subr.bf16.mxu0 0
    %374 = vmatpush1.bf16.msra.mxu0 0
    %375 = vmatprep.subr.bf16.mxu0 0
    %376 = vmatpush1.bf16.msra.mxu0 0
    %377 = vmatprep.subr.bf16.mxu0 0
    %378 = vmatpush1.bf16.msra.mxu0 0
    %379 = vmatprep.subr.bf16.mxu0 0
    %380 = vmatpush1.bf16.msra.mxu0 0
    %381 = vmatprep.subr.bf16.mxu0 0
    %382 = vmatpush1.bf16.msra.mxu0 0
    %383 = vmatprep.subr.bf16.mxu0 0
    %384 = vmatpush1.bf16.msra.mxu0 0
    %385 = vmatprep.subr.bf16.mxu0 0
    %386 = vmatpush1.bf16.msra.mxu0 0
    %387 = vmatprep.subr.bf16.mxu0 0
    %388 = vmatpush1.bf16.msra.mxu0 0
    %389 = vmatprep.mubr.bf16.mxu0 0
    %390 = vmatmul.mubr.bf16.gmra.mrb[0].mxu0 %v99
    %v391 = vpop.f32.mrb[0].mxu0
    %v392 = vadd.f32 %v145, %v391
    %v393 = vpop.f32.mrb[0].mxu0
    %v394 = vadd.f32 %v149, %v393
    %v395 = vpop.f32.mrb[0].mxu0
    %v396 = vadd.f32 %v145, %v395
    %v397 = vpop.f32.mrb[0].mxu0
    %v398 = vadd.f32 %v149, %v397
    %399 = vdwg.mxu0
    %400 = vst [vmem:[#allocation2] sm:$0xff] %v349
    %401 = vst [vmem:[#allocation2 + $0x8] sm:$0xff] %v351
    %402 = vst [vmem:[#allocation2 + $0x10] sm:$0xff] %v392
    %403 = vst [vmem:[#allocation2 + $0x18] sm:$0xff] %v394
    %404 = vst [vmem:[#allocation2 + $0x20] sm:$0xff] %v353
    %405 = vst [vmem:[#allocation2 + $0x28] sm:$0xff] %v355
    %406 = vst [vmem:[#allocation2 + $0x30] sm:$0xff] %v396
    %407 = vst [vmem:[#allocation2 + $0x38] sm:$0xff] %v398
    %v408 = vld [vmem:[#allocation7] sm:$0xff]
    %v409 = vld [vmem:[#allocation7 + $0x8] sm:$0xff]
    %v410 = vld [vmem:[#allocation7 + $0x10] sm:$0xff]
    %v411 = vld [vmem:[#allocation7 + $0x18] sm:$0xff]
    %v412 = vld [vmem:[#allocation7 + $0x20] sm:$0xff]
    %v413 = vld [vmem:[#allocation7 + $0x28] sm:$0xff]
    %v414 = vld [vmem:[#allocation7 + $0x30] sm:$0xff]
    %v415 = vld [vmem:[#allocation7 + $0x38] sm:$0xff]
    %v416 = vld [vmem:[#allocation7 + $0x40] sm:$0xff]
    %v417 = vld [vmem:[#allocation7 + $0x48] sm:$0xff]
    %v418 = vld [vmem:[#allocation7 + $0x50] sm:$0xff]
    %v419 = vld [vmem:[#allocation7 + $0x58] sm:$0xff]
    %v420 = vld [vmem:[#allocation7 + $0x60] sm:$0xff]
    %v421 = vld [vmem:[#allocation7 + $0x68] sm:$0xff]
    %v422 = vld [vmem:[#allocation7 + $0x70] sm:$0xff]
    %v423 = vld [vmem:[#allocation7 + $0x78] sm:$0xff]
    %v424 = vld [vmem:[#allocation7 + $0x80] sm:$0xff]
    %v425 = vld [vmem:[#allocation7 + $0x88] sm:$0xff]
    %v426 = vld [vmem:[#allocation7 + $0x90] sm:$0xff]
    %v427 = vld [vmem:[#allocation7 + $0x98] sm:$0xff]
    %v428 = vld [vmem:[#allocation7 + $0xa0] sm:$0xff]
    %v429 = vld [vmem:[#allocation7 + $0xa8] sm:$0xff]
    %v430 = vld [vmem:[#allocation7 + $0xb0] sm:$0xff]
    %v431 = vld [vmem:[#allocation7 + $0xb8] sm:$0xff]
    %v432 = vld [vmem:[#allocation7 + $0xc0] sm:$0xff]
    %v433 = vld [vmem:[#allocation7 + $0xc8] sm:$0xff]
    %v434 = vld [vmem:[#allocation7 + $0xd0] sm:$0xff]
    %v435 = vld [vmem:[#allocation7 + $0xd8] sm:$0xff]
    %v436 = vld [vmem:[#allocation7 + $0xe0] sm:$0xff]
    %v437 = vld [vmem:[#allocation7 + $0xe8] sm:$0xff]
    %v438 = vld [vmem:[#allocation7 + $0xf0] sm:$0xff]
    %v439 = vld [vmem:[#allocation7 + $0xf8] sm:$0xff]
    %v440 = vld [vmem:[#allocation2] sm:$0x3]
    %v441 = vld [vmem:[#allocation2 + $0x8] sm:$0x3]
    %v442 = vld [vmem:[#allocation2 + $0x10] sm:$0x3]
    %v443 = vld [vmem:[#allocation2 + $0x18] sm:$0x3]
    %v476 = vunpack.c.l.b16 %v408
    %v477 = vunpack.c.h.b16 %v408
    %v478 = vunpack.c.l.b16 %v409
    %v479 = vunpack.c.h.b16 %v409
    %v480 = vunpack.c.l.b16 %v410
    %v481 = vunpack.c.h.b16 %v410
    %v482 = vunpack.c.l.b16 %v411
    %v483 = vunpack.c.h.b16 %v411
    %v484 = vunpack.c.l.b16 %v412
    %v485 = vunpack.c.h.b16 %v412
    %v486 = vunpack.c.l.b16 %v413
    %v487 = vunpack.c.h.b16 %v413
    %v488 = vunpack.c.l.b16 %v414
    %v489 = vunpack.c.h.b16 %v414
    %v490 = vunpack.c.l.b16 %v415
    %v491 = vunpack.c.h.b16 %v415
    %v492 = vunpack.c.l.b16 %v416
    %v493 = vunpack.c.h.b16 %v416
    %v494 = vunpack.c.l.b16 %v417
    %v495 = vunpack.c.h.b16 %v417
    %v496 = vunpack.c.l.b16 %v418
    %v497 = vunpack.c.h.b16 %v418
    %v498 = vunpack.c.l.b16 %v419
    %v499 = vunpack.c.h.b16 %v419
    %v500 = vunpack.c.l.b16 %v420
    %v501 = vunpack.c.h.b16 %v420
    %v502 = vunpack.c.l.b16 %v421
    %v503 = vunpack.c.h.b16 %v421
    %v504 = vunpack.c.l.b16 %v422
    %v505 = vunpack.c.h.b16 %v422
    %v506 = vunpack.c.l.b16 %v423
    %v507 = vunpack.c.h.b16 %v423
    %v508 = vunpack.c.l.b16 %v424
    %v509 = vunpack.c.h.b16 %v424
    %v510 = vunpack.c.l.b16 %v425
    %v511 = vunpack.c.h.b16 %v425
    %v512 = vunpack.c.l.b16 %v426
    %v513 = vunpack.c.h.b16 %v426
    %v514 = vunpack.c.l.b16 %v427
    %v515 = vunpack.c.h.b16 %v427
    %v516 = vunpack.c.l.b16 %v428
    %v517 = vunpack.c.h.b16 %v428
    %v518 = vunpack.c.l.b16 %v429
    %v519 = vunpack.c.h.b16 %v429
    %v520 = vunpack.c.l.b16 %v430
    %v521 = vunpack.c.h.b16 %v430
    %v522 = vunpack.c.l.b16 %v431
    %v523 = vunpack.c.h.b16 %v431
    %v524 = vunpack.c.l.b16 %v432
    %v525 = vunpack.c.h.b16 %v432
    %v526 = vunpack.c.l.b16 %v433
    %v527 = vunpack.c.h.b16 %v433
    %v528 = vunpack.c.l.b16 %v434
    %v529 = vunpack.c.h.b16 %v434
    %v530 = vunpack.c.l.b16 %v435
    %v531 = vunpack.c.h.b16 %v435
    %v532 = vunpack.c.l.b16 %v436
    %v533 = vunpack.c.h.b16 %v436
    %v534 = vunpack.c.l.b16 %v437
    %v535 = vunpack.c.h.b16 %v437
    %v536 = vunpack.c.l.b16 %v438
    %v537 = vunpack.c.h.b16 %v438
    %v538 = vunpack.c.l.b16 %v439
    %v539 = vunpack.c.h.b16 %v439
    %v540 = vpack.c.b16 %v480, %v476
    %v541 = vpack.c.b16 %v481, %v477
    %v542 = vpack.c.b16 %v482, %v478
    %v543 = vpack.c.b16 %v483, %v479
    %v544 = vpack.c.b16 %v488, %v484
    %v545 = vpack.c.b16 %v489, %v485
    %v546 = vpack.c.b16 %v490, %v486
    %v547 = vpack.c.b16 %v491, %v487
    %v548 = vpack.c.b16 %v496, %v492
    %v549 = vpack.c.b16 %v497, %v493
    %v550 = vpack.c.b16 %v498, %v494
    %v551 = vpack.c.b16 %v499, %v495
    %v552 = vpack.c.b16 %v504, %v500
    %v553 = vpack.c.b16 %v505, %v501
    %v554 = vpack.c.b16 %v506, %v502
    %v555 = vpack.c.b16 %v507, %v503
    %v556 = vpack.c.b16 %v512, %v508
    %v557 = vpack.c.b16 %v513, %v509
    %v558 = vpack.c.b16 %v514, %v510
    %v559 = vpack.c.b16 %v515, %v511
    %v560 = vpack.c.b16 %v520, %v516
    %v561 = vpack.c.b16 %v521, %v517
    %v562 = vpack.c.b16 %v522, %v518
    %v563 = vpack.c.b16 %v523, %v519
    %v564 = vpack.c.b16 %v528, %v524
    %v565 = vpack.c.b16 %v529, %v525
    %v566 = vpack.c.b16 %v530, %v526
    %v567 = vpack.c.b16 %v531, %v527
    %v568 = vpack.c.b16 %v536, %v532
    %v569 = vpack.c.b16 %v537, %v533
    %v570 = vpack.c.b16 %v538, %v534
    %v571 = vpack.c.b16 %v539, %v535
    %604 = vmatprep.subr.bf16.mxu0 %v541
    %605 = vmatpush1.bf16.msra.mxu0 %v540
    %606 = vmatprep.subr.bf16.mxu0 %v545
    %607 = vmatpush1.bf16.msra.mxu0 %v544
    %608 = vmatprep.subr.bf16.mxu0 %v549
    %609 = vmatpush1.bf16.msra.mxu0 %v548
    %610 = vmatprep.subr.bf16.mxu0 %v553
    %611 = vmatpush1.bf16.msra.mxu0 %v552
    %612 = vmatprep.subr.bf16.mxu0 %v557
    %613 = vmatpush1.bf16.msra.mxu0 %v556
    %614 = vmatprep.subr.bf16.mxu0 %v561
    %615 = vmatpush1.bf16.msra.mxu0 %v560
    %616 = vmatprep.subr.bf16.mxu0 %v565
    %617 = vmatpush1.bf16.msra.mxu0 %v564
    %618 = vmatprep.subr.bf16.mxu0 %v569
    %619 = vmatpush1.bf16.msra.mxu0 %v568
    %620 = vmatprep.subr.bf16.mxu0 0
    %621 = vmatpush1.bf16.msra.mxu0 0
    %622 = vmatprep.subr.bf16.mxu0 0
    %623 = vmatpush1.bf16.msra.mxu0 0
    %624 = vmatprep.subr.bf16.mxu0 0
    %625 = vmatpush1.bf16.msra.mxu0 0
    %626 = vmatprep.subr.bf16.mxu0 0
    %627 = vmatpush1.bf16.msra.mxu0 0
    %628 = vmatprep.subr.bf16.mxu0 0
    %629 = vmatpush1.bf16.msra.mxu0 0
    %630 = vmatprep.subr.bf16.mxu0 0
    %631 = vmatpush1.bf16.msra.mxu0 0
    %632 = vmatprep.subr.bf16.mxu0 0
    %633 = vmatpush1.bf16.msra.mxu0 0
    %634 = vmatprep.subr.bf16.mxu0 0
    %635 = vmatpush1.bf16.msra.mxu0 0
    %636 = vmatprep.mubr.bf16.mxu0 0
    %637 = vmatmul.mubr.bf16.gmra.mrb[0].mxu0 0
    %v638 = vpop.f32.mrb[0].mxu0
    %v639 = vadd.f32 0.0, %v638
    %v640 = vpop.f32.mrb[0].mxu0
    %v641 = vadd.f32 0.0, %v640
    %v642 = vpop.f32.mrb[0].mxu0
    %v643 = vpop.f32.mrb[0].mxu0
    %644 = vdwg.mxu0
    %645 = vmatprep.subr.bf16.mxu0 %v543
    %646 = vmatpush1.bf16.msra.mxu0 %v542
    %647 = vmatprep.subr.bf16.mxu0 %v547
    %648 = vmatpush1.bf16.msra.mxu0 %v546
    %649 = vmatprep.subr.bf16.mxu0 %v551
    %650 = vmatpush1.bf16.msra.mxu0 %v550
    %651 = vmatprep.subr.bf16.mxu0 %v555
    %652 = vmatpush1.bf16.msra.mxu0 %v554
    %653 = vmatprep.subr.bf16.mxu0 %v559
    %654 = vmatpush1.bf16.msra.mxu0 %v558
    %655 = vmatprep.subr.bf16.mxu0 %v563
    %656 = vmatpush1.bf16.msra.mxu0 %v562
    %657 = vmatprep.subr.bf16.mxu0 %v567
    %658 = vmatpush1.bf16.msra.mxu0 %v566
    %659 = vmatprep.subr.bf16.mxu0 %v571
    %660 = vmatpush1.bf16.msra.mxu0 %v570
    %661 = vmatprep.subr.bf16.mxu0 0
    %662 = vmatpush1.bf16.msra.mxu0 0
    %663 = vmatprep.subr.bf16.mxu0 0
    %664 = vmatpush1.bf16.msra.mxu0 0
    %665 = vmatprep.subr.bf16.mxu0 0
    %666 = vmatpush1.bf16.msra.mxu0 0
    %667 = vmatprep.subr.bf16.mxu0 0
    %668 = vmatpush1.bf16.msra.mxu0 0
    %669 = vmatprep.subr.bf16.mxu0 0
    %670 = vmatpush1.bf16.msra.mxu0 0
    %671 = vmatprep.subr.bf16.mxu0 0
    %672 = vmatpush1.bf16.msra.mxu0 0
    %673 = vmatprep.subr.bf16.mxu0 0
    %674 = vmatpush1.bf16.msra.mxu0 0
    %675 = vmatprep.subr.bf16.mxu0 0
    %676 = vmatpush1.bf16.msra.mxu0 0
    %677 = vmatprep.mubr.bf16.mxu0 0
    %678 = vmatmul.mubr.bf16.gmra.mrb[0].mxu0 0
    %v679 = vpop.f32.mrb[0].mxu0
    %v680 = vadd.f32 0.0, %v679
    %v681 = vpop.f32.mrb[0].mxu0
    %v682 = vadd.f32 0.0, %v681
    %v683 = vpop.f32.mrb[0].mxu0
    %v684 = vpop.f32.mrb[0].mxu0
    %685 = vdwg.mxu0
    %v686 = vadd.f32 %v440, %v639
    %v687 = vadd.f32 %v441, %v641
    %v688 = vadd.f32 %v442, %v680
    %v689 = vadd.f32 %v443, %v682
    %v690 = vxor.u32 %v686, 2147483648
    %v691 = vmul.f32 %v690, 1.442695
    %v692 = vpow.pop %v691
    %v693 = vadd.f32 %v692, 1.0
    %v694 = vrcp.pop %v693
    %v695 = vmul.f32 1.0, %v694
    %v696 = vxor.u32 %v687, 2147483648
    %v697 = vmul.f32 %v696, 1.442695
    %v698 = vpow.pop %v697
    %v699 = vadd.f32 %v698, 1.0
    %v700 = vrcp.pop %v699
    %v701 = vmul.f32 1.0, %v700
    %v702 = vtanh.pop %v688
    %v703 = vxor.u32 %v689, 2147483648
    %v704 = vmul.f32 %v703, 1.442695
    %v705 = vpow.pop %v704
    %v706 = vadd.f32 %v705, 1.0
    %v707 = vrcp.pop %v706
    %v708 = vmul.f32 1.0, %v707
    %v709 = vmul.f32 %v701, 0.0
    %v710 = vmul.f32 %v695, %v702
    %v711 = vadd.f32 %v709, %v710
    %v712 = vtanh.pop %v711
    %v713 = vmul.f32 %v708, %v712
    %714 = vst [vmem:[#allocation3] sm:$0x3] %v713
    %v715 = vld [vmem:[#allocation2] sm:$0xc]
    %v716 = vld [vmem:[#allocation2 + $0x8] sm:$0xc]
    %v717 = vld [vmem:[#allocation2 + $0x10] sm:$0xc]
    %v718 = vld [vmem:[#allocation2 + $0x18] sm:$0xc]
    %v719 = vpack.c.bf16 %v713, %v713
    %720 = vmatprep.subr.bf16.mxu0 %v541
    %721 = vmatpush1.bf16.msra.mxu0 %v540
    %722 = vmatprep.subr.bf16.mxu0 %v545
    %723 = vmatpush1.bf16.msra.mxu0 %v544
    %724 = vmatprep.subr.bf16.mxu0 %v549
    %725 = vmatpush1.bf16.msra.mxu0 %v548
    %726 = vmatprep.subr.bf16.mxu0 %v553
    %727 = vmatpush1.bf16.msra.mxu0 %v552
    %728 = vmatprep.subr.bf16.mxu0 %v557
    %729 = vmatpush1.bf16.msra.mxu0 %v556
    %730 = vmatprep.subr.bf16.mxu0 %v561
    %731 = vmatpush1.bf16.msra.mxu0 %v560
    %732 = vmatprep.subr.bf16.mxu0 %v565
    %733 = vmatpush1.bf16.msra.mxu0 %v564
    %734 = vmatprep.subr.bf16.mxu0 %v569
    %735 = vmatpush1.bf16.msra.mxu0 %v568
    %736 = vmatprep.subr.bf16.mxu0 0
    %737 = vmatpush1.bf16.msra.mxu0 0
    %738 = vmatprep.subr.bf16.mxu0 0
    %739 = vmatpush1.bf16.msra.mxu0 0
    %740 = vmatprep.subr.bf16.mxu0 0
    %741 = vmatpush1.bf16.msra.mxu0 0
    %742 = vmatprep.subr.bf16.mxu0 0
    %743 = vmatpush1.bf16.msra.mxu0 0
    %744 = vmatprep.subr.bf16.mxu0 0
    %745 = vmatpush1.bf16.msra.mxu0 0
    %746 = vmatprep.subr.bf16.mxu0 0
    %747 = vmatpush1.bf16.msra.mxu0 0
    %748 = vmatprep.subr.bf16.mxu0 0
    %749 = vmatpush1.bf16.msra.mxu0 0
    %750 = vmatprep.subr.bf16.mxu0 0
    %751 = vmatpush1.bf16.msra.mxu0 0
    %752 = vmatprep.mubr.bf16.mxu0 0
    %753 = vmatmul.mubr.bf16.gmra.mrb[0].mxu0 %v719
    %v754 = vpop.f32.mrb[0].mxu0
    %v755 = vadd.f32 0.0, %v754
    %v756 = vpop.f32.mrb[0].mxu0
    %v757 = vadd.f32 0.0, %v756
    %v758 = vpop.f32.mrb[0].mxu0
    %v759 = vpop.f32.mrb[0].mxu0
    %760 = vdwg.mxu0
    %761 = vmatprep.subr.bf16.mxu0 %v543
    %762 = vmatpush1.bf16.msra.mxu0 %v542
    %763 = vmatprep.subr.bf16.mxu0 %v547
    %764 = vmatpush1.bf16.msra.mxu0 %v546
    %765 = vmatprep.subr.bf16.mxu0 %v551
    %766 = vmatpush1.bf16.msra.mxu0 %v550
    %767 = vmatprep.subr.bf16.mxu0 %v555
    %768 = vmatpush1.bf16.msra.mxu0 %v554
    %769 = vmatprep.subr.bf16.mxu0 %v559
    %770 = vmatpush1.bf16.msra.mxu0 %v558
    %771 = vmatprep.subr.bf16.mxu0 %v563
    %772 = vmatpush1.bf16.msra.mxu0 %v562
    %773 = vmatprep.subr.bf16.mxu0 %v567
    %774 = vmatpush1.bf16.msra.mxu0 %v566
    %775 = vmatprep.subr.bf16.mxu0 %v571
    %776 = vmatpush1.bf16.msra.mxu0 %v570
    %777 = vmatprep.subr.bf16.mxu0 0
    %778 = vmatpush1.bf16.msra.mxu0 0
    %779 = vmatprep.subr.bf16.mxu0 0
    %780 = vmatpush1.bf16.msra.mxu0 0
    %781 = vmatprep.subr.bf16.mxu0 0
    %782 = vmatpush1.bf16.msra.mxu0 0
    %783 = vmatprep.subr.bf16.mxu0 0
    %784 = vmatpush1.bf16.msra.mxu0 0
    %785 = vmatprep.subr.bf16.mxu0 0
    %786 = vmatpush1.bf16.msra.mxu0 0
    %787 = vmatprep.subr.bf16.mxu0 0
    %788 = vmatpush1.bf16.msra.mxu0 0
    %789 = vmatprep.subr.bf16.mxu0 0
    %790 = vmatpush1.bf16.msra.mxu0 0
    %791 = vmatprep.subr.bf16.mxu0 0
    %792 = vmatpush1.bf16.msra.mxu0 0
    %793 = vmatprep.mubr.bf16.mxu0 0
    %794 = vmatmul.mubr.bf16.gmra.mrb[0].mxu0 %v719
    %v795 = vpop.f32.mrb[0].mxu0
    %v796 = vadd.f32 0.0, %v795
    %v797 = vpop.f32.mrb[0].mxu0
    %v798 = vadd.f32 0.0, %v797
    %v799 = vpop.f32.mrb[0].mxu0
    %v800 = vpop.f32.mrb[0].mxu0
    %801 = vdwg.mxu0
    %v806 = vrot.slane %v755, 6
    %v807 = vrot.slane %v757, 6
    %v808 = vrot.slane %v796, 6
    %v809 = vrot.slane %v798, 6
    %v814 = vadd.f32 %v715, %v806
    %v815 = vadd.f32 %v716, %v807
    %v816 = vadd.f32 %v717, %v808
    %v817 = vadd.f32 %v718, %v809
    %v818 = vxor.u32 %v814, 2147483648
    %v819 = vmul.f32 %v818, 1.442695
    %v820 = vpow.pop %v819
    %v821 = vadd.f32 %v820, 1.0
    %v822 = vrcp.pop %v821
    %v823 = vmul.f32 1.0, %v822
    %v824 = vxor.u32 %v815, 2147483648
    %v825 = vmul.f32 %v824, 1.442695
    %v826 = vpow.pop %v825
    %v827 = vadd.f32 %v826, 1.0
    %v828 = vrcp.pop %v827
    %v829 = vmul.f32 1.0, %v828
    %v830 = vtanh.pop %v816
    %v831 = vxor.u32 %v817, 2147483648
    %v832 = vmul.f32 %v831, 1.442695
    %v833 = vpow.pop %v832
    %v834 = vadd.f32 %v833, 1.0
    %v835 = vrcp.pop %v834
    %v836 = vmul.f32 1.0, %v835
    %v838 = vrot.slane %v711, 6
    %v840 = vmul.f32 %v829, %v838
    %v841 = vmul.f32 %v823, %v830
    %v842 = vadd.f32 %v840, %v841
    %v843 = vtanh.pop %v842
    %v844 = vmul.f32 %v836, %v843
    %845 = vst [vmem:[#allocation3] sm:$0xc] %v844
    %v846 = vld [vmem:[#allocation2] sm:$0x30]
    %v847 = vld [vmem:[#allocation2 + $0x8] sm:$0x30]
    %v848 = vld [vmem:[#allocation2 + $0x10] sm:$0x30]
    %v849 = vld [vmem:[#allocation2 + $0x18] sm:$0x30]
    %v850 = vpack.c.bf16 %v844, %v844
    %v852 = vrot.slane %v850, 1
    %854 = vmatprep.subr.bf16.mxu0 %v541
    %855 = vmatpush1.bf16.msra.mxu0 %v540
    %856 = vmatprep.subr.bf16.mxu0 %v545
    %857 = vmatpush1.bf16.msra.mxu0 %v544
    %858 = vmatprep.subr.bf16.mxu0 %v549
    %859 = vmatpush1.bf16.msra.mxu0 %v548
    %860 = vmatprep.subr.bf16.mxu0 %v553
    %861 = vmatpush1.bf16.msra.mxu0 %v552
    %862 = vmatprep.subr.bf16.mxu0 %v557
    %863 = vmatpush1.bf16.msra.mxu0 %v556
    %864 = vmatprep.subr.bf16.mxu0 %v561
    %865 = vmatpush1.bf16.msra.mxu0 %v560
    %866 = vmatprep.subr.bf16.mxu0 %v565
    %867 = vmatpush1.bf16.msra.mxu0 %v564
    %868 = vmatprep.subr.bf16.mxu0 %v569
    %869 = vmatpush1.bf16.msra.mxu0 %v568
    %870 = vmatprep.subr.bf16.mxu0 0
    %871 = vmatpush1.bf16.msra.mxu0 0
    %872 = vmatprep.subr.bf16.mxu0 0
    %873 = vmatpush1.bf16.msra.mxu0 0
    %874 = vmatprep.subr.bf16.mxu0 0
    %875 = vmatpush1.bf16.msra.mxu0 0
    %876 = vmatprep.subr.bf16.mxu0 0
    %877 = vmatpush1.bf16.msra.mxu0 0
    %878 = vmatprep.subr.bf16.mxu0 0
    %879 = vmatpush1.bf16.msra.mxu0 0
    %880 = vmatprep.subr.bf16.mxu0 0
    %881 = vmatpush1.bf16.msra.mxu0 0
    %882 = vmatprep.subr.bf16.mxu0 0
    %883 = vmatpush1.bf16.msra.mxu0 0
    %884 = vmatprep.subr.bf16.mxu0 0
    %885 = vmatpush1.bf16.msra.mxu0 0
    %886 = vmatprep.mubr.bf16.mxu0 0
    %887 = vmatmul.mubr.bf16.gmra.mrb[0].mxu0 %v852
    %v888 = vpop.f32.mrb[0].mxu0
    %v889 = vadd.f32 0.0, %v888
    %v890 = vpop.f32.mrb[0].mxu0
    %v891 = vadd.f32 0.0, %v890
    %v892 = vpop.f32.mrb[0].mxu0
    %v893 = vpop.f32.mrb[0].mxu0
    %894 = vdwg.mxu0
    %895 = vmatprep.subr.bf16.mxu0 %v543
    %896 = vmatpush1.bf16.msra.mxu0 %v542
    %897 = vmatprep.subr.bf16.mxu0 %v547
    %898 = vmatpush1.bf16.msra.mxu0 %v546
    %899 = vmatprep.subr.bf16.mxu0 %v551
    %900 = vmatpush1.bf16.msra.mxu0 %v550
    %901 = vmatprep.subr.bf16.mxu0 %v555
    %902 = vmatpush1.bf16.msra.mxu0 %v554
    %903 = vmatprep.subr.bf16.mxu0 %v559
    %904 = vmatpush1.bf16.msra.mxu0 %v558
    %905 = vmatprep.subr.bf16.mxu0 %v563
    %906 = vmatpush1.bf16.msra.mxu0 %v562
    %907 = vmatprep.subr.bf16.mxu0 %v567
    %908 = vmatpush1.bf16.msra.mxu0 %v566
    %909 = vmatprep.subr.bf16.mxu0 %v571
    %910 = vmatpush1.bf16.msra.mxu0 %v570
    %911 = vmatprep.subr.bf16.mxu0 0
    %912 = vmatpush1.bf16.msra.mxu0 0
    %913 = vmatprep.subr.bf16.mxu0 0
    %914 = vmatpush1.bf16.msra.mxu0 0
    %915 = vmatprep.subr.bf16.mxu0 0
    %916 = vmatpush1.bf16.msra.mxu0 0
    %917 = vmatprep.subr.bf16.mxu0 0
    %918 = vmatpush1.bf16.msra.mxu0 0
    %919 = vmatprep.subr.bf16.mxu0 0
    %920 = vmatpush1.bf16.msra.mxu0 0
    %921 = vmatprep.subr.bf16.mxu0 0
    %922 = vmatpush1.bf16.msra.mxu0 0
    %923 = vmatprep.subr.bf16.mxu0 0
    %924 = vmatpush1.bf16.msra.mxu0 0
    %925 = vmatprep.subr.bf16.mxu0 0
    %926 = vmatpush1.bf16.msra.mxu0 0
    %927 = vmatprep.mubr.bf16.mxu0 0
    %928 = vmatmul.mubr.bf16.gmra.mrb[0].mxu0 %v852
    %v929 = vpop.f32.mrb[0].mxu0
    %v930 = vadd.f32 0.0, %v929
    %v931 = vpop.f32.mrb[0].mxu0
    %v932 = vadd.f32 0.0, %v931
    %v933 = vpop.f32.mrb[0].mxu0
    %v934 = vpop.f32.mrb[0].mxu0
    %935 = vdwg.mxu0
    %v940 = vrot.slane %v889, 4
    %v941 = vrot.slane %v891, 4
    %v942 = vrot.slane %v930, 4
    %v943 = vrot.slane %v932, 4
    %v948 = vadd.f32 %v846, %v940
    %v949 = vadd.f32 %v847, %v941
    %v950 = vadd.f32 %v848, %v942
    %v951 = vadd.f32 %v849, %v943
    %v952 = vxor.u32 %v948, 2147483648
    %v953 = vmul.f32 %v952, 1.442695
    %v954 = vpow.pop %v953
    %v955 = vadd.f32 %v954, 1.0
    %v956 = vrcp.pop %v955
    %v957 = vmul.f32 1.0, %v956
    %v958 = vxor.u32 %v949, 2147483648
    %v959 = vmul.f32 %v958, 1.442695
    %v960 = vpow.pop %v959
    %v961 = vadd.f32 %v960, 1.0
    %v962 = vrcp.pop %v961
    %v963 = vmul.f32 1.0, %v962
    %v964 = vtanh.pop %v950
    %v965 = vxor.u32 %v951, 2147483648
    %v966 = vmul.f32 %v965, 1.442695
    %v967 = vpow.pop %v966
    %v968 = vadd.f32 %v967, 1.0
    %v969 = vrcp.pop %v968
    %v970 = vmul.f32 1.0, %v969
    %v972 = vrot.slane %v842, 6
    %v974 = vmul.f32 %v963, %v972
    %v975 = vmul.f32 %v957, %v964
    %v976 = vadd.f32 %v974, %v975
    %v977 = vtanh.pop %v976
    %v978 = vmul.f32 %v970, %v977
    %979 = vst [vmem:[#allocation3] sm:$0x30] %v978
    %v980 = vld [vmem:[#allocation2] sm:$0xc0]
    %v981 = vld [vmem:[#allocation2 + $0x8] sm:$0xc0]
    %v982 = vld [vmem:[#allocation2 + $0x10] sm:$0xc0]
    %v983 = vld [vmem:[#allocation2 + $0x18] sm:$0xc0]
    %v984 = vpack.c.bf16 %v978, %v978
    %v986 = vrot.slane %v984, 2
    %988 = vmatprep.subr.bf16.mxu0 %v541
    %989 = vmatpush1.bf16.msra.mxu0 %v540
    %990 = vmatprep.subr.bf16.mxu0 %v545
    %991 = vmatpush1.bf16.msra.mxu0 %v544
    %992 = vmatprep.subr.bf16.mxu0 %v549
    %993 = vmatpush1.bf16.msra.mxu0 %v548
    %994 = vmatprep.subr.bf16.mxu0 %v553
    %995 = vmatpush1.bf16.msra.mxu0 %v552
    %996 = vmatprep.subr.bf16.mxu0 %v557
    %997 = vmatpush1.bf16.msra.mxu0 %v556
    %998 = vmatprep.subr.bf16.mxu0 %v561
    %999 = vmatpush1.bf16.msra.mxu0 %v560
    %1000 = vmatprep.subr.bf16.mxu0 %v565
    %1001 = vmatpush1.bf16.msra.mxu0 %v564
    %1002 = vmatprep.subr.bf16.mxu0 %v569
    %1003 = vmatpush1.bf16.msra.mxu0 %v568
    %1004 = vmatprep.subr.bf16.mxu0 0
    %1005 = vmatpush1.bf16.msra.mxu0 0
    %1006 = vmatprep.subr.bf16.mxu0 0
    %1007 = vmatpush1.bf16.msra.mxu0 0
    %1008 = vmatprep.subr.bf16.mxu0 0
    %1009 = vmatpush1.bf16.msra.mxu0 0
    %1010 = vmatprep.subr.bf16.mxu0 0
    %1011 = vmatpush1.bf16.msra.mxu0 0
    %1012 = vmatprep.subr.bf16.mxu0 0
    %1013 = vmatpush1.bf16.msra.mxu0 0
    %1014 = vmatprep.subr.bf16.mxu0 0
    %1015 = vmatpush1.bf16.msra.mxu0 0
    %1016 = vmatprep.subr.bf16.mxu0 0
    %1017 = vmatpush1.bf16.msra.mxu0 0
    %1018 = vmatprep.subr.bf16.mxu0 0
    %1019 = vmatpush1.bf16.msra.mxu0 0
    %1020 = vmatprep.mubr.bf16.mxu0 0
    %1021 = vmatmul.mubr.bf16.gmra.mrb[0].mxu0 %v986
    %v1022 = vpop.f32.mrb[0].mxu0
    %v1023 = vadd.f32 0.0, %v1022
    %v1024 = vpop.f32.mrb[0].mxu0
    %v1025 = vadd.f32 0.0, %v1024
    %v1026 = vpop.f32.mrb[0].mxu0
    %v1027 = vpop.f32.mrb[0].mxu0
    %1028 = vdwg.mxu0
    %1029 = vmatprep.subr.bf16.mxu0 %v543
    %1030 = vmatpush1.bf16.msra.mxu0 %v542
    %1031 = vmatprep.subr.bf16.mxu0 %v547
    %1032 = vmatpush1.bf16.msra.mxu0 %v546
    %1033 = vmatprep.subr.bf16.mxu0 %v551
    %1034 = vmatpush1.bf16.msra.mxu0 %v550
    %1035 = vmatprep.subr.bf16.mxu0 %v555
    %1036 = vmatpush1.bf16.msra.mxu0 %v554
    %1037 = vmatprep.subr.bf16.mxu0 %v559
    %1038 = vmatpush1.bf16.msra.mxu0 %v558
    %1039 = vmatprep.subr.bf16.mxu0 %v563
    %1040 = vmatpush1.bf16.msra.mxu0 %v562
    %1041 = vmatprep.subr.bf16.mxu0 %v567
    %1042 = vmatpush1.bf16.msra.mxu0 %v566
    %1043 = vmatprep.subr.bf16.mxu0 %v571
    %1044 = vmatpush1.bf16.msra.mxu0 %v570
    %1045 = vmatprep.subr.bf16.mxu0 0
    %1046 = vmatpush1.bf16.msra.mxu0 0
    %1047 = vmatprep.subr.bf16.mxu0 0
    %1048 = vmatpush1.bf16.msra.mxu0 0
    %1049 = vmatprep.subr.bf16.mxu0 0
    %1050 = vmatpush1.bf16.msra.mxu0 0
    %1051 = vmatprep.subr.bf16.mxu0 0
    %1052 = vmatpush1.bf16.msra.mxu0 0
    %1053 = vmatprep.subr.bf16.mxu0 0
    %1054 = vmatpush1.bf16.msra.mxu0 0
    %1055 = vmatprep.subr.bf16.mxu0 0
    %1056 = vmatpush1.bf16.msra.mxu0 0
    %1057 = vmatprep.subr.bf16.mxu0 0
    %1058 = vmatpush1.bf16.msra.mxu0 0
    %1059 = vmatprep.subr.bf16.mxu0 0
    %1060 = vmatpush1.bf16.msra.mxu0 0
    %1061 = vmatprep.mubr.bf16.mxu0 0
    %1062 = vmatmul.mubr.bf16.gmra.mrb[0].mxu0 %v986
    %v1063 = vpop.f32.mrb[0].mxu0
    %v1064 = vadd.f32 0.0, %v1063
    %v1065 = vpop.f32.mrb[0].mxu0
    %v1066 = vadd.f32 0.0, %v1065
    %v1067 = vpop.f32.mrb[0].mxu0
    %v1068 = vpop.f32.mrb[0].mxu0
    %1069 = vdwg.mxu0
    %v1074 = vrot.slane %v1023, 2
    %v1075 = vrot.slane %v1025, 2
    %v1076 = vrot.slane %v1064, 2
    %v1077 = vrot.slane %v1066, 2
    %v1082 = vadd.f32 %v980, %v1074
    %v1083 = vadd.f32 %v981, %v1075
    %v1084 = vadd.f32 %v982, %v1076
    %v1085 = vadd.f32 %v983, %v1077
    %v1086 = vxor.u32 %v1082, 2147483648
    %v1087 = vmul.f32 %v1086, 1.442695
    %v1088 = vpow.pop %v1087
    %v1089 = vadd.f32 %v1088, 1.0
    %v1090 = vrcp.pop %v1089
    %v1091 = vmul.f32 1.0, %v1090
    %v1092 = vxor.u32 %v1083, 2147483648
    %v1093 = vmul.f32 %v1092, 1.442695
    %v1094 = vpow.pop %v1093
    %v1095 = vadd.f32 %v1094, 1.0
    %v1096 = vrcp.pop %v1095
    %v1097 = vmul.f32 1.0, %v1096
    %v1098 = vtanh.pop %v1084
    %v1099 = vxor.u32 %v1085, 2147483648
    %v1100 = vmul.f32 %v1099, 1.442695
    %v1101 = vpow.pop %v1100
    %v1102 = vadd.f32 %v1101, 1.0
    %v1103 = vrcp.pop %v1102
    %v1104 = vmul.f32 1.0, %v1103
    %v1106 = vrot.slane %v976, 6
    %v1108 = vmul.f32 %v1097, %v1106
    %v1109 = vmul.f32 %v1091, %v1098
    %v1110 = vadd.f32 %v1108, %v1109
    %v1111 = vtanh.pop %v1110
    %v1112 = vmul.f32 %v1104, %v1111
    %1113 = vst [vmem:[#allocation3] sm:$0xc0] %v1112
    %v1114 = vld [vmem:[#allocation2 + $0x20] sm:$0x3]
    %v1115 = vld [vmem:[#allocation2 + $0x28] sm:$0x3]
    %v1116 = vld [vmem:[#allocation2 + $0x30] sm:$0x3]
    %v1117 = vld [vmem:[#allocation2 + $0x38] sm:$0x3]
    %v1118 = vpack.c.bf16 %v1112, %v1112
    %v1120 = vrot.slane %v1118, 3
    %1122 = vmatprep.subr.bf16.mxu0 %v541
    %1123 = vmatpush1.bf16.msra.mxu0 %v540
    %1124 = vmatprep.subr.bf16.mxu0 %v545
    %1125 = vmatpush1.bf16.msra.mxu0 %v544
    %1126 = vmatprep.subr.bf16.mxu0 %v549
    %1127 = vmatpush1.bf16.msra.mxu0 %v548
    %1128 = vmatprep.subr.bf16.mxu0 %v553
    %1129 = vmatpush1.bf16.msra.mxu0 %v552
    %1130 = vmatprep.subr.bf16.mxu0 %v557
    %1131 = vmatpush1.bf16.msra.mxu0 %v556
    %1132 = vmatprep.subr.bf16.mxu0 %v561
    %1133 = vmatpush1.bf16.msra.mxu0 %v560
    %1134 = vmatprep.subr.bf16.mxu0 %v565
    %1135 = vmatpush1.bf16.msra.mxu0 %v564
    %1136 = vmatprep.subr.bf16.mxu0 %v569
    %1137 = vmatpush1.bf16.msra.mxu0 %v568
    %1138 = vmatprep.subr.bf16.mxu0 0
    %1139 = vmatpush1.bf16.msra.mxu0 0
    %1140 = vmatprep.subr.bf16.mxu0 0
    %1141 = vmatpush1.bf16.msra.mxu0 0
    %1142 = vmatprep.subr.bf16.mxu0 0
    %1143 = vmatpush1.bf16.msra.mxu0 0
    %1144 = vmatprep.subr.bf16.mxu0 0
    %1145 = vmatpush1.bf16.msra.mxu0 0
    %1146 = vmatprep.subr.bf16.mxu0 0
    %1147 = vmatpush1.bf16.msra.mxu0 0
    %1148 = vmatprep.subr.bf16.mxu0 0
    %1149 = vmatpush1.bf16.msra.mxu0 0
    %1150 = vmatprep.subr.bf16.mxu0 0
    %1151 = vmatpush1.bf16.msra.mxu0 0
    %1152 = vmatprep.subr.bf16.mxu0 0
    %1153 = vmatpush1.bf16.msra.mxu0 0
    %1154 = vmatprep.mubr.bf16.mxu0 0
    %1155 = vmatmul.mubr.bf16.gmra.mrb[0].mxu0 %v1120
    %v1156 = vpop.f32.mrb[0].mxu0
    %v1157 = vadd.f32 0.0, %v1156
    %v1158 = vpop.f32.mrb[0].mxu0
    %v1159 = vadd.f32 0.0, %v1158
    %v1160 = vpop.f32.mrb[0].mxu0
    %v1161 = vpop.f32.mrb[0].mxu0
    %1162 = vdwg.mxu0
    %1163 = vmatprep.subr.bf16.mxu0 %v543
    %1164 = vmatpush1.bf16.msra.mxu0 %v542
    %1165 = vmatprep.subr.bf16.mxu0 %v547
    %1166 = vmatpush1.bf16.msra.mxu0 %v546
    %1167 = vmatprep.subr.bf16.mxu0 %v551
    %1168 = vmatpush1.bf16.msra.mxu0 %v550
    %1169 = vmatprep.subr.bf16.mxu0 %v555
    %1170 = vmatpush1.bf16.msra.mxu0 %v554
    %1171 = vmatprep.subr.bf16.mxu0 %v559
    %1172 = vmatpush1.bf16.msra.mxu0 %v558
    %1173 = vmatprep.subr.bf16.mxu0 %v563
    %1174 = vmatpush1.bf16.msra.mxu0 %v562
    %1175 = vmatprep.subr.bf16.mxu0 %v567
    %1176 = vmatpush1.bf16.msra.mxu0 %v566
    %1177 = vmatprep.subr.bf16.mxu0 %v571
    %1178 = vmatpush1.bf16.msra.mxu0 %v570
    %1179 = vmatprep.subr.bf16.mxu0 0
    %1180 = vmatpush1.bf16.msra.mxu0 0
    %1181 = vmatprep.subr.bf16.mxu0 0
    %1182 = vmatpush1.bf16.msra.mxu0 0
    %1183 = vmatprep.subr.bf16.mxu0 0
    %1184 = vmatpush1.bf16.msra.mxu0 0
    %1185 = vmatprep.subr.bf16.mxu0 0
    %1186 = vmatpush1.bf16.msra.mxu0 0
    %1187 = vmatprep.subr.bf16.mxu0 0
    %1188 = vmatpush1.bf16.msra.mxu0 0
    %1189 = vmatprep.subr.bf16.mxu0 0
    %1190 = vmatpush1.bf16.msra.mxu0 0
    %1191 = vmatprep.subr.bf16.mxu0 0
    %1192 = vmatpush1.bf16.msra.mxu0 0
    %1193 = vmatprep.subr.bf16.mxu0 0
    %1194 = vmatpush1.bf16.msra.mxu0 0
    %1195 = vmatprep.mubr.bf16.mxu0 0
    %1196 = vmatmul.mubr.bf16.gmra.mrb[0].mxu0 %v1120
    %v1197 = vpop.f32.mrb[0].mxu0
    %v1198 = vadd.f32 0.0, %v1197
    %v1199 = vpop.f32.mrb[0].mxu0
    %v1200 = vadd.f32 0.0, %v1199
    %v1201 = vpop.f32.mrb[0].mxu0
    %v1202 = vpop.f32.mrb[0].mxu0
    %1203 = vdwg.mxu0
    %v1204 = vadd.f32 %v1114, %v1157
    %v1205 = vadd.f32 %v1115, %v1159
    %v1206 = vadd.f32 %v1116, %v1198
    %v1207 = vadd.f32 %v1117, %v1200
    %v1208 = vxor.u32 %v1204, 2147483648
    %v1209 = vmul.f32 %v1208, 1.442695
    %v1210 = vpow.pop %v1209
    %v1211 = vadd.f32 %v1210, 1.0
    %v1212 = vrcp.pop %v1211
    %v1213 = vmul.f32 1.0, %v1212
    %v1214 = vxor.u32 %v1205, 2147483648
    %v1215 = vmul.f32 %v1214, 1.442695
    %v1216 = vpow.pop %v1215
    %v1217 = vadd.f32 %v1216, 1.0
    %v1218 = vrcp.pop %v1217
    %v1219 = vmul.f32 1.0, %v1218
    %v1220 = vtanh.pop %v1206
    %v1221 = vxor.u32 %v1207, 2147483648
    %v1222 = vmul.f32 %v1221, 1.442695
    %v1223 = vpow.pop %v1222
    %v1224 = vadd.f32 %v1223, 1.0
    %v1225 = vrcp.pop %v1224
    %v1226 = vmul.f32 1.0, %v1225
    %v1228 = vrot.slane %v1110, 6
    %v1230 = vmul.f32 %v1219, %v1228
    %v1231 = vmul.f32 %v1213, %v1220
    %v1232 = vadd.f32 %v1230, %v1231
    %v1233 = vtanh.pop %v1232
    %v1234 = vmul.f32 %v1226, %v1233
    %1235 = vst [vmem:[#allocation3 + $0x8] sm:$0x3] %v1234
    %v1236 = vld [vmem:[#allocation2 + $0x20] sm:$0xc]
    %v1237 = vld [vmem:[#allocation2 + $0x28] sm:$0xc]
    %v1238 = vld [vmem:[#allocation2 + $0x30] sm:$0xc]
    %v1239 = vld [vmem:[#allocation2 + $0x38] sm:$0xc]
    %v1240 = vpack.c.bf16 %v1234, %v1234
    %1241 = vmatprep.subr.bf16.mxu0 %v541
    %1242 = vmatpush1.bf16.msra.mxu0 %v540
    %1243 = vmatprep.subr.bf16.mxu0 %v545
    %1244 = vmatpush1.bf16.msra.mxu0 %v544
    %1245 = vmatprep.subr.bf16.mxu0 %v549
    %1246 = vmatpush1.bf16.msra.mxu0 %v548
    %1247 = vmatprep.subr.bf16.mxu0 %v553
    %1248 = vmatpush1.bf16.msra.mxu0 %v552
    %1249 = vmatprep.subr.bf16.mxu0 %v557
    %1250 = vmatpush1.bf16.msra.mxu0 %v556
    %1251 = vmatprep.subr.bf16.mxu0 %v561
    %1252 = vmatpush1.bf16.msra.mxu0 %v560
    %1253 = vmatprep.subr.bf16.mxu0 %v565
    %1254 = vmatpush1.bf16.msra.mxu0 %v564
    %1255 = vmatprep.subr.bf16.mxu0 %v569
    %1256 = vmatpush1.bf16.msra.mxu0 %v568
    %1257 = vmatprep.subr.bf16.mxu0 0
    %1258 = vmatpush1.bf16.msra.mxu0 0
    %1259 = vmatprep.subr.bf16.mxu0 0
    %1260 = vmatpush1.bf16.msra.mxu0 0
    %1261 = vmatprep.subr.bf16.mxu0 0
    %1262 = vmatpush1.bf16.msra.mxu0 0
    %1263 = vmatprep.subr.bf16.mxu0 0
    %1264 = vmatpush1.bf16.msra.mxu0 0
    %1265 = vmatprep.subr.bf16.mxu0 0
    %1266 = vmatpush1.bf16.msra.mxu0 0
    %1267 = vmatprep.subr.bf16.mxu0 0
    %1268 = vmatpush1.bf16.msra.mxu0 0
    %1269 = vmatprep.subr.bf16.mxu0 0
    %1270 = vmatpush1.bf16.msra.mxu0 0
    %1271 = vmatprep.subr.bf16.mxu0 0
    %1272 = vmatpush1.bf16.msra.mxu0 0
    %1273 = vmatprep.mubr.bf16.mxu0 0
    %1274 = vmatmul.mubr.bf16.gmra.mrb[0].mxu0 %v1240
    %v1275 = vpop.f32.mrb[0].mxu0
    %v1276 = vadd.f32 0.0, %v1275
    %v1277 = vpop.f32.mrb[0].mxu0
    %v1278 = vadd.f32 0.0, %v1277
    %v1279 = vpop.f32.mrb[0].mxu0
    %v1280 = vpop.f32.mrb[0].mxu0
    %1281 = vdwg.mxu0
    %1282 = vmatprep.subr.bf16.mxu0 %v543
    %1283 = vmatpush1.bf16.msra.mxu0 %v542
    %1284 = vmatprep.subr.bf16.mxu0 %v547
    %1285 = vmatpush1.bf16.msra.mxu0 %v546
    %1286 = vmatprep.subr.bf16.mxu0 %v551
    %1287 = vmatpush1.bf16.msra.mxu0 %v550
    %1288 = vmatprep.subr.bf16.mxu0 %v555
    %1289 = vmatpush1.bf16.msra.mxu0 %v554
    %1290 = vmatprep.subr.bf16.mxu0 %v559
    %1291 = vmatpush1.bf16.msra.mxu0 %v558
    %1292 = vmatprep.subr.bf16.mxu0 %v563
    %1293 = vmatpush1.bf16.msra.mxu0 %v562
    %1294 = vmatprep.subr.bf16.mxu0 %v567
    %1295 = vmatpush1.bf16.msra.mxu0 %v566
    %1296 = vmatprep.subr.bf16.mxu0 %v571
    %1297 = vmatpush1.bf16.msra.mxu0 %v570
    %1298 = vmatprep.subr.bf16.mxu0 0
    %1299 = vmatpush1.bf16.msra.mxu0 0
    %1300 = vmatprep.subr.bf16.mxu0 0
    %1301 = vmatpush1.bf16.msra.mxu0 0
    %1302 = vmatprep.subr.bf16.mxu0 0
    %1303 = vmatpush1.bf16.msra.mxu0 0
    %1304 = vmatprep.subr.bf16.mxu0 0
    %1305 = vmatpush1.bf16.msra.mxu0 0
    %1306 = vmatprep.subr.bf16.mxu0 0
    %1307 = vmatpush1.bf16.msra.mxu0 0
    %1308 = vmatprep.subr.bf16.mxu0 0
    %1309 = vmatpush1.bf16.msra.mxu0 0
    %1310 = vmatprep.subr.bf16.mxu0 0
    %1311 = vmatpush1.bf16.msra.mxu0 0
    %1312 = vmatprep.subr.bf16.mxu0 0
    %1313 = vmatpush1.bf16.msra.mxu0 0
    %1314 = vmatprep.mubr.bf16.mxu0 0
    %1315 = vmatmul.mubr.bf16.gmra.mrb[0].mxu0 %v1240
    %v1316 = vpop.f32.mrb[0].mxu0
    %v1317 = vadd.f32 0.0, %v1316
    %v1318 = vpop.f32.mrb[0].mxu0
    %v1319 = vadd.f32 0.0, %v1318
    %v1320 = vpop.f32.mrb[0].mxu0
    %v1321 = vpop.f32.mrb[0].mxu0
    %1322 = vdwg.mxu0
    %v1327 = vrot.slane %v1276, 6
    %v1328 = vrot.slane %v1278, 6
    %v1329 = vrot.slane %v1317, 6
    %v1330 = vrot.slane %v1319, 6
    %v1335 = vadd.f32 %v1236, %v1327
    %v1336 = vadd.f32 %v1237, %v1328
    %v1337 = vadd.f32 %v1238, %v1329
    %v1338 = vadd.f32 %v1239, %v1330
    %v1339 = vxor.u32 %v1335, 2147483648
    %v1340 = vmul.f32 %v1339, 1.442695
    %v1341 = vpow.pop %v1340
    %v1342 = vadd.f32 %v1341, 1.0
    %v1343 = vrcp.pop %v1342
    %v1344 = vmul.f32 1.0, %v1343
    %v1345 = vxor.u32 %v1336, 2147483648
    %v1346 = vmul.f32 %v1345, 1.442695
    %v1347 = vpow.pop %v1346
    %v1348 = vadd.f32 %v1347, 1.0
    %v1349 = vrcp.pop %v1348
    %v1350 = vmul.f32 1.0, %v1349
    %v1351 = vtanh.pop %v1337
    %v1352 = vxor.u32 %v1338, 2147483648
    %v1353 = vmul.f32 %v1352, 1.442695
    %v1354 = vpow.pop %v1353
    %v1355 = vadd.f32 %v1354, 1.0
    %v1356 = vrcp.pop %v1355
    %v1357 = vmul.f32 1.0, %v1356
    %v1359 = vrot.slane %v1232, 6
    %v1361 = vmul.f32 %v1350, %v1359
    %v1362 = vmul.f32 %v1344, %v1351
    %v1363 = vadd.f32 %v1361, %v1362
    %v1364 = vtanh.pop %v1363
    %v1365 = vmul.f32 %v1357, %v1364
    %1366 = vst [vmem:[#allocation3 + $0x8] sm:$0xc] %v1365
    %v1367 = vld [vmem:[#allocation2 + $0x20] sm:$0x30]
    %v1368 = vld [vmem:[#allocation2 + $0x28] sm:$0x30]
    %v1369 = vld [vmem:[#allocation2 + $0x30] sm:$0x30]
    %v1370 = vld [vmem:[#allocation2 + $0x38] sm:$0x30]
    %v1371 = vpack.c.bf16 %v1365, %v1365
    %v1373 = vrot.slane %v1371, 1
    %1375 = vmatprep.subr.bf16.mxu0 %v541
    %1376 = vmatpush1.bf16.msra.mxu0 %v540
    %1377 = vmatprep.subr.bf16.mxu0 %v545
    %1378 = vmatpush1.bf16.msra.mxu0 %v544
    %1379 = vmatprep.subr.bf16.mxu0 %v549
    %1380 = vmatpush1.bf16.msra.mxu0 %v548
    %1381 = vmatprep.subr.bf16.mxu0 %v553
    %1382 = vmatpush1.bf16.msra.mxu0 %v552
    %1383 = vmatprep.subr.bf16.mxu0 %v557
    %1384 = vmatpush1.bf16.msra.mxu0 %v556
    %1385 = vmatprep.subr.bf16.mxu0 %v561
    %1386 = vmatpush1.bf16.msra.mxu0 %v560
    %1387 = vmatprep.subr.bf16.mxu0 %v565
    %1388 = vmatpush1.bf16.msra.mxu0 %v564
    %1389 = vmatprep.subr.bf16.mxu0 %v569
    %1390 = vmatpush1.bf16.msra.mxu0 %v568
    %1391 = vmatprep.subr.bf16.mxu0 0
    %1392 = vmatpush1.bf16.msra.mxu0 0
    %1393 = vmatprep.subr.bf16.mxu0 0
    %1394 = vmatpush1.bf16.msra.mxu0 0
    %1395 = vmatprep.subr.bf16.mxu0 0
    %1396 = vmatpush1.bf16.msra.mxu0 0
    %1397 = vmatprep.subr.bf16.mxu0 0
    %1398 = vmatpush1.bf16.msra.mxu0 0
    %1399 = vmatprep.subr.bf16.mxu0 0
    %1400 = vmatpush1.bf16.msra.mxu0 0
    %1401 = vmatprep.subr.bf16.mxu0 0
    %1402 = vmatpush1.bf16.msra.mxu0 0
    %1403 = vmatprep.subr.bf16.mxu0 0
    %1404 = vmatpush1.bf16.msra.mxu0 0
    %1405 = vmatprep.subr.bf16.mxu0 0
    %1406 = vmatpush1.bf16.msra.mxu0 0
    %1407 = vmatprep.mubr.bf16.mxu0 0
    %1408 = vmatmul.mubr.bf16.gmra.mrb[0].mxu0 %v1373
    %v1409 = vpop.f32.mrb[0].mxu0
    %v1410 = vadd.f32 0.0, %v1409
    %v1411 = vpop.f32.mrb[0].mxu0
    %v1412 = vadd.f32 0.0, %v1411
    %v1413 = vpop.f32.mrb[0].mxu0
    %v1414 = vpop.f32.mrb[0].mxu0
    %1415 = vdwg.mxu0
    %1416 = vmatprep.subr.bf16.mxu0 %v543
    %1417 = vmatpush1.bf16.msra.mxu0 %v542
    %1418 = vmatprep.subr.bf16.mxu0 %v547
    %1419 = vmatpush1.bf16.msra.mxu0 %v546
    %1420 = vmatprep.subr.bf16.mxu0 %v551
    %1421 = vmatpush1.bf16.msra.mxu0 %v550
    %1422 = vmatprep.subr.bf16.mxu0 %v555
    %1423 = vmatpush1.bf16.msra.mxu0 %v554
    %1424 = vmatprep.subr.bf16.mxu0 %v559
    %1425 = vmatpush1.bf16.msra.mxu0 %v558
    %1426 = vmatprep.subr.bf16.mxu0 %v563
    %1427 = vmatpush1.bf16.msra.mxu0 %v562
    %1428 = vmatprep.subr.bf16.mxu0 %v567
    %1429 = vmatpush1.bf16.msra.mxu0 %v566
    %1430 = vmatprep.subr.bf16.mxu0 %v571
    %1431 = vmatpush1.bf16.msra.mxu0 %v570
    %1432 = vmatprep.subr.bf16.mxu0 0
    %1433 = vmatpush1.bf16.msra.mxu0 0
    %1434 = vmatprep.subr.bf16.mxu0 0
    %1435 = vmatpush1.bf16.msra.mxu0 0
    %1436 = vmatprep.subr.bf16.mxu0 0
    %1437 = vmatpush1.bf16.msra.mxu0 0
    %1438 = vmatprep.subr.bf16.mxu0 0
    %1439 = vmatpush1.bf16.msra.mxu0 0
    %1440 = vmatprep.subr.bf16.mxu0 0
    %1441 = vmatpush1.bf16.msra.mxu0 0
    %1442 = vmatprep.subr.bf16.mxu0 0
    %1443 = vmatpush1.bf16.msra.mxu0 0
    %1444 = vmatprep.subr.bf16.mxu0 0
    %1445 = vmatpush1.bf16.msra.mxu0 0
    %1446 = vmatprep.subr.bf16.mxu0 0
    %1447 = vmatpush1.bf16.msra.mxu0 0
    %1448 = vmatprep.mubr.bf16.mxu0 0
    %1449 = vmatmul.mubr.bf16.gmra.mrb[0].mxu0 %v1373
    %v1450 = vpop.f32.mrb[0].mxu0
    %v1451 = vadd.f32 0.0, %v1450
    %v1452 = vpop.f32.mrb[0].mxu0
    %v1453 = vadd.f32 0.0, %v1452
    %v1454 = vpop.f32.mrb[0].mxu0
    %v1455 = vpop.f32.mrb[0].mxu0
    %1456 = vdwg.mxu0
    %v1461 = vrot.slane %v1410, 4
    %v1462 = vrot.slane %v1412, 4
    %v1463 = vrot.slane %v1451, 4
    %v1464 = vrot.slane %v1453, 4
    %v1469 = vadd.f32 %v1367, %v1461
    %v1470 = vadd.f32 %v1368, %v1462
    %v1471 = vadd.f32 %v1369, %v1463
    %v1472 = vadd.f32 %v1370, %v1464
    %v1473 = vxor.u32 %v1469, 2147483648
    %v1474 = vmul.f32 %v1473, 1.442695
    %v1475 = vpow.pop %v1474
    %v1476 = vadd.f32 %v1475, 1.0
    %v1477 = vrcp.pop %v1476
    %v1478 = vmul.f32 1.0, %v1477
    %v1479 = vxor.u32 %v1470, 2147483648
    %v1480 = vmul.f32 %v1479, 1.442695
    %v1481 = vpow.pop %v1480
    %v1482 = vadd.f32 %v1481, 1.0
    %v1483 = vrcp.pop %v1482
    %v1484 = vmul.f32 1.0, %v1483
    %v1485 = vtanh.pop %v1471
    %v1486 = vxor.u32 %v1472, 2147483648
    %v1487 = vmul.f32 %v1486, 1.442695
    %v1488 = vpow.pop %v1487
    %v1489 = vadd.f32 %v1488, 1.0
    %v1490 = vrcp.pop %v1489
    %v1491 = vmul.f32 1.0, %v1490
    %v1493 = vrot.slane %v1363, 6
    %v1495 = vmul.f32 %v1484, %v1493
    %v1496 = vmul.f32 %v1478, %v1485
    %v1497 = vadd.f32 %v1495, %v1496
    %v1498 = vtanh.pop %v1497
    %v1499 = vmul.f32 %v1491, %v1498
    %1500 = vst [vmem:[#allocation3 + $0x8] sm:$0x30] %v1499
    %v1501 = vld [vmem:[#allocation2 + $0x20] sm:$0xc0]
    %v1502 = vld [vmem:[#allocation2 + $0x28] sm:$0xc0]
    %v1503 = vld [vmem:[#allocation2 + $0x30] sm:$0xc0]
    %v1504 = vld [vmem:[#allocation2 + $0x38] sm:$0xc0]
    %v1505 = vpack.c.bf16 %v1499, %v1499
    %v1507 = vrot.slane %v1505, 2
    %1509 = vmatprep.subr.bf16.mxu0 %v541
    %1510 = vmatpush1.bf16.msra.mxu0 %v540
    %1511 = vmatprep.subr.bf16.mxu0 %v545
    %1512 = vmatpush1.bf16.msra.mxu0 %v544
    %1513 = vmatprep.subr.bf16.mxu0 %v549
    %1514 = vmatpush1.bf16.msra.mxu0 %v548
    %1515 = vmatprep.subr.bf16.mxu0 %v553
    %1516 = vmatpush1.bf16.msra.mxu0 %v552
    %1517 = vmatprep.subr.bf16.mxu0 %v557
    %1518 = vmatpush1.bf16.msra.mxu0 %v556
    %1519 = vmatprep.subr.bf16.mxu0 %v561
    %1520 = vmatpush1.bf16.msra.mxu0 %v560
    %1521 = vmatprep.subr.bf16.mxu0 %v565
    %1522 = vmatpush1.bf16.msra.mxu0 %v564
    %1523 = vmatprep.subr.bf16.mxu0 %v569
    %1524 = vmatpush1.bf16.msra.mxu0 %v568
    %1525 = vmatprep.subr.bf16.mxu0 0
    %1526 = vmatpush1.bf16.msra.mxu0 0
    %1527 = vmatprep.subr.bf16.mxu0 0
    %1528 = vmatpush1.bf16.msra.mxu0 0
    %1529 = vmatprep.subr.bf16.mxu0 0
    %1530 = vmatpush1.bf16.msra.mxu0 0
    %1531 = vmatprep.subr.bf16.mxu0 0
    %1532 = vmatpush1.bf16.msra.mxu0 0
    %1533 = vmatprep.subr.bf16.mxu0 0
    %1534 = vmatpush1.bf16.msra.mxu0 0
    %1535 = vmatprep.subr.bf16.mxu0 0
    %1536 = vmatpush1.bf16.msra.mxu0 0
    %1537 = vmatprep.subr.bf16.mxu0 0
    %1538 = vmatpush1.bf16.msra.mxu0 0
    %1539 = vmatprep.subr.bf16.mxu0 0
    %1540 = vmatpush1.bf16.msra.mxu0 0
    %1541 = vmatprep.mubr.bf16.mxu0 0
    %1542 = vmatmul.mubr.bf16.gmra.mrb[0].mxu0 %v1507
    %v1543 = vpop.f32.mrb[0].mxu0
    %v1544 = vadd.f32 0.0, %v1543
    %v1545 = vpop.f32.mrb[0].mxu0
    %v1546 = vadd.f32 0.0, %v1545
    %v1547 = vpop.f32.mrb[0].mxu0
    %v1548 = vpop.f32.mrb[0].mxu0
    %1549 = vdwg.mxu0
    %1550 = vmatprep.subr.bf16.mxu0 %v543
    %1551 = vmatpush1.bf16.msra.mxu0 %v542
    %1552 = vmatprep.subr.bf16.mxu0 %v547
    %1553 = vmatpush1.bf16.msra.mxu0 %v546
    %1554 = vmatprep.subr.bf16.mxu0 %v551
    %1555 = vmatpush1.bf16.msra.mxu0 %v550
    %1556 = vmatprep.subr.bf16.mxu0 %v555
    %1557 = vmatpush1.bf16.msra.mxu0 %v554
    %1558 = vmatprep.subr.bf16.mxu0 %v559
    %1559 = vmatpush1.bf16.msra.mxu0 %v558
    %1560 = vmatprep.subr.bf16.mxu0 %v563
    %1561 = vmatpush1.bf16.msra.mxu0 %v562
    %1562 = vmatprep.subr.bf16.mxu0 %v567
    %1563 = vmatpush1.bf16.msra.mxu0 %v566
    %1564 = vmatprep.subr.bf16.mxu0 %v571
    %1565 = vmatpush1.bf16.msra.mxu0 %v570
    %1566 = vmatprep.subr.bf16.mxu0 0
    %1567 = vmatpush1.bf16.msra.mxu0 0
    %1568 = vmatprep.subr.bf16.mxu0 0
    %1569 = vmatpush1.bf16.msra.mxu0 0
    %1570 = vmatprep.subr.bf16.mxu0 0
    %1571 = vmatpush1.bf16.msra.mxu0 0
    %1572 = vmatprep.subr.bf16.mxu0 0
    %1573 = vmatpush1.bf16.msra.mxu0 0
    %1574 = vmatprep.subr.bf16.mxu0 0
    %1575 = vmatpush1.bf16.msra.mxu0 0
    %1576 = vmatprep.subr.bf16.mxu0 0
    %1577 = vmatpush1.bf16.msra.mxu0 0
    %1578 = vmatprep.subr.bf16.mxu0 0
    %1579 = vmatpush1.bf16.msra.mxu0 0
    %1580 = vmatprep.subr.bf16.mxu0 0
    %1581 = vmatpush1.bf16.msra.mxu0 0
    %1582 = vmatprep.mubr.bf16.mxu0 0
    %1583 = vmatmul.mubr.bf16.gmra.mrb[0].mxu0 %v1507
    %v1584 = vpop.f32.mrb[0].mxu0
    %v1585 = vadd.f32 0.0, %v1584
    %v1586 = vpop.f32.mrb[0].mxu0
    %v1587 = vadd.f32 0.0, %v1586
    %v1588 = vpop.f32.mrb[0].mxu0
    %v1589 = vpop.f32.mrb[0].mxu0
    %1590 = vdwg.mxu0
    %v1595 = vrot.slane %v1544, 2
    %v1596 = vrot.slane %v1546, 2
    %v1597 = vrot.slane %v1585, 2
    %v1598 = vrot.slane %v1587, 2
    %v1603 = vadd.f32 %v1501, %v1595
    %v1604 = vadd.f32 %v1502, %v1596
    %v1605 = vadd.f32 %v1503, %v1597
    %v1606 = vadd.f32 %v1504, %v1598
    %v1607 = vxor.u32 %v1603, 2147483648
    %v1608 = vmul.f32 %v1607, 1.442695
    %v1609 = vpow.pop %v1608
    %v1610 = vadd.f32 %v1609, 1.0
    %v1611 = vrcp.pop %v1610
    %v1612 = vmul.f32 1.0, %v1611
    %v1613 = vxor.u32 %v1604, 2147483648
    %v1614 = vmul.f32 %v1613, 1.442695
    %v1615 = vpow.pop %v1614
    %v1616 = vadd.f32 %v1615, 1.0
    %v1617 = vrcp.pop %v1616
    %v1618 = vmul.f32 1.0, %v1617
    %v1619 = vtanh.pop %v1605
    %v1620 = vxor.u32 %v1606, 2147483648
    %v1621 = vmul.f32 %v1620, 1.442695
    %v1622 = vpow.pop %v1621
    %v1623 = vadd.f32 %v1622, 1.0
    %v1624 = vrcp.pop %v1623
    %v1625 = vmul.f32 1.0, %v1624
    %v1627 = vrot.slane %v1497, 6
    %v1629 = vmul.f32 %v1618, %v1627
    %v1630 = vmul.f32 %v1612, %v1619
    %v1631 = vadd.f32 %v1629, %v1630
    %v1632 = vtanh.pop %v1631
    %v1633 = vmul.f32 %v1625, %v1632
    %1634 = vst [vmem:[#allocation3 + $0x8] sm:$0xc0] %v1633
    %v1635 = vld [vmem:[#allocation3] sm:$0xff]
    %v1636 = vld [vmem:[#allocation3 + $0x8] sm:$0xff]
    %v1637 = vpack.c.bf16 %v1636, %v1635
    %v1638 = vld [vmem:[#allocation9] sm:$0xff]
    %v1639 = vld [vmem:[#allocation9 + $0x8] sm:$0xff]
    %v1640 = vld [vmem:[#allocation9 + $0x10] sm:$0xff]
    %v1641 = vld [vmem:[#allocation9 + $0x18] sm:$0xff]
    %v1642 = vld [vmem:[#allocation9 + $0x20] sm:$0xff]
    %v1643 = vld [vmem:[#allocation9 + $0x28] sm:$0xff]
    %v1644 = vld [vmem:[#allocation9 + $0x30] sm:$0xff]
    %v1645 = vld [vmem:[#allocation9 + $0x38] sm:$0xff]
    %v1646 = vld [vmem:[#allocation9 + $0x40] sm:$0xff]
    %v1647 = vld [vmem:[#allocation9 + $0x48] sm:$0xff]
    %v1648 = vld [vmem:[#allocation9 + $0x50] sm:$0xff]
    %v1649 = vld [vmem:[#allocation9 + $0x58] sm:$0xff]
    %v1650 = vld [vmem:[#allocation9 + $0x60] sm:$0xff]
    %v1651 = vld [vmem:[#allocation9 + $0x68] sm:$0xff]
    %v1652 = vld [vmem:[#allocation9 + $0x70] sm:$0xff]
    %v1653 = vld [vmem:[#allocation9 + $0x78] sm:$0xff]
    %v1654 = vld [vmem:[#allocation9 + $0x80] sm:$0xff]
    %v1655 = vld [vmem:[#allocation9 + $0x88] sm:$0xff]
    %v1656 = vld [vmem:[#allocation9 + $0x90] sm:$0xff]
    %v1657 = vld [vmem:[#allocation9 + $0x98] sm:$0xff]
    %v1658 = vld [vmem:[#allocation9 + $0xa0] sm:$0xff]
    %v1659 = vld [vmem:[#allocation9 + $0xa8] sm:$0xff]
    %v1660 = vld [vmem:[#allocation9 + $0xb0] sm:$0xff]
    %v1661 = vld [vmem:[#allocation9 + $0xb8] sm:$0xff]
    %v1662 = vld [vmem:[#allocation9 + $0xc0] sm:$0xff]
    %v1663 = vld [vmem:[#allocation9 + $0xc8] sm:$0xff]
    %v1664 = vld [vmem:[#allocation9 + $0xd0] sm:$0xff]
    %v1665 = vld [vmem:[#allocation9 + $0xd8] sm:$0xff]
    %v1666 = vld [vmem:[#allocation9 + $0xe0] sm:$0xff]
    %v1667 = vld [vmem:[#allocation9 + $0xe8] sm:$0xff]
    %v1668 = vld [vmem:[#allocation9 + $0xf0] sm:$0xff]
    %v1669 = vld [vmem:[#allocation9 + $0xf8] sm:$0xff]
    %v1670 = vld [vmem:[%s6] sm:$0xf]
    %v1672 = vlaneseq
    %v1673 = vshrl.u32 %v1672, 7
    %v1674 = vsub.s32 0, %v1673
    %v1675 = vrot.slane %v1670, %v1674
    %v1676 = vlaneseq
    %v1677 = vshrl.u32 %v1676, 7
    %v1678 = vsub.s32 1, %v1677
    %v1679 = vrot.slane %v1670, %v1678
    %v1680 = vlaneseq
    %v1681 = vshrl.u32 %v1680, 7
    %v1682 = vsub.s32 2, %v1681
    %v1683 = vrot.slane %v1670, %v1682
    %v1684 = vlaneseq
    %v1685 = vshrl.u32 %v1684, 7
    %v1686 = vsub.s32 3, %v1685
    %v1687 = vrot.slane %v1670, %v1686
    %v1724 = vunpack.c.l.b16 %v1638
    %v1725 = vunpack.c.h.b16 %v1638
    %v1726 = vunpack.c.l.b16 %v1639
    %v1727 = vunpack.c.h.b16 %v1639
    %v1728 = vunpack.c.l.b16 %v1640
    %v1729 = vunpack.c.h.b16 %v1640
    %v1730 = vunpack.c.l.b16 %v1641
    %v1731 = vunpack.c.h.b16 %v1641
    %v1732 = vunpack.c.l.b16 %v1642
    %v1733 = vunpack.c.h.b16 %v1642
    %v1734 = vunpack.c.l.b16 %v1643
    %v1735 = vunpack.c.h.b16 %v1643
    %v1736 = vunpack.c.l.b16 %v1644
    %v1737 = vunpack.c.h.b16 %v1644
    %v1738 = vunpack.c.l.b16 %v1645
    %v1739 = vunpack.c.h.b16 %v1645
    %v1740 = vunpack.c.l.b16 %v1646
    %v1741 = vunpack.c.h.b16 %v1646
    %v1742 = vunpack.c.l.b16 %v1647
    %v1743 = vunpack.c.h.b16 %v1647
    %v1744 = vunpack.c.l.b16 %v1648
    %v1745 = vunpack.c.h.b16 %v1648
    %v1746 = vunpack.c.l.b16 %v1649
    %v1747 = vunpack.c.h.b16 %v1649
    %v1748 = vunpack.c.l.b16 %v1650
    %v1749 = vunpack.c.h.b16 %v1650
    %v1750 = vunpack.c.l.b16 %v1651
    %v1751 = vunpack.c.h.b16 %v1651
    %v1752 = vunpack.c.l.b16 %v1652
    %v1753 = vunpack.c.h.b16 %v1652
    %v1754 = vunpack.c.l.b16 %v1653
    %v1755 = vunpack.c.h.b16 %v1653
    %v1756 = vunpack.c.l.b16 %v1654
    %v1757 = vunpack.c.h.b16 %v1654
    %v1758 = vunpack.c.l.b16 %v1655
    %v1759 = vunpack.c.h.b16 %v1655
    %v1760 = vunpack.c.l.b16 %v1656
    %v1761 = vunpack.c.h.b16 %v1656
    %v1762 = vunpack.c.l.b16 %v1657
    %v1763 = vunpack.c.h.b16 %v1657
    %v1764 = vunpack.c.l.b16 %v1658
    %v1765 = vunpack.c.h.b16 %v1658
    %v1766 = vunpack.c.l.b16 %v1659
    %v1767 = vunpack.c.h.b16 %v1659
    %v1768 = vunpack.c.l.b16 %v1660
    %v1769 = vunpack.c.h.b16 %v1660
    %v1770 = vunpack.c.l.b16 %v1661
    %v1771 = vunpack.c.h.b16 %v1661
    %v1772 = vunpack.c.l.b16 %v1662
    %v1773 = vunpack.c.h.b16 %v1662
    %v1774 = vunpack.c.l.b16 %v1663
    %v1775 = vunpack.c.h.b16 %v1663
    %v1776 = vunpack.c.l.b16 %v1664
    %v1777 = vunpack.c.h.b16 %v1664
    %v1778 = vunpack.c.l.b16 %v1665
    %v1779 = vunpack.c.h.b16 %v1665
    %v1780 = vunpack.c.l.b16 %v1666
    %v1781 = vunpack.c.h.b16 %v1666
    %v1782 = vunpack.c.l.b16 %v1667
    %v1783 = vunpack.c.h.b16 %v1667
    %v1784 = vunpack.c.l.b16 %v1668
    %v1785 = vunpack.c.h.b16 %v1668
    %v1786 = vunpack.c.l.b16 %v1669
    %v1787 = vunpack.c.h.b16 %v1669
    %v1788 = vpack.c.b16 %v1728, %v1724
    %v1789 = vpack.c.b16 %v1729, %v1725
    %v1790 = vpack.c.b16 %v1730, %v1726
    %v1791 = vpack.c.b16 %v1731, %v1727
    %v1792 = vpack.c.b16 %v1736, %v1732
    %v1793 = vpack.c.b16 %v1737, %v1733
    %v1794 = vpack.c.b16 %v1738, %v1734
    %v1795 = vpack.c.b16 %v1739, %v1735
    %v1796 = vpack.c.b16 %v1744, %v1740
    %v1797 = vpack.c.b16 %v1745, %v1741
    %v1798 = vpack.c.b16 %v1746, %v1742
    %v1799 = vpack.c.b16 %v1747, %v1743
    %v1800 = vpack.c.b16 %v1752, %v1748
    %v1801 = vpack.c.b16 %v1753, %v1749
    %v1802 = vpack.c.b16 %v1754, %v1750
    %v1803 = vpack.c.b16 %v1755, %v1751
    %v1804 = vpack.c.b16 %v1760, %v1756
    %v1805 = vpack.c.b16 %v1761, %v1757
    %v1806 = vpack.c.b16 %v1762, %v1758
    %v1807 = vpack.c.b16 %v1763, %v1759
    %v1808 = vpack.c.b16 %v1768, %v1764
    %v1809 = vpack.c.b16 %v1769, %v1765
    %v1810 = vpack.c.b16 %v1770, %v1766
    %v1811 = vpack.c.b16 %v1771, %v1767
    %v1812 = vpack.c.b16 %v1776, %v1772
    %v1813 = vpack.c.b16 %v1777, %v1773
    %v1814 = vpack.c.b16 %v1778, %v1774
    %v1815 = vpack.c.b16 %v1779, %v1775
    %v1816 = vpack.c.b16 %v1784, %v1780
    %v1817 = vpack.c.b16 %v1785, %v1781
    %v1818 = vpack.c.b16 %v1786, %v1782
    %v1819 = vpack.c.b16 %v1787, %v1783
    %1852 = vmatprep.subr.bf16.mxu0 %v1789
    %1853 = vmatpush1.bf16.msra.mxu0 %v1788
    %1854 = vmatprep.subr.bf16.mxu0 %v1793
    %1855 = vmatpush1.bf16.msra.mxu0 %v1792
    %1856 = vmatprep.subr.bf16.mxu0 %v1797
    %1857 = vmatpush1.bf16.msra.mxu0 %v1796
    %1858 = vmatprep.subr.bf16.mxu0 %v1801
    %1859 = vmatpush1.bf16.msra.mxu0 %v1800
    %1860 = vmatprep.subr.bf16.mxu0 %v1805
    %1861 = vmatpush1.bf16.msra.mxu0 %v1804
    %1862 = vmatprep.subr.bf16.mxu0 %v1809
    %1863 = vmatpush1.bf16.msra.mxu0 %v1808
    %1864 = vmatprep.subr.bf16.mxu0 %v1813
    %1865 = vmatpush1.bf16.msra.mxu0 %v1812
    %1866 = vmatprep.subr.bf16.mxu0 %v1817
    %1867 = vmatpush1.bf16.msra.mxu0 %v1816
    %1868 = vmatprep.subr.bf16.mxu0 0
    %1869 = vmatpush1.bf16.msra.mxu0 0
    %1870 = vmatprep.subr.bf16.mxu0 0
    %1871 = vmatpush1.bf16.msra.mxu0 0
    %1872 = vmatprep.subr.bf16.mxu0 0
    %1873 = vmatpush1.bf16.msra.mxu0 0
    %1874 = vmatprep.subr.bf16.mxu0 0
    %1875 = vmatpush1.bf16.msra.mxu0 0
    %1876 = vmatprep.subr.bf16.mxu0 0
    %1877 = vmatpush1.bf16.msra.mxu0 0
    %1878 = vmatprep.subr.bf16.mxu0 0
    %1879 = vmatpush1.bf16.msra.mxu0 0
    %1880 = vmatprep.subr.bf16.mxu0 0
    %1881 = vmatpush1.bf16.msra.mxu0 0
    %1882 = vmatprep.subr.bf16.mxu0 0
    %1883 = vmatpush1.bf16.msra.mxu0 0
    %1884 = vmatprep.mubr.bf16.mxu0 0
    %1885 = vmatmul.mubr.bf16.gmra.mrb[0].mxu0 %v1637
    %v1886 = vpop.f32.mrb[0].mxu0
    %v1887 = vadd.f32 %v1675, %v1886
    %v1888 = vpop.f32.mrb[0].mxu0
    %v1889 = vadd.f32 %v1679, %v1888
    %v1890 = vpop.f32.mrb[0].mxu0
    %v1891 = vadd.f32 %v1675, %v1890
    %v1892 = vpop.f32.mrb[0].mxu0
    %v1893 = vadd.f32 %v1679, %v1892
    %1894 = vdwg.mxu0
    %1895 = vmatprep.subr.bf16.mxu0 %v1791
    %1896 = vmatpush1.bf16.msra.mxu0 %v1790
    %1897 = vmatprep.subr.bf16.mxu0 %v1795
    %1898 = vmatpush1.bf16.msra.mxu0 %v1794
    %1899 = vmatprep.subr.bf16.mxu0 %v1799
    %1900 = vmatpush1.bf16.msra.mxu0 %v1798
    %1901 = vmatprep.subr.bf16.mxu0 %v1803
    %1902 = vmatpush1.bf16.msra.mxu0 %v1802
    %1903 = vmatprep.subr.bf16.mxu0 %v1807
    %1904 = vmatpush1.bf16.msra.mxu0 %v1806
    %1905 = vmatprep.subr.bf16.mxu0 %v1811
    %1906 = vmatpush1.bf16.msra.mxu0 %v1810
    %1907 = vmatprep.subr.bf16.mxu0 %v1815
    %1908 = vmatpush1.bf16.msra.mxu0 %v1814
    %1909 = vmatprep.subr.bf16.mxu0 %v1819
    %1910 = vmatpush1.bf16.msra.mxu0 %v1818
    %1911 = vmatprep.subr.bf16.mxu0 0
    %1912 = vmatpush1.bf16.msra.mxu0 0
    %1913 = vmatprep.subr.bf16.mxu0 0
    %1914 = vmatpush1.bf16.msra.mxu0 0
    %1915 = vmatprep.subr.bf16.mxu0 0
    %1916 = vmatpush1.bf16.msra.mxu0 0
    %1917 = vmatprep.subr.bf16.mxu0 0
    %1918 = vmatpush1.bf16.msra.mxu0 0
    %1919 = vmatprep.subr.bf16.mxu0 0
    %1920 = vmatpush1.bf16.msra.mxu0 0
    %1921 = vmatprep.subr.bf16.mxu0 0
    %1922 = vmatpush1.bf16.msra.mxu0 0
    %1923 = vmatprep.subr.bf16.mxu0 0
    %1924 = vmatpush1.bf16.msra.mxu0 0
    %1925 = vmatprep.subr.bf16.mxu0 0
    %1926 = vmatpush1.bf16.msra.mxu0 0
    %1927 = vmatprep.mubr.bf16.mxu0 0
    %1928 = vmatmul.mubr.bf16.gmra.mrb[0].mxu0 %v1637
    %v1929 = vpop.f32.mrb[0].mxu0
    %v1930 = vadd.f32 %v1683, %v1929
    %v1931 = vpop.f32.mrb[0].mxu0
    %v1932 = vadd.f32 %v1687, %v1931
    %v1933 = vpop.f32.mrb[0].mxu0
    %v1934 = vadd.f32 %v1683, %v1933
    %v1935 = vpop.f32.mrb[0].mxu0
    %v1936 = vadd.f32 %v1687, %v1935
    %1937 = vdwg.mxu0
    %1938 = vst [vmem:[#allocation2] sm:$0xff] %v1887
    %1939 = vst [vmem:[#allocation2 + $0x8] sm:$0xff] %v1889
    %1940 = vst [vmem:[#allocation2 + $0x10] sm:$0xff] %v1930
    %1941 = vst [vmem:[#allocation2 + $0x18] sm:$0xff] %v1932
    %1942 = vst [vmem:[#allocation2 + $0x20] sm:$0xff] %v1891
    %1943 = vst [vmem:[#allocation2 + $0x28] sm:$0xff] %v1893
    %1944 = vst [vmem:[#allocation2 + $0x30] sm:$0xff] %v1934
    %1945 = vst [vmem:[#allocation2 + $0x38] sm:$0xff] %v1936
    %v1946 = vld [vmem:[#allocation10] sm:$0xff]
    %v1947 = vld [vmem:[#allocation10 + $0x8] sm:$0xff]
    %v1948 = vld [vmem:[#allocation10 + $0x10] sm:$0xff]
    %v1949 = vld [vmem:[#allocation10 + $0x18] sm:$0xff]
    %v1950 = vld [vmem:[#allocation10 + $0x20] sm:$0xff]
    %v1951 = vld [vmem:[#allocation10 + $0x28] sm:$0xff]
    %v1952 = vld [vmem:[#allocation10 + $0x30] sm:$0xff]
    %v1953 = vld [vmem:[#allocation10 + $0x38] sm:$0xff]
    %v1954 = vld [vmem:[#allocation10 + $0x40] sm:$0xff]
    %v1955 = vld [vmem:[#allocation10 + $0x48] sm:$0xff]
    %v1956 = vld [vmem:[#allocation10 + $0x50] sm:$0xff]
    %v1957 = vld [vmem:[#allocation10 + $0x58] sm:$0xff]
    %v1958 = vld [vmem:[#allocation10 + $0x60] sm:$0xff]
    %v1959 = vld [vmem:[#allocation10 + $0x68] sm:$0xff]
    %v1960 = vld [vmem:[#allocation10 + $0x70] sm:$0xff]
    %v1961 = vld [vmem:[#allocation10 + $0x78] sm:$0xff]
    %v1962 = vld [vmem:[#allocation10 + $0x80] sm:$0xff]
    %v1963 = vld [vmem:[#allocation10 + $0x88] sm:$0xff]
    %v1964 = vld [vmem:[#allocation10 + $0x90] sm:$0xff]
    %v1965 = vld [vmem:[#allocation10 + $0x98] sm:$0xff]
    %v1966 = vld [vmem:[#allocation10 + $0xa0] sm:$0xff]
    %v1967 = vld [vmem:[#allocation10 + $0xa8] sm:$0xff]
    %v1968 = vld [vmem:[#allocation10 + $0xb0] sm:$0xff]
    %v1969 = vld [vmem:[#allocation10 + $0xb8] sm:$0xff]
    %v1970 = vld [vmem:[#allocation10 + $0xc0] sm:$0xff]
    %v1971 = vld [vmem:[#allocation10 + $0xc8] sm:$0xff]
    %v1972 = vld [vmem:[#allocation10 + $0xd0] sm:$0xff]
    %v1973 = vld [vmem:[#allocation10 + $0xd8] sm:$0xff]
    %v1974 = vld [vmem:[#allocation10 + $0xe0] sm:$0xff]
    %v1975 = vld [vmem:[#allocation10 + $0xe8] sm:$0xff]
    %v1976 = vld [vmem:[#allocation10 + $0xf0] sm:$0xff]
    %v1977 = vld [vmem:[#allocation10 + $0xf8] sm:$0xff]
    %v1978 = vld [vmem:[#allocation2] sm:$0x3]
    %v1979 = vld [vmem:[#allocation2 + $0x8] sm:$0x3]
    %v1980 = vld [vmem:[#allocation2 + $0x10] sm:$0x3]
    %v1981 = vld [vmem:[#allocation2 + $0x18] sm:$0x3]
    %v2014 = vunpack.c.l.b16 %v1946
    %v2015 = vunpack.c.h.b16 %v1946
    %v2016 = vunpack.c.l.b16 %v1947
    %v2017 = vunpack.c.h.b16 %v1947
    %v2018 = vunpack.c.l.b16 %v1948
    %v2019 = vunpack.c.h.b16 %v1948
    %v2020 = vunpack.c.l.b16 %v1949
    %v2021 = vunpack.c.h.b16 %v1949
    %v2022 = vunpack.c.l.b16 %v1950
    %v2023 = vunpack.c.h.b16 %v1950
    %v2024 = vunpack.c.l.b16 %v1951
    %v2025 = vunpack.c.h.b16 %v1951
    %v2026 = vunpack.c.l.b16 %v1952
    %v2027 = vunpack.c.h.b16 %v1952
    %v2028 = vunpack.c.l.b16 %v1953
    %v2029 = vunpack.c.h.b16 %v1953
    %v2030 = vunpack.c.l.b16 %v1954
    %v2031 = vunpack.c.h.b16 %v1954
    %v2032 = vunpack.c.l.b16 %v1955
    %v2033 = vunpack.c.h.b16 %v1955
    %v2034 = vunpack.c.l.b16 %v1956
    %v2035 = vunpack.c.h.b16 %v1956
    %v2036 = vunpack.c.l.b16 %v1957
    %v2037 = vunpack.c.h.b16 %v1957
    %v2038 = vunpack.c.l.b16 %v1958
    %v2039 = vunpack.c.h.b16 %v1958
    %v2040 = vunpack.c.l.b16 %v1959
    %v2041 = vunpack.c.h.b16 %v1959
    %v2042 = vunpack.c.l.b16 %v1960
    %v2043 = vunpack.c.h.b16 %v1960
    %v2044 = vunpack.c.l.b16 %v1961
    %v2045 = vunpack.c.h.b16 %v1961
    %v2046 = vunpack.c.l.b16 %v1962
    %v2047 = vunpack.c.h.b16 %v1962
    %v2048 = vunpack.c.l.b16 %v1963
    %v2049 = vunpack.c.h.b16 %v1963
    %v2050 = vunpack.c.l.b16 %v1964
    %v2051 = vunpack.c.h.b16 %v1964
    %v2052 = vunpack.c.l.b16 %v1965
    %v2053 = vunpack.c.h.b16 %v1965
    %v2054 = vunpack.c.l.b16 %v1966
    %v2055 = vunpack.c.h.b16 %v1966
    %v2056 = vunpack.c.l.b16 %v1967
    %v2057 = vunpack.c.h.b16 %v1967
    %v2058 = vunpack.c.l.b16 %v1968
    %v2059 = vunpack.c.h.b16 %v1968
    %v2060 = vunpack.c.l.b16 %v1969
    %v2061 = vunpack.c.h.b16 %v1969
    %v2062 = vunpack.c.l.b16 %v1970
    %v2063 = vunpack.c.h.b16 %v1970
    %v2064 = vunpack.c.l.b16 %v1971
    %v2065 = vunpack.c.h.b16 %v1971
    %v2066 = vunpack.c.l.b16 %v1972
    %v2067 = vunpack.c.h.b16 %v1972
    %v2068 = vunpack.c.l.b16 %v1973
    %v2069 = vunpack.c.h.b16 %v1973
    %v2070 = vunpack.c.l.b16 %v1974
    %v2071 = vunpack.c.h.b16 %v1974
    %v2072 = vunpack.c.l.b16 %v1975
    %v2073 = vunpack.c.h.b16 %v1975
    %v2074 = vunpack.c.l.b16 %v1976
    %v2075 = vunpack.c.h.b16 %v1976
    %v2076 = vunpack.c.l.b16 %v1977
    %v2077 = vunpack.c.h.b16 %v1977
    %v2078 = vpack.c.b16 %v2018, %v2014
    %v2079 = vpack.c.b16 %v2019, %v2015
    %v2080 = vpack.c.b16 %v2020, %v2016
    %v2081 = vpack.c.b16 %v2021, %v2017
    %v2082 = vpack.c.b16 %v2026, %v2022
    %v2083 = vpack.c.b16 %v2027, %v2023
    %v2084 = vpack.c.b16 %v2028, %v2024
    %v2085 = vpack.c.b16 %v2029, %v2025
    %v2086 = vpack.c.b16 %v2034, %v2030
    %v2087 = vpack.c.b16 %v2035, %v2031
    %v2088 = vpack.c.b16 %v2036, %v2032
    %v2089 = vpack.c.b16 %v2037, %v2033
    %v2090 = vpack.c.b16 %v2042, %v2038
    %v2091 = vpack.c.b16 %v2043, %v2039
    %v2092 = vpack.c.b16 %v2044, %v2040
    %v2093 = vpack.c.b16 %v2045, %v2041
    %v2094 = vpack.c.b16 %v2050, %v2046
    %v2095 = vpack.c.b16 %v2051, %v2047
    %v2096 = vpack.c.b16 %v2052, %v2048
    %v2097 = vpack.c.b16 %v2053, %v2049
    %v2098 = vpack.c.b16 %v2058, %v2054
    %v2099 = vpack.c.b16 %v2059, %v2055
    %v2100 = vpack.c.b16 %v2060, %v2056
    %v2101 = vpack.c.b16 %v2061, %v2057
    %v2102 = vpack.c.b16 %v2066, %v2062
    %v2103 = vpack.c.b16 %v2067, %v2063
    %v2104 = vpack.c.b16 %v2068, %v2064
    %v2105 = vpack.c.b16 %v2069, %v2065
    %v2106 = vpack.c.b16 %v2074, %v2070
    %v2107 = vpack.c.b16 %v2075, %v2071
    %v2108 = vpack.c.b16 %v2076, %v2072
    %v2109 = vpack.c.b16 %v2077, %v2073
    %2142 = vmatprep.subr.bf16.mxu0 %v2079
    %2143 = vmatpush1.bf16.msra.mxu0 %v2078
    %2144 = vmatprep.subr.bf16.mxu0 %v2083
    %2145 = vmatpush1.bf16.msra.mxu0 %v2082
    %2146 = vmatprep.subr.bf16.mxu0 %v2087
    %2147 = vmatpush1.bf16.msra.mxu0 %v2086
    %2148 = vmatprep.subr.bf16.mxu0 %v2091
    %2149 = vmatpush1.bf16.msra.mxu0 %v2090
    %2150 = vmatprep.subr.bf16.mxu0 %v2095
    %2151 = vmatpush1.bf16.msra.mxu0 %v2094
    %2152 = vmatprep.subr.bf16.mxu0 %v2099
    %2153 = vmatpush1.bf16.msra.mxu0 %v2098
    %2154 = vmatprep.subr.bf16.mxu0 %v2103
    %2155 = vmatpush1.bf16.msra.mxu0 %v2102
    %2156 = vmatprep.subr.bf16.mxu0 %v2107
    %2157 = vmatpush1.bf16.msra.mxu0 %v2106
    %2158 = vmatprep.subr.bf16.mxu0 0
    %2159 = vmatpush1.bf16.msra.mxu0 0
    %2160 = vmatprep.subr.bf16.mxu0 0
    %2161 = vmatpush1.bf16.msra.mxu0 0
    %2162 = vmatprep.subr.bf16.mxu0 0
    %2163 = vmatpush1.bf16.msra.mxu0 0
    %2164 = vmatprep.subr.bf16.mxu0 0
    %2165 = vmatpush1.bf16.msra.mxu0 0
    %2166 = vmatprep.subr.bf16.mxu0 0
    %2167 = vmatpush1.bf16.msra.mxu0 0
    %2168 = vmatprep.subr.bf16.mxu0 0
    %2169 = vmatpush1.bf16.msra.mxu0 0
    %2170 = vmatprep.subr.bf16.mxu0 0
    %2171 = vmatpush1.bf16.msra.mxu0 0
    %2172 = vmatprep.subr.bf16.mxu0 0
    %2173 = vmatpush1.bf16.msra.mxu0 0
    %2174 = vmatprep.mubr.bf16.mxu0 0
    %2175 = vmatmul.mubr.bf16.gmra.mrb[0].mxu0 0
    %v2176 = vpop.f32.mrb[0].mxu0
    %v2177 = vadd.f32 0.0, %v2176
    %v2178 = vpop.f32.mrb[0].mxu0
    %v2179 = vadd.f32 0.0, %v2178
    %v2180 = vpop.f32.mrb[0].mxu0
    %v2181 = vpop.f32.mrb[0].mxu0
    %2182 = vdwg.mxu0
    %2183 = vmatprep.subr.bf16.mxu0 %v2081
    %2184 = vmatpush1.bf16.msra.mxu0 %v2080
    %2185 = vmatprep.subr.bf16.mxu0 %v2085
    %2186 = vmatpush1.bf16.msra.mxu0 %v2084
    %2187 = vmatprep.subr.bf16.mxu0 %v2089
    %2188 = vmatpush1.bf16.msra.mxu0 %v2088
    %2189 = vmatprep.subr.bf16.mxu0 %v2093
    %2190 = vmatpush1.bf16.msra.mxu0 %v2092
    %2191 = vmatprep.subr.bf16.mxu0 %v2097
    %2192 = vmatpush1.bf16.msra.mxu0 %v2096
    %2193 = vmatprep.subr.bf16.mxu0 %v2101
    %2194 = vmatpush1.bf16.msra.mxu0 %v2100
    %2195 = vmatprep.subr.bf16.mxu0 %v2105
    %2196 = vmatpush1.bf16.msra.mxu0 %v2104
    %2197 = vmatprep.subr.bf16.mxu0 %v2109
    %2198 = vmatpush1.bf16.msra.mxu0 %v2108
    %2199 = vmatprep.subr.bf16.mxu0 0
    %2200 = vmatpush1.bf16.msra.mxu0 0
    %2201 = vmatprep.subr.bf16.mxu0 0
    %2202 = vmatpush1.bf16.msra.mxu0 0
    %2203 = vmatprep.subr.bf16.mxu0 0
    %2204 = vmatpush1.bf16.msra.mxu0 0
    %2205 = vmatprep.subr.bf16.mxu0 0
    %2206 = vmatpush1.bf16.msra.mxu0 0
    %2207 = vmatprep.subr.bf16.mxu0 0
    %2208 = vmatpush1.bf16.msra.mxu0 0
    %2209 = vmatprep.subr.bf16.mxu0 0
    %2210 = vmatpush1.bf16.msra.mxu0 0
    %2211 = vmatprep.subr.bf16.mxu0 0
    %2212 = vmatpush1.bf16.msra.mxu0 0
    %2213 = vmatprep.subr.bf16.mxu0 0
    %2214 = vmatpush1.bf16.msra.mxu0 0
    %2215 = vmatprep.mubr.bf16.mxu0 0
    %2216 = vmatmul.mubr.bf16.gmra.mrb[0].mxu0 0
    %v2217 = vpop.f32.mrb[0].mxu0
    %v2218 = vadd.f32 0.0, %v2217
    %v2219 = vpop.f32.mrb[0].mxu0
    %v2220 = vadd.f32 0.0, %v2219
    %v2221 = vpop.f32.mrb[0].mxu0
    %v2222 = vpop.f32.mrb[0].mxu0
    %2223 = vdwg.mxu0
    %v2224 = vadd.f32 %v1978, %v2177
    %v2225 = vadd.f32 %v1979, %v2179
    %v2226 = vadd.f32 %v1980, %v2218
    %v2227 = vadd.f32 %v1981, %v2220
    %v2228 = vxor.u32 %v2224, 2147483648
    %v2229 = vmul.f32 %v2228, 1.442695
    %v2230 = vpow.pop %v2229
    %v2231 = vadd.f32 %v2230, 1.0
    %v2232 = vrcp.pop %v2231
    %v2233 = vmul.f32 1.0, %v2232
    %v2234 = vxor.u32 %v2225, 2147483648
    %v2235 = vmul.f32 %v2234, 1.442695
    %v2236 = vpow.pop %v2235
    %v2237 = vadd.f32 %v2236, 1.0
    %v2238 = vrcp.pop %v2237
    %v2239 = vmul.f32 1.0, %v2238
    %v2240 = vtanh.pop %v2226
    %v2241 = vxor.u32 %v2227, 2147483648
    %v2242 = vmul.f32 %v2241, 1.442695
    %v2243 = vpow.pop %v2242
    %v2244 = vadd.f32 %v2243, 1.0
    %v2245 = vrcp.pop %v2244
    %v2246 = vmul.f32 1.0, %v2245
    %v2247 = vmul.f32 %v2239, 0.0
    %v2248 = vmul.f32 %v2233, %v2240
    %v2249 = vadd.f32 %v2247, %v2248
    %v2250 = vtanh.pop %v2249
    %v2251 = vmul.f32 %v2246, %v2250
    %v2252 = vld [vmem:[#allocation2] sm:$0xc]
    %v2253 = vld [vmem:[#allocation2 + $0x8] sm:$0xc]
    %v2254 = vld [vmem:[#allocation2 + $0x10] sm:$0xc]
    %v2255 = vld [vmem:[#allocation2 + $0x18] sm:$0xc]
    %v2256 = vpack.c.bf16 %v2251, %v2251
    %2257 = vmatprep.subr.bf16.mxu0 %v2079
    %2258 = vmatpush1.bf16.msra.mxu0 %v2078
    %2259 = vmatprep.subr.bf16.mxu0 %v2083
    %2260 = vmatpush1.bf16.msra.mxu0 %v2082
    %2261 = vmatprep.subr.bf16.mxu0 %v2087
    %2262 = vmatpush1.bf16.msra.mxu0 %v2086
    %2263 = vmatprep.subr.bf16.mxu0 %v2091
    %2264 = vmatpush1.bf16.msra.mxu0 %v2090
    %2265 = vmatprep.subr.bf16.mxu0 %v2095
    %2266 = vmatpush1.bf16.msra.mxu0 %v2094
    %2267 = vmatprep.subr.bf16.mxu0 %v2099
    %2268 = vmatpush1.bf16.msra.mxu0 %v2098
    %2269 = vmatprep.subr.bf16.mxu0 %v2103
    %2270 = vmatpush1.bf16.msra.mxu0 %v2102
    %2271 = vmatprep.subr.bf16.mxu0 %v2107
    %2272 = vmatpush1.bf16.msra.mxu0 %v2106
    %2273 = vmatprep.subr.bf16.mxu0 0
    %2274 = vmatpush1.bf16.msra.mxu0 0
    %2275 = vmatprep.subr.bf16.mxu0 0
    %2276 = vmatpush1.bf16.msra.mxu0 0
    %2277 = vmatprep.subr.bf16.mxu0 0
    %2278 = vmatpush1.bf16.msra.mxu0 0
    %2279 = vmatprep.subr.bf16.mxu0 0
    %2280 = vmatpush1.bf16.msra.mxu0 0
    %2281 = vmatprep.subr.bf16.mxu0 0
    %2282 = vmatpush1.bf16.msra.mxu0 0
    %2283 = vmatprep.subr.bf16.mxu0 0
    %2284 = vmatpush1.bf16.msra.mxu0 0
    %2285 = vmatprep.subr.bf16.mxu0 0
    %2286 = vmatpush1.bf16.msra.mxu0 0
    %2287 = vmatprep.subr.bf16.mxu0 0
    %2288 = vmatpush1.bf16.msra.mxu0 0
    %2289 = vmatprep.mubr.bf16.mxu0 0
    %2290 = vmatmul.mubr.bf16.gmra.mrb[0].mxu0 %v2256
    %v2291 = vpop.f32.mrb[0].mxu0
    %v2292 = vadd.f32 0.0, %v2291
    %v2293 = vpop.f32.mrb[0].mxu0
    %v2294 = vadd.f32 0.0, %v2293
    %v2295 = vpop.f32.mrb[0].mxu0
    %v2296 = vpop.f32.mrb[0].mxu0
    %2297 = vdwg.mxu0
    %2298 = vmatprep.subr.bf16.mxu0 %v2081
    %2299 = vmatpush1.bf16.msra.mxu0 %v2080
    %2300 = vmatprep.subr.bf16.mxu0 %v2085
    %2301 = vmatpush1.bf16.msra.mxu0 %v2084
    %2302 = vmatprep.subr.bf16.mxu0 %v2089
    %2303 = vmatpush1.bf16.msra.mxu0 %v2088
    %2304 = vmatprep.subr.bf16.mxu0 %v2093
    %2305 = vmatpush1.bf16.msra.mxu0 %v2092
    %2306 = vmatprep.subr.bf16.mxu0 %v2097
    %2307 = vmatpush1.bf16.msra.mxu0 %v2096
    %2308 = vmatprep.subr.bf16.mxu0 %v2101
    %2309 = vmatpush1.bf16.msra.mxu0 %v2100
    %2310 = vmatprep.subr.bf16.mxu0 %v2105
    %2311 = vmatpush1.bf16.msra.mxu0 %v2104
    %2312 = vmatprep.subr.bf16.mxu0 %v2109
    %2313 = vmatpush1.bf16.msra.mxu0 %v2108
    %2314 = vmatprep.subr.bf16.mxu0 0
    %2315 = vmatpush1.bf16.msra.mxu0 0
    %2316 = vmatprep.subr.bf16.mxu0 0
    %2317 = vmatpush1.bf16.msra.mxu0 0
    %2318 = vmatprep.subr.bf16.mxu0 0
    %2319 = vmatpush1.bf16.msra.mxu0 0
    %2320 = vmatprep.subr.bf16.mxu0 0
    %2321 = vmatpush1.bf16.msra.mxu0 0
    %2322 = vmatprep.subr.bf16.mxu0 0
    %2323 = vmatpush1.bf16.msra.mxu0 0
    %2324 = vmatprep.subr.bf16.mxu0 0
    %2325 = vmatpush1.bf16.msra.mxu0 0
    %2326 = vmatprep.subr.bf16.mxu0 0
    %2327 = vmatpush1.bf16.msra.mxu0 0
    %2328 = vmatprep.subr.bf16.mxu0 0
    %2329 = vmatpush1.bf16.msra.mxu0 0
    %2330 = vmatprep.mubr.bf16.mxu0 0
    %2331 = vmatmul.mubr.bf16.gmra.mrb[0].mxu0 %v2256
    %v2332 = vpop.f32.mrb[0].mxu0
    %v2333 = vadd.f32 0.0, %v2332
    %v2334 = vpop.f32.mrb[0].mxu0
    %v2335 = vadd.f32 0.0, %v2334
    %v2336 = vpop.f32.mrb[0].mxu0
    %v2337 = vpop.f32.mrb[0].mxu0
    %2338 = vdwg.mxu0
    %v2343 = vrot.slane %v2292, 6
    %v2344 = vrot.slane %v2294, 6
    %v2345 = vrot.slane %v2333, 6
    %v2346 = vrot.slane %v2335, 6
    %v2351 = vadd.f32 %v2252, %v2343
    %v2352 = vadd.f32 %v2253, %v2344
    %v2353 = vadd.f32 %v2254, %v2345
    %v2354 = vadd.f32 %v2255, %v2346
    %v2355 = vxor.u32 %v2351, 2147483648
    %v2356 = vmul.f32 %v2355, 1.442695
    %v2357 = vpow.pop %v2356
    %v2358 = vadd.f32 %v2357, 1.0
    %v2359 = vrcp.pop %v2358
    %v2360 = vmul.f32 1.0, %v2359
    %v2361 = vxor.u32 %v2352, 2147483648
    %v2362 = vmul.f32 %v2361, 1.442695
    %v2363 = vpow.pop %v2362
    %v2364 = vadd.f32 %v2363, 1.0
    %v2365 = vrcp.pop %v2364
    %v2366 = vmul.f32 1.0, %v2365
    %v2367 = vtanh.pop %v2353
    %v2368 = vxor.u32 %v2354, 2147483648
    %v2369 = vmul.f32 %v2368, 1.442695
    %v2370 = vpow.pop %v2369
    %v2371 = vadd.f32 %v2370, 1.0
    %v2372 = vrcp.pop %v2371
    %v2373 = vmul.f32 1.0, %v2372
    %v2375 = vrot.slane %v2249, 6
    %v2377 = vmul.f32 %v2366, %v2375
    %v2378 = vmul.f32 %v2360, %v2367
    %v2379 = vadd.f32 %v2377, %v2378
    %v2380 = vtanh.pop %v2379
    %v2381 = vmul.f32 %v2373, %v2380
    %v2382 = vld [vmem:[#allocation2] sm:$0x30]
    %v2383 = vld [vmem:[#allocation2 + $0x8] sm:$0x30]
    %v2384 = vld [vmem:[#allocation2 + $0x10] sm:$0x30]
    %v2385 = vld [vmem:[#allocation2 + $0x18] sm:$0x30]
    %v2386 = vpack.c.bf16 %v2381, %v2381
    %v2388 = vrot.slane %v2386, 1
    %2390 = vmatprep.subr.bf16.mxu0 %v2079
    %2391 = vmatpush1.bf16.msra.mxu0 %v2078
    %2392 = vmatprep.subr.bf16.mxu0 %v2083
    %2393 = vmatpush1.bf16.msra.mxu0 %v2082
    %2394 = vmatprep.subr.bf16.mxu0 %v2087
    %2395 = vmatpush1.bf16.msra.mxu0 %v2086
    %2396 = vmatprep.subr.bf16.mxu0 %v2091
    %2397 = vmatpush1.bf16.msra.mxu0 %v2090
    %2398 = vmatprep.subr.bf16.mxu0 %v2095
    %2399 = vmatpush1.bf16.msra.mxu0 %v2094
    %2400 = vmatprep.subr.bf16.mxu0 %v2099
    %2401 = vmatpush1.bf16.msra.mxu0 %v2098
    %2402 = vmatprep.subr.bf16.mxu0 %v2103
    %2403 = vmatpush1.bf16.msra.mxu0 %v2102
    %2404 = vmatprep.subr.bf16.mxu0 %v2107
    %2405 = vmatpush1.bf16.msra.mxu0 %v2106
    %2406 = vmatprep.subr.bf16.mxu0 0
    %2407 = vmatpush1.bf16.msra.mxu0 0
    %2408 = vmatprep.subr.bf16.mxu0 0
    %2409 = vmatpush1.bf16.msra.mxu0 0
    %2410 = vmatprep.subr.bf16.mxu0 0
    %2411 = vmatpush1.bf16.msra.mxu0 0
    %2412 = vmatprep.subr.bf16.mxu0 0
    %2413 = vmatpush1.bf16.msra.mxu0 0
    %2414 = vmatprep.subr.bf16.mxu0 0
    %2415 = vmatpush1.bf16.msra.mxu0 0
    %2416 = vmatprep.subr.bf16.mxu0 0
    %2417 = vmatpush1.bf16.msra.mxu0 0
    %2418 = vmatprep.subr.bf16.mxu0 0
    %2419 = vmatpush1.bf16.msra.mxu0 0
    %2420 = vmatprep.subr.bf16.mxu0 0
    %2421 = vmatpush1.bf16.msra.mxu0 0
    %2422 = vmatprep.mubr.bf16.mxu0 0
    %2423 = vmatmul.mubr.bf16.gmra.mrb[0].mxu0 %v2388
    %v2424 = vpop.f32.mrb[0].mxu0
    %v2425 = vadd.f32 0.0, %v2424
    %v2426 = vpop.f32.mrb[0].mxu0
    %v2427 = vadd.f32 0.0, %v2426
    %v2428 = vpop.f32.mrb[0].mxu0
    %v2429 = vpop.f32.mrb[0].mxu0
    %2430 = vdwg.mxu0
    %2431 = vmatprep.subr.bf16.mxu0 %v2081
    %2432 = vmatpush1.bf16.msra.mxu0 %v2080
    %2433 = vmatprep.subr.bf16.mxu0 %v2085
    %2434 = vmatpush1.bf16.msra.mxu0 %v2084
    %2435 = vmatprep.subr.bf16.mxu0 %v2089
    %2436 = vmatpush1.bf16.msra.mxu0 %v2088
    %2437 = vmatprep.subr.bf16.mxu0 %v2093
    %2438 = vmatpush1.bf16.msra.mxu0 %v2092
    %2439 = vmatprep.subr.bf16.mxu0 %v2097
    %2440 = vmatpush1.bf16.msra.mxu0 %v2096
    %2441 = vmatprep.subr.bf16.mxu0 %v2101
    %2442 = vmatpush1.bf16.msra.mxu0 %v2100
    %2443 = vmatprep.subr.bf16.mxu0 %v2105
    %2444 = vmatpush1.bf16.msra.mxu0 %v2104
    %2445 = vmatprep.subr.bf16.mxu0 %v2109
    %2446 = vmatpush1.bf16.msra.mxu0 %v2108
    %2447 = vmatprep.subr.bf16.mxu0 0
    %2448 = vmatpush1.bf16.msra.mxu0 0
    %2449 = vmatprep.subr.bf16.mxu0 0
    %2450 = vmatpush1.bf16.msra.mxu0 0
    %2451 = vmatprep.subr.bf16.mxu0 0
    %2452 = vmatpush1.bf16.msra.mxu0 0
    %2453 = vmatprep.subr.bf16.mxu0 0
    %2454 = vmatpush1.bf16.msra.mxu0 0
    %2455 = vmatprep.subr.bf16.mxu0 0
    %2456 = vmatpush1.bf16.msra.mxu0 0
    %2457 = vmatprep.subr.bf16.mxu0 0
    %2458 = vmatpush1.bf16.msra.mxu0 0
    %2459 = vmatprep.subr.bf16.mxu0 0
    %2460 = vmatpush1.bf16.msra.mxu0 0
    %2461 = vmatprep.subr.bf16.mxu0 0
    %2462 = vmatpush1.bf16.msra.mxu0 0
    %2463 = vmatprep.mubr.bf16.mxu0 0
    %2464 = vmatmul.mubr.bf16.gmra.mrb[0].mxu0 %v2388
    %v2465 = vpop.f32.mrb[0].mxu0
    %v2466 = vadd.f32 0.0, %v2465
    %v2467 = vpop.f32.mrb[0].mxu0
    %v2468 = vadd.f32 0.0, %v2467
    %v2469 = vpop.f32.mrb[0].mxu0
    %v2470 = vpop.f32.mrb[0].mxu0
    %2471 = vdwg.mxu0
    %v2476 = vrot.slane %v2425, 4
    %v2477 = vrot.slane %v2427, 4
    %v2478 = vrot.slane %v2466, 4
    %v2479 = vrot.slane %v2468, 4
    %v2484 = vadd.f32 %v2382, %v2476
    %v2485 = vadd.f32 %v2383, %v2477
    %v2486 = vadd.f32 %v2384, %v2478
    %v2487 = vadd.f32 %v2385, %v2479
    %v2488 = vxor.u32 %v2484, 2147483648
    %v2489 = vmul.f32 %v2488, 1.442695
    %v2490 = vpow.pop %v2489
    %v2491 = vadd.f32 %v2490, 1.0
    %v2492 = vrcp.pop %v2491
    %v2493 = vmul.f32 1.0, %v2492
    %v2494 = vxor.u32 %v2485, 2147483648
    %v2495 = vmul.f32 %v2494, 1.442695
    %v2496 = vpow.pop %v2495
    %v2497 = vadd.f32 %v2496, 1.0
    %v2498 = vrcp.pop %v2497
    %v2499 = vmul.f32 1.0, %v2498
    %v2500 = vtanh.pop %v2486
    %v2501 = vxor.u32 %v2487, 2147483648
    %v2502 = vmul.f32 %v2501, 1.442695
    %v2503 = vpow.pop %v2502
    %v2504 = vadd.f32 %v2503, 1.0
    %v2505 = vrcp.pop %v2504
    %v2506 = vmul.f32 1.0, %v2505
    %v2508 = vrot.slane %v2379, 6
    %v2510 = vmul.f32 %v2499, %v2508
    %v2511 = vmul.f32 %v2493, %v2500
    %v2512 = vadd.f32 %v2510, %v2511
    %v2513 = vtanh.pop %v2512
    %v2514 = vmul.f32 %v2506, %v2513
    %v2515 = vld [vmem:[#allocation2] sm:$0xc0]
    %v2516 = vld [vmem:[#allocation2 + $0x8] sm:$0xc0]
    %v2517 = vld [vmem:[#allocation2 + $0x10] sm:$0xc0]
    %v2518 = vld [vmem:[#allocation2 + $0x18] sm:$0xc0]
    %v2519 = vpack.c.bf16 %v2514, %v2514
    %v2521 = vrot.slane %v2519, 2
    %2523 = vmatprep.subr.bf16.mxu0 %v2079
    %2524 = vmatpush1.bf16.msra.mxu0 %v2078
    %2525 = vmatprep.subr.bf16.mxu0 %v2083
    %2526 = vmatpush1.bf16.msra.mxu0 %v2082
    %2527 = vmatprep.subr.bf16.mxu0 %v2087
    %2528 = vmatpush1.bf16.msra.mxu0 %v2086
    %2529 = vmatprep.subr.bf16.mxu0 %v2091
    %2530 = vmatpush1.bf16.msra.mxu0 %v2090
    %2531 = vmatprep.subr.bf16.mxu0 %v2095
    %2532 = vmatpush1.bf16.msra.mxu0 %v2094
    %2533 = vmatprep.subr.bf16.mxu0 %v2099
    %2534 = vmatpush1.bf16.msra.mxu0 %v2098
    %2535 = vmatprep.subr.bf16.mxu0 %v2103
    %2536 = vmatpush1.bf16.msra.mxu0 %v2102
    %2537 = vmatprep.subr.bf16.mxu0 %v2107
    %2538 = vmatpush1.bf16.msra.mxu0 %v2106
    %2539 = vmatprep.subr.bf16.mxu0 0
    %2540 = vmatpush1.bf16.msra.mxu0 0
    %2541 = vmatprep.subr.bf16.mxu0 0
    %2542 = vmatpush1.bf16.msra.mxu0 0
    %2543 = vmatprep.subr.bf16.mxu0 0
    %2544 = vmatpush1.bf16.msra.mxu0 0
    %2545 = vmatprep.subr.bf16.mxu0 0
    %2546 = vmatpush1.bf16.msra.mxu0 0
    %2547 = vmatprep.subr.bf16.mxu0 0
    %2548 = vmatpush1.bf16.msra.mxu0 0
    %2549 = vmatprep.subr.bf16.mxu0 0
    %2550 = vmatpush1.bf16.msra.mxu0 0
    %2551 = vmatprep.subr.bf16.mxu0 0
    %2552 = vmatpush1.bf16.msra.mxu0 0
    %2553 = vmatprep.subr.bf16.mxu0 0
    %2554 = vmatpush1.bf16.msra.mxu0 0
    %2555 = vmatprep.mubr.bf16.mxu0 0
    %2556 = vmatmul.mubr.bf16.gmra.mrb[0].mxu0 %v2521
    %v2557 = vpop.f32.mrb[0].mxu0
    %v2558 = vadd.f32 0.0, %v2557
    %v2559 = vpop.f32.mrb[0].mxu0
    %v2560 = vadd.f32 0.0, %v2559
    %v2561 = vpop.f32.mrb[0].mxu0
    %v2562 = vpop.f32.mrb[0].mxu0
    %2563 = vdwg.mxu0
    %2564 = vmatprep.subr.bf16.mxu0 %v2081
    %2565 = vmatpush1.bf16.msra.mxu0 %v2080
    %2566 = vmatprep.subr.bf16.mxu0 %v2085
    %2567 = vmatpush1.bf16.msra.mxu0 %v2084
    %2568 = vmatprep.subr.bf16.mxu0 %v2089
    %2569 = vmatpush1.bf16.msra.mxu0 %v2088
    %2570 = vmatprep.subr.bf16.mxu0 %v2093
    %2571 = vmatpush1.bf16.msra.mxu0 %v2092
    %2572 = vmatprep.subr.bf16.mxu0 %v2097
    %2573 = vmatpush1.bf16.msra.mxu0 %v2096
    %2574 = vmatprep.subr.bf16.mxu0 %v2101
    %2575 = vmatpush1.bf16.msra.mxu0 %v2100
    %2576 = vmatprep.subr.bf16.mxu0 %v2105
    %2577 = vmatpush1.bf16.msra.mxu0 %v2104
    %2578 = vmatprep.subr.bf16.mxu0 %v2109
    %2579 = vmatpush1.bf16.msra.mxu0 %v2108
    %2580 = vmatprep.subr.bf16.mxu0 0
    %2581 = vmatpush1.bf16.msra.mxu0 0
    %2582 = vmatprep.subr.bf16.mxu0 0
    %2583 = vmatpush1.bf16.msra.mxu0 0
    %2584 = vmatprep.subr.bf16.mxu0 0
    %2585 = vmatpush1.bf16.msra.mxu0 0
    %2586 = vmatprep.subr.bf16.mxu0 0
    %2587 = vmatpush1.bf16.msra.mxu0 0
    %2588 = vmatprep.subr.bf16.mxu0 0
    %2589 = vmatpush1.bf16.msra.mxu0 0
    %2590 = vmatprep.subr.bf16.mxu0 0
    %2591 = vmatpush1.bf16.msra.mxu0 0
    %2592 = vmatprep.subr.bf16.mxu0 0
    %2593 = vmatpush1.bf16.msra.mxu0 0
    %2594 = vmatprep.subr.bf16.mxu0 0
    %2595 = vmatpush1.bf16.msra.mxu0 0
    %2596 = vmatprep.mubr.bf16.mxu0 0
    %2597 = vmatmul.mubr.bf16.gmra.mrb[0].mxu0 %v2521
    %v2598 = vpop.f32.mrb[0].mxu0
    %v2599 = vadd.f32 0.0, %v2598
    %v2600 = vpop.f32.mrb[0].mxu0
    %v2601 = vadd.f32 0.0, %v2600
    %v2602 = vpop.f32.mrb[0].mxu0
    %v2603 = vpop.f32.mrb[0].mxu0
    %2604 = vdwg.mxu0
    %v2609 = vrot.slane %v2558, 2
    %v2610 = vrot.slane %v2560, 2
    %v2611 = vrot.slane %v2599, 2
    %v2612 = vrot.slane %v2601, 2
    %v2617 = vadd.f32 %v2515, %v2609
    %v2618 = vadd.f32 %v2516, %v2610
    %v2619 = vadd.f32 %v2517, %v2611
    %v2620 = vadd.f32 %v2518, %v2612
    %v2621 = vxor.u32 %v2617, 2147483648
    %v2622 = vmul.f32 %v2621, 1.442695
    %v2623 = vpow.pop %v2622
    %v2624 = vadd.f32 %v2623, 1.0
    %v2625 = vrcp.pop %v2624
    %v2626 = vmul.f32 1.0, %v2625
    %v2627 = vxor.u32 %v2618, 2147483648
    %v2628 = vmul.f32 %v2627, 1.442695
    %v2629 = vpow.pop %v2628
    %v2630 = vadd.f32 %v2629, 1.0
    %v2631 = vrcp.pop %v2630
    %v2632 = vmul.f32 1.0, %v2631
    %v2633 = vtanh.pop %v2619
    %v2634 = vxor.u32 %v2620, 2147483648
    %v2635 = vmul.f32 %v2634, 1.442695
    %v2636 = vpow.pop %v2635
    %v2637 = vadd.f32 %v2636, 1.0
    %v2638 = vrcp.pop %v2637
    %v2639 = vmul.f32 1.0, %v2638
    %v2641 = vrot.slane %v2512, 6
    %v2643 = vmul.f32 %v2632, %v2641
    %v2644 = vmul.f32 %v2626, %v2633
    %v2645 = vadd.f32 %v2643, %v2644
    %v2646 = vtanh.pop %v2645
    %v2647 = vmul.f32 %v2639, %v2646
    %v2648 = vld [vmem:[#allocation2 + $0x20] sm:$0x3]
    %v2649 = vld [vmem:[#allocation2 + $0x28] sm:$0x3]
    %v2650 = vld [vmem:[#allocation2 + $0x30] sm:$0x3]
    %v2651 = vld [vmem:[#allocation2 + $0x38] sm:$0x3]
    %v2652 = vpack.c.bf16 %v2647, %v2647
    %v2654 = vrot.slane %v2652, 3
    %2656 = vmatprep.subr.bf16.mxu0 %v2079
    %2657 = vmatpush1.bf16.msra.mxu0 %v2078
    %2658 = vmatprep.subr.bf16.mxu0 %v2083
    %2659 = vmatpush1.bf16.msra.mxu0 %v2082
    %2660 = vmatprep.subr.bf16.mxu0 %v2087
    %2661 = vmatpush1.bf16.msra.mxu0 %v2086
    %2662 = vmatprep.subr.bf16.mxu0 %v2091
    %2663 = vmatpush1.bf16.msra.mxu0 %v2090
    %2664 = vmatprep.subr.bf16.mxu0 %v2095
    %2665 = vmatpush1.bf16.msra.mxu0 %v2094
    %2666 = vmatprep.subr.bf16.mxu0 %v2099
    %2667 = vmatpush1.bf16.msra.mxu0 %v2098
    %2668 = vmatprep.subr.bf16.mxu0 %v2103
    %2669 = vmatpush1.bf16.msra.mxu0 %v2102
    %2670 = vmatprep.subr.bf16.mxu0 %v2107
    %2671 = vmatpush1.bf16.msra.mxu0 %v2106
    %2672 = vmatprep.subr.bf16.mxu0 0
    %2673 = vmatpush1.bf16.msra.mxu0 0
    %2674 = vmatprep.subr.bf16.mxu0 0
    %2675 = vmatpush1.bf16.msra.mxu0 0
    %2676 = vmatprep.subr.bf16.mxu0 0
    %2677 = vmatpush1.bf16.msra.mxu0 0
    %2678 = vmatprep.subr.bf16.mxu0 0
    %2679 = vmatpush1.bf16.msra.mxu0 0
    %2680 = vmatprep.subr.bf16.mxu0 0
    %2681 = vmatpush1.bf16.msra.mxu0 0
    %2682 = vmatprep.subr.bf16.mxu0 0
    %2683 = vmatpush1.bf16.msra.mxu0 0
    %2684 = vmatprep.subr.bf16.mxu0 0
    %2685 = vmatpush1.bf16.msra.mxu0 0
    %2686 = vmatprep.subr.bf16.mxu0 0
    %2687 = vmatpush1.bf16.msra.mxu0 0
    %2688 = vmatprep.mubr.bf16.mxu0 0
    %2689 = vmatmul.mubr.bf16.gmra.mrb[0].mxu0 %v2654
    %v2690 = vpop.f32.mrb[0].mxu0
    %v2691 = vadd.f32 0.0, %v2690
    %v2692 = vpop.f32.mrb[0].mxu0
    %v2693 = vadd.f32 0.0, %v2692
    %v2694 = vpop.f32.mrb[0].mxu0
    %v2695 = vpop.f32.mrb[0].mxu0
    %2696 = vdwg.mxu0
    %2697 = vmatprep.subr.bf16.mxu0 %v2081
    %2698 = vmatpush1.bf16.msra.mxu0 %v2080
    %2699 = vmatprep.subr.bf16.mxu0 %v2085
    %2700 = vmatpush1.bf16.msra.mxu0 %v2084
    %2701 = vmatprep.subr.bf16.mxu0 %v2089
    %2702 = vmatpush1.bf16.msra.mxu0 %v2088
    %2703 = vmatprep.subr.bf16.mxu0 %v2093
    %2704 = vmatpush1.bf16.msra.mxu0 %v2092
    %2705 = vmatprep.subr.bf16.mxu0 %v2097
    %2706 = vmatpush1.bf16.msra.mxu0 %v2096
    %2707 = vmatprep.subr.bf16.mxu0 %v2101
    %2708 = vmatpush1.bf16.msra.mxu0 %v2100
    %2709 = vmatprep.subr.bf16.mxu0 %v2105
    %2710 = vmatpush1.bf16.msra.mxu0 %v2104
    %2711 = vmatprep.subr.bf16.mxu0 %v2109
    %2712 = vmatpush1.bf16.msra.mxu0 %v2108
    %2713 = vmatprep.subr.bf16.mxu0 0
    %2714 = vmatpush1.bf16.msra.mxu0 0
    %2715 = vmatprep.subr.bf16.mxu0 0
    %2716 = vmatpush1.bf16.msra.mxu0 0
    %2717 = vmatprep.subr.bf16.mxu0 0
    %2718 = vmatpush1.bf16.msra.mxu0 0
    %2719 = vmatprep.subr.bf16.mxu0 0
    %2720 = vmatpush1.bf16.msra.mxu0 0
    %2721 = vmatprep.subr.bf16.mxu0 0
    %2722 = vmatpush1.bf16.msra.mxu0 0
    %2723 = vmatprep.subr.bf16.mxu0 0
    %2724 = vmatpush1.bf16.msra.mxu0 0
    %2725 = vmatprep.subr.bf16.mxu0 0
    %2726 = vmatpush1.bf16.msra.mxu0 0
    %2727 = vmatprep.subr.bf16.mxu0 0
    %2728 = vmatpush1.bf16.msra.mxu0 0
    %2729 = vmatprep.mubr.bf16.mxu0 0
    %2730 = vmatmul.mubr.bf16.gmra.mrb[0].mxu0 %v2654
    %v2731 = vpop.f32.mrb[0].mxu0
    %v2732 = vadd.f32 0.0, %v2731
    %v2733 = vpop.f32.mrb[0].mxu0
    %v2734 = vadd.f32 0.0, %v2733
    %v2735 = vpop.f32.mrb[0].mxu0
    %v2736 = vpop.f32.mrb[0].mxu0
    %2737 = vdwg.mxu0
    %v2738 = vadd.f32 %v2648, %v2691
    %v2739 = vadd.f32 %v2649, %v2693
    %v2740 = vadd.f32 %v2650, %v2732
    %v2741 = vadd.f32 %v2651, %v2734
    %v2742 = vxor.u32 %v2738, 2147483648
    %v2743 = vmul.f32 %v2742, 1.442695
    %v2744 = vpow.pop %v2743
    %v2745 = vadd.f32 %v2744, 1.0
    %v2746 = vrcp.pop %v2745
    %v2747 = vmul.f32 1.0, %v2746
    %v2748 = vxor.u32 %v2739, 2147483648
    %v2749 = vmul.f32 %v2748, 1.442695
    %v2750 = vpow.pop %v2749
    %v2751 = vadd.f32 %v2750, 1.0
    %v2752 = vrcp.pop %v2751
    %v2753 = vmul.f32 1.0, %v2752
    %v2754 = vtanh.pop %v2740
    %v2755 = vxor.u32 %v2741, 2147483648
    %v2756 = vmul.f32 %v2755, 1.442695
    %v2757 = vpow.pop %v2756
    %v2758 = vadd.f32 %v2757, 1.0
    %v2759 = vrcp.pop %v2758
    %v2760 = vmul.f32 1.0, %v2759
    %v2762 = vrot.slane %v2645, 6
    %v2764 = vmul.f32 %v2753, %v2762
    %v2765 = vmul.f32 %v2747, %v2754
    %v2766 = vadd.f32 %v2764, %v2765
    %v2767 = vtanh.pop %v2766
    %v2768 = vmul.f32 %v2760, %v2767
    %v2769 = vld [vmem:[#allocation2 + $0x20] sm:$0xc]
    %v2770 = vld [vmem:[#allocation2 + $0x28] sm:$0xc]
    %v2771 = vld [vmem:[#allocation2 + $0x30] sm:$0xc]
    %v2772 = vld [vmem:[#allocation2 + $0x38] sm:$0xc]
    %v2773 = vpack.c.bf16 %v2768, %v2768
    %2774 = vmatprep.subr.bf16.mxu0 %v2079
    %2775 = vmatpush1.bf16.msra.mxu0 %v2078
    %2776 = vmatprep.subr.bf16.mxu0 %v2083
    %2777 = vmatpush1.bf16.msra.mxu0 %v2082
    %2778 = vmatprep.subr.bf16.mxu0 %v2087
    %2779 = vmatpush1.bf16.msra.mxu0 %v2086
    %2780 = vmatprep.subr.bf16.mxu0 %v2091
    %2781 = vmatpush1.bf16.msra.mxu0 %v2090
    %2782 = vmatprep.subr.bf16.mxu0 %v2095
    %2783 = vmatpush1.bf16.msra.mxu0 %v2094
    %2784 = vmatprep.subr.bf16.mxu0 %v2099
    %2785 = vmatpush1.bf16.msra.mxu0 %v2098
    %2786 = vmatprep.subr.bf16.mxu0 %v2103
    %2787 = vmatpush1.bf16.msra.mxu0 %v2102
    %2788 = vmatprep.subr.bf16.mxu0 %v2107
    %2789 = vmatpush1.bf16.msra.mxu0 %v2106
    %2790 = vmatprep.subr.bf16.mxu0 0
    %2791 = vmatpush1.bf16.msra.mxu0 0
    %2792 = vmatprep.subr.bf16.mxu0 0
    %2793 = vmatpush1.bf16.msra.mxu0 0
    %2794 = vmatprep.subr.bf16.mxu0 0
    %2795 = vmatpush1.bf16.msra.mxu0 0
    %2796 = vmatprep.subr.bf16.mxu0 0
    %2797 = vmatpush1.bf16.msra.mxu0 0
    %2798 = vmatprep.subr.bf16.mxu0 0
    %2799 = vmatpush1.bf16.msra.mxu0 0
    %2800 = vmatprep.subr.bf16.mxu0 0
    %2801 = vmatpush1.bf16.msra.mxu0 0
    %2802 = vmatprep.subr.bf16.mxu0 0
    %2803 = vmatpush1.bf16.msra.mxu0 0
    %2804 = vmatprep.subr.bf16.mxu0 0
    %2805 = vmatpush1.bf16.msra.mxu0 0
    %2806 = vmatprep.mubr.bf16.mxu0 0
    %2807 = vmatmul.mubr.bf16.gmra.mrb[0].mxu0 %v2773
    %v2808 = vpop.f32.mrb[0].mxu0
    %v2809 = vadd.f32 0.0, %v2808
    %v2810 = vpop.f32.mrb[0].mxu0
    %v2811 = vadd.f32 0.0, %v2810
    %v2812 = vpop.f32.mrb[0].mxu0
    %v2813 = vpop.f32.mrb[0].mxu0
    %2814 = vdwg.mxu0
    %2815 = vmatprep.subr.bf16.mxu0 %v2081
    %2816 = vmatpush1.bf16.msra.mxu0 %v2080
    %2817 = vmatprep.subr.bf16.mxu0 %v2085
    %2818 = vmatpush1.bf16.msra.mxu0 %v2084
    %2819 = vmatprep.subr.bf16.mxu0 %v2089
    %2820 = vmatpush1.bf16.msra.mxu0 %v2088
    %2821 = vmatprep.subr.bf16.mxu0 %v2093
    %2822 = vmatpush1.bf16.msra.mxu0 %v2092
    %2823 = vmatprep.subr.bf16.mxu0 %v2097
    %2824 = vmatpush1.bf16.msra.mxu0 %v2096
    %2825 = vmatprep.subr.bf16.mxu0 %v2101
    %2826 = vmatpush1.bf16.msra.mxu0 %v2100
    %2827 = vmatprep.subr.bf16.mxu0 %v2105
    %2828 = vmatpush1.bf16.msra.mxu0 %v2104
    %2829 = vmatprep.subr.bf16.mxu0 %v2109
    %2830 = vmatpush1.bf16.msra.mxu0 %v2108
    %2831 = vmatprep.subr.bf16.mxu0 0
    %2832 = vmatpush1.bf16.msra.mxu0 0
    %2833 = vmatprep.subr.bf16.mxu0 0
    %2834 = vmatpush1.bf16.msra.mxu0 0
    %2835 = vmatprep.subr.bf16.mxu0 0
    %2836 = vmatpush1.bf16.msra.mxu0 0
    %2837 = vmatprep.subr.bf16.mxu0 0
    %2838 = vmatpush1.bf16.msra.mxu0 0
    %2839 = vmatprep.subr.bf16.mxu0 0
    %2840 = vmatpush1.bf16.msra.mxu0 0
    %2841 = vmatprep.subr.bf16.mxu0 0
    %2842 = vmatpush1.bf16.msra.mxu0 0
    %2843 = vmatprep.subr.bf16.mxu0 0
    %2844 = vmatpush1.bf16.msra.mxu0 0
    %2845 = vmatprep.subr.bf16.mxu0 0
    %2846 = vmatpush1.bf16.msra.mxu0 0
    %2847 = vmatprep.mubr.bf16.mxu0 0
    %2848 = vmatmul.mubr.bf16.gmra.mrb[0].mxu0 %v2773
    %v2849 = vpop.f32.mrb[0].mxu0
    %v2850 = vadd.f32 0.0, %v2849
    %v2851 = vpop.f32.mrb[0].mxu0
    %v2852 = vadd.f32 0.0, %v2851
    %v2853 = vpop.f32.mrb[0].mxu0
    %v2854 = vpop.f32.mrb[0].mxu0
    %2855 = vdwg.mxu0
    %v2860 = vrot.slane %v2809, 6
    %v2861 = vrot.slane %v2811, 6
    %v2862 = vrot.slane %v2850, 6
    %v2863 = vrot.slane %v2852, 6
    %v2868 = vadd.f32 %v2769, %v2860
    %v2869 = vadd.f32 %v2770, %v2861
    %v2870 = vadd.f32 %v2771, %v2862
    %v2871 = vadd.f32 %v2772, %v2863
    %v2872 = vxor.u32 %v2868, 2147483648
    %v2873 = vmul.f32 %v2872, 1.442695
    %v2874 = vpow.pop %v2873
    %v2875 = vadd.f32 %v2874, 1.0
    %v2876 = vrcp.pop %v2875
    %v2877 = vmul.f32 1.0, %v2876
    %v2878 = vxor.u32 %v2869, 2147483648
    %v2879 = vmul.f32 %v2878, 1.442695
    %v2880 = vpow.pop %v2879
    %v2881 = vadd.f32 %v2880, 1.0
    %v2882 = vrcp.pop %v2881
    %v2883 = vmul.f32 1.0, %v2882
    %v2884 = vtanh.pop %v2870
    %v2885 = vxor.u32 %v2871, 2147483648
    %v2886 = vmul.f32 %v2885, 1.442695
    %v2887 = vpow.pop %v2886
    %v2888 = vadd.f32 %v2887, 1.0
    %v2889 = vrcp.pop %v2888
    %v2890 = vmul.f32 1.0, %v2889
    %v2892 = vrot.slane %v2766, 6
    %v2894 = vmul.f32 %v2883, %v2892
    %v2895 = vmul.f32 %v2877, %v2884
    %v2896 = vadd.f32 %v2894, %v2895
    %v2897 = vtanh.pop %v2896
    %v2898 = vmul.f32 %v2890, %v2897
    %v2899 = vld [vmem:[#allocation2 + $0x20] sm:$0x30]
    %v2900 = vld [vmem:[#allocation2 + $0x28] sm:$0x30]
    %v2901 = vld [vmem:[#allocation2 + $0x30] sm:$0x30]
    %v2902 = vld [vmem:[#allocation2 + $0x38] sm:$0x30]
    %v2903 = vpack.c.bf16 %v2898, %v2898
    %v2905 = vrot.slane %v2903, 1
    %2907 = vmatprep.subr.bf16.mxu0 %v2079
    %2908 = vmatpush1.bf16.msra.mxu0 %v2078
    %2909 = vmatprep.subr.bf16.mxu0 %v2083
    %2910 = vmatpush1.bf16.msra.mxu0 %v2082
    %2911 = vmatprep.subr.bf16.mxu0 %v2087
    %2912 = vmatpush1.bf16.msra.mxu0 %v2086
    %2913 = vmatprep.subr.bf16.mxu0 %v2091
    %2914 = vmatpush1.bf16.msra.mxu0 %v2090
    %2915 = vmatprep.subr.bf16.mxu0 %v2095
    %2916 = vmatpush1.bf16.msra.mxu0 %v2094
    %2917 = vmatprep.subr.bf16.mxu0 %v2099
    %2918 = vmatpush1.bf16.msra.mxu0 %v2098
    %2919 = vmatprep.subr.bf16.mxu0 %v2103
    %2920 = vmatpush1.bf16.msra.mxu0 %v2102
    %2921 = vmatprep.subr.bf16.mxu0 %v2107
    %2922 = vmatpush1.bf16.msra.mxu0 %v2106
    %2923 = vmatprep.subr.bf16.mxu0 0
    %2924 = vmatpush1.bf16.msra.mxu0 0
    %2925 = vmatprep.subr.bf16.mxu0 0
    %2926 = vmatpush1.bf16.msra.mxu0 0
    %2927 = vmatprep.subr.bf16.mxu0 0
    %2928 = vmatpush1.bf16.msra.mxu0 0
    %2929 = vmatprep.subr.bf16.mxu0 0
    %2930 = vmatpush1.bf16.msra.mxu0 0
    %2931 = vmatprep.subr.bf16.mxu0 0
    %2932 = vmatpush1.bf16.msra.mxu0 0
    %2933 = vmatprep.subr.bf16.mxu0 0
    %2934 = vmatpush1.bf16.msra.mxu0 0
    %2935 = vmatprep.subr.bf16.mxu0 0
    %2936 = vmatpush1.bf16.msra.mxu0 0
    %2937 = vmatprep.subr.bf16.mxu0 0
    %2938 = vmatpush1.bf16.msra.mxu0 0
    %2939 = vmatprep.mubr.bf16.mxu0 0
    %2940 = vmatmul.mubr.bf16.gmra.mrb[0].mxu0 %v2905
    %v2941 = vpop.f32.mrb[0].mxu0
    %v2942 = vadd.f32 0.0, %v2941
    %v2943 = vpop.f32.mrb[0].mxu0
    %v2944 = vadd.f32 0.0, %v2943
    %v2945 = vpop.f32.mrb[0].mxu0
    %v2946 = vpop.f32.mrb[0].mxu0
    %2947 = vdwg.mxu0
    %2948 = vmatprep.subr.bf16.mxu0 %v2081
    %2949 = vmatpush1.bf16.msra.mxu0 %v2080
    %2950 = vmatprep.subr.bf16.mxu0 %v2085
    %2951 = vmatpush1.bf16.msra.mxu0 %v2084
    %2952 = vmatprep.subr.bf16.mxu0 %v2089
    %2953 = vmatpush1.bf16.msra.mxu0 %v2088
    %2954 = vmatprep.subr.bf16.mxu0 %v2093
    %2955 = vmatpush1.bf16.msra.mxu0 %v2092
    %2956 = vmatprep.subr.bf16.mxu0 %v2097
    %2957 = vmatpush1.bf16.msra.mxu0 %v2096
    %2958 = vmatprep.subr.bf16.mxu0 %v2101
    %2959 = vmatpush1.bf16.msra.mxu0 %v2100
    %2960 = vmatprep.subr.bf16.mxu0 %v2105
    %2961 = vmatpush1.bf16.msra.mxu0 %v2104
    %2962 = vmatprep.subr.bf16.mxu0 %v2109
    %2963 = vmatpush1.bf16.msra.mxu0 %v2108
    %2964 = vmatprep.subr.bf16.mxu0 0
    %2965 = vmatpush1.bf16.msra.mxu0 0
    %2966 = vmatprep.subr.bf16.mxu0 0
    %2967 = vmatpush1.bf16.msra.mxu0 0
    %2968 = vmatprep.subr.bf16.mxu0 0
    %2969 = vmatpush1.bf16.msra.mxu0 0
    %2970 = vmatprep.subr.bf16.mxu0 0
    %2971 = vmatpush1.bf16.msra.mxu0 0
    %2972 = vmatprep.subr.bf16.mxu0 0
    %2973 = vmatpush1.bf16.msra.mxu0 0
    %2974 = vmatprep.subr.bf16.mxu0 0
    %2975 = vmatpush1.bf16.msra.mxu0 0
    %2976 = vmatprep.subr.bf16.mxu0 0
    %2977 = vmatpush1.bf16.msra.mxu0 0
    %2978 = vmatprep.subr.bf16.mxu0 0
    %2979 = vmatpush1.bf16.msra.mxu0 0
    %2980 = vmatprep.mubr.bf16.mxu0 0
    %2981 = vmatmul.mubr.bf16.gmra.mrb[0].mxu0 %v2905
    %v2982 = vpop.f32.mrb[0].mxu0
    %v2983 = vadd.f32 0.0, %v2982
    %v2984 = vpop.f32.mrb[0].mxu0
    %v2985 = vadd.f32 0.0, %v2984
    %v2986 = vpop.f32.mrb[0].mxu0
    %v2987 = vpop.f32.mrb[0].mxu0
    %2988 = vdwg.mxu0
    %v2993 = vrot.slane %v2942, 4
    %v2994 = vrot.slane %v2944, 4
    %v2995 = vrot.slane %v2983, 4
    %v2996 = vrot.slane %v2985, 4
    %v3001 = vadd.f32 %v2899, %v2993
    %v3002 = vadd.f32 %v2900, %v2994
    %v3003 = vadd.f32 %v2901, %v2995
    %v3004 = vadd.f32 %v2902, %v2996
    %v3005 = vxor.u32 %v3001, 2147483648
    %v3006 = vmul.f32 %v3005, 1.442695
    %v3007 = vpow.pop %v3006
    %v3008 = vadd.f32 %v3007, 1.0
    %v3009 = vrcp.pop %v3008
    %v3010 = vmul.f32 1.0, %v3009
    %v3011 = vxor.u32 %v3002, 2147483648
    %v3012 = vmul.f32 %v3011, 1.442695
    %v3013 = vpow.pop %v3012
    %v3014 = vadd.f32 %v3013, 1.0
    %v3015 = vrcp.pop %v3014
    %v3016 = vmul.f32 1.0, %v3015
    %v3017 = vtanh.pop %v3003
    %v3018 = vxor.u32 %v3004, 2147483648
    %v3019 = vmul.f32 %v3018, 1.442695
    %v3020 = vpow.pop %v3019
    %v3021 = vadd.f32 %v3020, 1.0
    %v3022 = vrcp.pop %v3021
    %v3023 = vmul.f32 1.0, %v3022
    %v3025 = vrot.slane %v2896, 6
    %v3027 = vmul.f32 %v3016, %v3025
    %v3028 = vmul.f32 %v3010, %v3017
    %v3029 = vadd.f32 %v3027, %v3028
    %v3030 = vtanh.pop %v3029
    %v3031 = vmul.f32 %v3023, %v3030
    %v3032 = vld [vmem:[#allocation2 + $0x20] sm:$0xc0]
    %v3033 = vld [vmem:[#allocation2 + $0x28] sm:$0xc0]
    %v3034 = vld [vmem:[#allocation2 + $0x30] sm:$0xc0]
    %v3035 = vld [vmem:[#allocation2 + $0x38] sm:$0xc0]
    %v3036 = vpack.c.bf16 %v3031, %v3031
    %v3038 = vrot.slane %v3036, 2
    %3040 = vmatprep.subr.bf16.mxu0 %v2079
    %3041 = vmatpush1.bf16.msra.mxu0 %v2078
    %3042 = vmatprep.subr.bf16.mxu0 %v2083
    %3043 = vmatpush1.bf16.msra.mxu0 %v2082
    %3044 = vmatprep.subr.bf16.mxu0 %v2087
    %3045 = vmatpush1.bf16.msra.mxu0 %v2086
    %3046 = vmatprep.subr.bf16.mxu0 %v2091
    %3047 = vmatpush1.bf16.msra.mxu0 %v2090
    %3048 = vmatprep.subr.bf16.mxu0 %v2095
    %3049 = vmatpush1.bf16.msra.mxu0 %v2094
    %3050 = vmatprep.subr.bf16.mxu0 %v2099
    %3051 = vmatpush1.bf16.msra.mxu0 %v2098
    %3052 = vmatprep.subr.bf16.mxu0 %v2103
    %3053 = vmatpush1.bf16.msra.mxu0 %v2102
    %3054 = vmatprep.subr.bf16.mxu0 %v2107
    %3055 = vmatpush1.bf16.msra.mxu0 %v2106
    %3056 = vmatprep.subr.bf16.mxu0 0
    %3057 = vmatpush1.bf16.msra.mxu0 0
    %3058 = vmatprep.subr.bf16.mxu0 0
    %3059 = vmatpush1.bf16.msra.mxu0 0
    %3060 = vmatprep.subr.bf16.mxu0 0
    %3061 = vmatpush1.bf16.msra.mxu0 0
    %3062 = vmatprep.subr.bf16.mxu0 0
    %3063 = vmatpush1.bf16.msra.mxu0 0
    %3064 = vmatprep.subr.bf16.mxu0 0
    %3065 = vmatpush1.bf16.msra.mxu0 0
    %3066 = vmatprep.subr.bf16.mxu0 0
    %3067 = vmatpush1.bf16.msra.mxu0 0
    %3068 = vmatprep.subr.bf16.mxu0 0
    %3069 = vmatpush1.bf16.msra.mxu0 0
    %3070 = vmatprep.subr.bf16.mxu0 0
    %3071 = vmatpush1.bf16.msra.mxu0 0
    %3072 = vmatprep.mubr.bf16.mxu0 0
    %3073 = vmatmul.mubr.bf16.gmra.mrb[0].mxu0 %v3038
    %v3074 = vpop.f32.mrb[0].mxu0
    %v3075 = vadd.f32 0.0, %v3074
    %v3076 = vpop.f32.mrb[0].mxu0
    %v3077 = vadd.f32 0.0, %v3076
    %v3078 = vpop.f32.mrb[0].mxu0
    %v3079 = vpop.f32.mrb[0].mxu0
    %3080 = vdwg.mxu0
    %3081 = vmatprep.subr.bf16.mxu0 %v2081
    %3082 = vmatpush1.bf16.msra.mxu0 %v2080
    %3083 = vmatprep.subr.bf16.mxu0 %v2085
    %3084 = vmatpush1.bf16.msra.mxu0 %v2084
    %3085 = vmatprep.subr.bf16.mxu0 %v2089
    %3086 = vmatpush1.bf16.msra.mxu0 %v2088
    %3087 = vmatprep.subr.bf16.mxu0 %v2093
    %3088 = vmatpush1.bf16.msra.mxu0 %v2092
    %3089 = vmatprep.subr.bf16.mxu0 %v2097
    %3090 = vmatpush1.bf16.msra.mxu0 %v2096
    %3091 = vmatprep.subr.bf16.mxu0 %v2101
    %3092 = vmatpush1.bf16.msra.mxu0 %v2100
    %3093 = vmatprep.subr.bf16.mxu0 %v2105
    %3094 = vmatpush1.bf16.msra.mxu0 %v2104
    %3095 = vmatprep.subr.bf16.mxu0 %v2109
    %3096 = vmatpush1.bf16.msra.mxu0 %v2108
    %3097 = vmatprep.subr.bf16.mxu0 0
    %3098 = vmatpush1.bf16.msra.mxu0 0
    %3099 = vmatprep.subr.bf16.mxu0 0
    %3100 = vmatpush1.bf16.msra.mxu0 0
    %3101 = vmatprep.subr.bf16.mxu0 0
    %3102 = vmatpush1.bf16.msra.mxu0 0
    %3103 = vmatprep.subr.bf16.mxu0 0
    %3104 = vmatpush1.bf16.msra.mxu0 0
    %3105 = vmatprep.subr.bf16.mxu0 0
    %3106 = vmatpush1.bf16.msra.mxu0 0
    %3107 = vmatprep.subr.bf16.mxu0 0
    %3108 = vmatpush1.bf16.msra.mxu0 0
    %3109 = vmatprep.subr.bf16.mxu0 0
    %3110 = vmatpush1.bf16.msra.mxu0 0
    %3111 = vmatprep.subr.bf16.mxu0 0
    %3112 = vmatpush1.bf16.msra.mxu0 0
    %3113 = vmatprep.mubr.bf16.mxu0 0
    %3114 = vmatmul.mubr.bf16.gmra.mrb[0].mxu0 %v3038
    %v3115 = vpop.f32.mrb[0].mxu0
    %v3116 = vadd.f32 0.0, %v3115
    %v3117 = vpop.f32.mrb[0].mxu0
    %v3118 = vadd.f32 0.0, %v3117
    %v3119 = vpop.f32.mrb[0].mxu0
    %v3120 = vpop.f32.mrb[0].mxu0
    %3121 = vdwg.mxu0
    %v3126 = vrot.slane %v3075, 2
    %v3127 = vrot.slane %v3077, 2
    %v3128 = vrot.slane %v3116, 2
    %v3129 = vrot.slane %v3118, 2
    %v3134 = vadd.f32 %v3032, %v3126
    %v3135 = vadd.f32 %v3033, %v3127
    %v3136 = vadd.f32 %v3034, %v3128
    %v3137 = vadd.f32 %v3035, %v3129
    %v3138 = vxor.u32 %v3134, 2147483648
    %v3139 = vmul.f32 %v3138, 1.442695
    %v3140 = vpow.pop %v3139
    %v3141 = vadd.f32 %v3140, 1.0
    %v3142 = vrcp.pop %v3141
    %v3143 = vmul.f32 1.0, %v3142
    %v3144 = vxor.u32 %v3135, 2147483648
    %v3145 = vmul.f32 %v3144, 1.442695
    %v3146 = vpow.pop %v3145
    %v3147 = vadd.f32 %v3146, 1.0
    %v3148 = vrcp.pop %v3147
    %v3149 = vmul.f32 1.0, %v3148
    %v3150 = vtanh.pop %v3136
    %v3151 = vxor.u32 %v3137, 2147483648
    %v3152 = vmul.f32 %v3151, 1.442695
    %v3153 = vpow.pop %v3152
    %v3154 = vadd.f32 %v3153, 1.0
    %v3155 = vrcp.pop %v3154
    %v3156 = vmul.f32 1.0, %v3155
    %v3158 = vrot.slane %v3029, 6
    %v3160 = vmul.f32 %v3149, %v3158
    %v3161 = vmul.f32 %v3143, %v3150
    %v3162 = vadd.f32 %v3160, %v3161
    %v3163 = vtanh.pop %v3162
    %v3164 = vmul.f32 %v3156, %v3163
    %v3165 = vpack.c.bf16 %v3164, %v3164
    %v3166 = vld [vmem:[%s7] sm:$0xff]
    %v3167 = vld [vmem:[%s7 + $0x8] sm:$0xff]
    %v3168 = vld [vmem:[%s7 + $0x10] sm:$0xff]
    %v3169 = vld [vmem:[%s7 + $0x18] sm:$0xff]
    %v3170 = vld [vmem:[%s7 + $0x20] sm:$0xff]
    %v3171 = vld [vmem:[%s7 + $0x28] sm:$0xff]
    %v3172 = vld [vmem:[%s7 + $0x30] sm:$0xff]
    %v3173 = vld [vmem:[%s7 + $0x38] sm:$0xff]
    %v3174 = vld [vmem:[%s7 + $0x40] sm:$0xff]
    %v3175 = vld [vmem:[%s7 + $0x48] sm:$0xff]
    %v3176 = vld [vmem:[%s7 + $0x50] sm:$0xff]
    %v3177 = vld [vmem:[%s7 + $0x58] sm:$0xff]
    %v3178 = vld [vmem:[%s7 + $0x60] sm:$0xff]
    %v3179 = vld [vmem:[%s7 + $0x68] sm:$0xff]
    %v3180 = vld [vmem:[%s7 + $0x70] sm:$0xff]
    %v3181 = vld [vmem:[%s7 + $0x78] sm:$0xff]
    %v3182 = vld [vmem:[%s8] sm:$0x3]
    %v3184 = vlaneseq
    %v3185 = vshrl.u32 %v3184, 7
    %v3186 = vsub.s32 0, %v3185
    %v3187 = vrot.slane %v3182, %v3186
    %v3188 = vlaneseq
    %v3189 = vshrl.u32 %v3188, 7
    %v3190 = vsub.s32 1, %v3189
    %v3191 = vrot.slane %v3182, %v3190
    %v3195 = vrot.slane %v3165, 3
    %v3213 = vunpack.c.l.b16 %v3166
    %v3214 = vunpack.c.h.b16 %v3166
    %v3215 = vunpack.c.l.b16 %v3167
    %v3216 = vunpack.c.h.b16 %v3167
    %v3217 = vunpack.c.l.b16 %v3168
    %v3218 = vunpack.c.h.b16 %v3168
    %v3219 = vunpack.c.l.b16 %v3169
    %v3220 = vunpack.c.h.b16 %v3169
    %v3221 = vunpack.c.l.b16 %v3170
    %v3222 = vunpack.c.h.b16 %v3170
    %v3223 = vunpack.c.l.b16 %v3171
    %v3224 = vunpack.c.h.b16 %v3171
    %v3225 = vunpack.c.l.b16 %v3172
    %v3226 = vunpack.c.h.b16 %v3172
    %v3227 = vunpack.c.l.b16 %v3173
    %v3228 = vunpack.c.h.b16 %v3173
    %v3229 = vunpack.c.l.b16 %v3174
    %v3230 = vunpack.c.h.b16 %v3174
    %v3231 = vunpack.c.l.b16 %v3175
    %v3232 = vunpack.c.h.b16 %v3175
    %v3233 = vunpack.c.l.b16 %v3176
    %v3234 = vunpack.c.h.b16 %v3176
    %v3235 = vunpack.c.l.b16 %v3177
    %v3236 = vunpack.c.h.b16 %v3177
    %v3237 = vunpack.c.l.b16 %v3178
    %v3238 = vunpack.c.h.b16 %v3178
    %v3239 = vunpack.c.l.b16 %v3179
    %v3240 = vunpack.c.h.b16 %v3179
    %v3241 = vunpack.c.l.b16 %v3180
    %v3242 = vunpack.c.h.b16 %v3180
    %v3243 = vunpack.c.l.b16 %v3181
    %v3244 = vunpack.c.h.b16 %v3181
    %v3245 = vpack.c.b16 %v3215, %v3213
    %v3246 = vpack.c.b16 %v3216, %v3214
    %v3247 = vpack.c.b16 %v3219, %v3217
    %v3248 = vpack.c.b16 %v3220, %v3218
    %v3249 = vpack.c.b16 %v3223, %v3221
    %v3250 = vpack.c.b16 %v3224, %v3222
    %v3251 = vpack.c.b16 %v3227, %v3225
    %v3252 = vpack.c.b16 %v3228, %v3226
    %v3253 = vpack.c.b16 %v3231, %v3229
    %v3254 = vpack.c.b16 %v3232, %v3230
    %v3255 = vpack.c.b16 %v3235, %v3233
    %v3256 = vpack.c.b16 %v3236, %v3234
    %v3257 = vpack.c.b16 %v3239, %v3237
    %v3258 = vpack.c.b16 %v3240, %v3238
    %v3259 = vpack.c.b16 %v3243, %v3241
    %v3260 = vpack.c.b16 %v3244, %v3242
    %3277 = vmatprep.subr.bf16.mxu0 %v3246
    %3278 = vmatpush1.bf16.msra.mxu0 %v3245
    %3279 = vmatprep.subr.bf16.mxu0 %v3248
    %3280 = vmatpush1.bf16.msra.mxu0 %v3247
    %3281 = vmatprep.subr.bf16.mxu0 %v3250
    %3282 = vmatpush1.bf16.msra.mxu0 %v3249
    %3283 = vmatprep.subr.bf16.mxu0 %v3252
    %3284 = vmatpush1.bf16.msra.mxu0 %v3251
    %3285 = vmatprep.subr.bf16.mxu0 %v3254
    %3286 = vmatpush1.bf16.msra.mxu0 %v3253
    %3287 = vmatprep.subr.bf16.mxu0 %v3256
    %3288 = vmatpush1.bf16.msra.mxu0 %v3255
    %3289 = vmatprep.subr.bf16.mxu0 %v3258
    %3290 = vmatpush1.bf16.msra.mxu0 %v3257
    %3291 = vmatprep.subr.bf16.mxu0 %v3260
    %3292 = vmatpush1.bf16.msra.mxu0 %v3259
    %3293 = vmatprep.subr.bf16.mxu0 0
    %3294 = vmatpush1.bf16.msra.mxu0 0
    %3295 = vmatprep.subr.bf16.mxu0 0
    %3296 = vmatpush1.bf16.msra.mxu0 0
    %3297 = vmatprep.subr.bf16.mxu0 0
    %3298 = vmatpush1.bf16.msra.mxu0 0
    %3299 = vmatprep.subr.bf16.mxu0 0
    %3300 = vmatpush1.bf16.msra.mxu0 0
    %3301 = vmatprep.subr.bf16.mxu0 0
    %3302 = vmatpush1.bf16.msra.mxu0 0
    %3303 = vmatprep.subr.bf16.mxu0 0
    %3304 = vmatpush1.bf16.msra.mxu0 0
    %3305 = vmatprep.subr.bf16.mxu0 0
    %3306 = vmatpush1.bf16.msra.mxu0 0
    %3307 = vmatprep.subr.bf16.mxu0 0
    %3308 = vmatpush1.bf16.msra.mxu0 0
    %3309 = vmatprep.mubr.bf16.mxu0 0
    %3310 = vmatmul.mubr.bf16.gmra.mrb[0].mxu0 %v3195
    %v3311 = vpop.f32.mrb[0].mxu0
    %v3312 = vadd.f32 %v3187, %v3311
    %v3313 = vpop.f32.mrb[0].mxu0
    %v3314 = vadd.f32 %v3191, %v3313
    %v3315 = vpop.f32.mrb[0].mxu0
    %v3316 = vpop.f32.mrb[0].mxu0
    %3317 = vdwg.mxu0
    %v3318 = vtanh.pop %v3312
    %v3319 = vtanh.pop %v3314
    %v3320 = vpack.c.bf16 %v3318, %v3318
    %v3321 = vpack.c.bf16 %v3319, %v3319
    %v3322 = vld [vmem:[%s9] sm:$0xf]
    %v3323 = vld [vmem:[%s9 + $0x4] sm:$0xf]
    %v3324 = vld [vmem:[%s9 + $0x8] sm:$0xf]
    %v3325 = vld [vmem:[%s9 + $0xc] sm:$0xf]
    %v3326 = vld [vmem:[%s9 + $0x10] sm:$0xf]
    %v3327 = vld [vmem:[%s9 + $0x14] sm:$0xf]
    %v3328 = vld [vmem:[%s9 + $0x18] sm:$0xf]
    %v3329 = vld [vmem:[%s9 + $0x1c] sm:$0xf]
    %v3330 = vld [vmem:[%s9 + $0x20] sm:$0xf]
    %v3331 = vld [vmem:[%s9 + $0x24] sm:$0xf]
    %v3332 = vld [vmem:[%s9 + $0x28] sm:$0xf]
    %v3333 = vld [vmem:[%s9 + $0x2c] sm:$0xf]
    %v3334 = vld [vmem:[%s9 + $0x30] sm:$0xf]
    %v3335 = vld [vmem:[%s9 + $0x34] sm:$0xf]
    %v3336 = vld [vmem:[%s9 + $0x38] sm:$0xf]
    %v3337 = vld [vmem:[%s9 + $0x3c] sm:$0xf]
    %v3338 = vld [vmem:[%s9 + $0x40] sm:$0xf]
    %v3339 = vld [vmem:[%s9 + $0x44] sm:$0xf]
    %v3340 = vld [vmem:[%s9 + $0x48] sm:$0xf]
    %v3341 = vld [vmem:[%s9 + $0x4c] sm:$0xf]
    %v3342 = vld [vmem:[%s9 + $0x50] sm:$0xf]
    %v3343 = vld [vmem:[%s9 + $0x54] sm:$0xf]
    %v3344 = vld [vmem:[%s9 + $0x58] sm:$0xf]
    %v3345 = vld [vmem:[%s9 + $0x5c] sm:$0xf]
    %v3346 = vld [vmem:[%s9 + $0x60] sm:$0xf]
    %v3347 = vld [vmem:[%s9 + $0x64] sm:$0xf]
    %v3348 = vld [vmem:[%s9 + $0x68] sm:$0xf]
    %v3349 = vld [vmem:[%s9 + $0x6c] sm:$0xf]
    %v3350 = vld [vmem:[%s9 + $0x70] sm:$0xf]
    %v3351 = vld [vmem:[%s9 + $0x74] sm:$0xf]
    %v3352 = vld [vmem:[%s9 + $0x78] sm:$0xf]
    %v3353 = vld [vmem:[%s9 + $0x7c] sm:$0xf]
    %v3354 = vld [vmem:[%s10] sm:$0x1]
    %v3356 = vlaneseq
    %v3357 = vshrl.u32 %v3356, 7
    %v3358 = vsub.s32 0, %v3357
    %v3359 = vrot.slane %v3354, %v3358
    %v3393 = vunpack.c.l.b16 %v3322
    %v3394 = vunpack.c.l.b16 %v3323
    %v3395 = vunpack.c.l.b16 %v3324
    %v3396 = vunpack.c.l.b16 %v3325
    %v3397 = vunpack.c.l.b16 %v3326
    %v3398 = vunpack.c.l.b16 %v3327
    %v3399 = vunpack.c.l.b16 %v3328
    %v3400 = vunpack.c.l.b16 %v3329
    %v3401 = vunpack.c.l.b16 %v3330
    %v3402 = vunpack.c.l.b16 %v3331
    %v3403 = vunpack.c.l.b16 %v3332
    %v3404 = vunpack.c.l.b16 %v3333
    %v3405 = vunpack.c.l.b16 %v3334
    %v3406 = vunpack.c.l.b16 %v3335
    %v3407 = vunpack.c.l.b16 %v3336
    %v3408 = vunpack.c.l.b16 %v3337
    %v3409 = vunpack.c.l.b16 %v3338
    %v3410 = vunpack.c.l.b16 %v3339
    %v3411 = vunpack.c.l.b16 %v3340
    %v3412 = vunpack.c.l.b16 %v3341
    %v3413 = vunpack.c.l.b16 %v3342
    %v3414 = vunpack.c.l.b16 %v3343
    %v3415 = vunpack.c.l.b16 %v3344
    %v3416 = vunpack.c.l.b16 %v3345
    %v3417 = vunpack.c.l.b16 %v3346
    %v3418 = vunpack.c.l.b16 %v3347
    %v3419 = vunpack.c.l.b16 %v3348
    %v3420 = vunpack.c.l.b16 %v3349
    %v3421 = vunpack.c.l.b16 %v3350
    %v3422 = vunpack.c.l.b16 %v3351
    %v3423 = vunpack.c.l.b16 %v3352
    %v3424 = vunpack.c.l.b16 %v3353
    %v3425 = vpack.c.b16 %v3394, %v3393
    %v3426 = vpack.c.b16 %v3396, %v3395
    %v3427 = vpack.c.b16 %v3398, %v3397
    %v3428 = vpack.c.b16 %v3400, %v3399
    %v3429 = vpack.c.b16 %v3402, %v3401
    %v3430 = vpack.c.b16 %v3404, %v3403
    %v3431 = vpack.c.b16 %v3406, %v3405
    %v3432 = vpack.c.b16 %v3408, %v3407
    %v3433 = vpack.c.b16 %v3410, %v3409
    %v3434 = vpack.c.b16 %v3412, %v3411
    %v3435 = vpack.c.b16 %v3414, %v3413
    %v3436 = vpack.c.b16 %v3416, %v3415
    %v3437 = vpack.c.b16 %v3418, %v3417
    %v3438 = vpack.c.b16 %v3420, %v3419
    %v3439 = vpack.c.b16 %v3422, %v3421
    %v3440 = vpack.c.b16 %v3424, %v3423
    %3457 = vmatprep.subr.bf16.mxu0 0
    %3458 = vmatpush1.bf16.msra.mxu0 %v3425
    %3459 = vmatprep.subr.bf16.mxu0 0
    %3460 = vmatpush1.bf16.msra.mxu0 %v3426
    %3461 = vmatprep.subr.bf16.mxu0 0
    %3462 = vmatpush1.bf16.msra.mxu0 %v3427
    %3463 = vmatprep.subr.bf16.mxu0 0
    %3464 = vmatpush1.bf16.msra.mxu0 %v3428
    %3465 = vmatprep.subr.bf16.mxu0 0
    %3466 = vmatpush1.bf16.msra.mxu0 %v3429
    %3467 = vmatprep.subr.bf16.mxu0 0
    %3468 = vmatpush1.bf16.msra.mxu0 %v3430
    %3469 = vmatprep.subr.bf16.mxu0 0
    %3470 = vmatpush1.bf16.msra.mxu0 %v3431
    %3471 = vmatprep.subr.bf16.mxu0 0
    %3472 = vmatpush1.bf16.msra.mxu0 %v3432
    %3473 = vmatprep.subr.bf16.mxu0 0
    %3474 = vmatpush1.bf16.msra.mxu0 %v3433
    %3475 = vmatprep.subr.bf16.mxu0 0
    %3476 = vmatpush1.bf16.msra.mxu0 %v3434
    %3477 = vmatprep.subr.bf16.mxu0 0
    %3478 = vmatpush1.bf16.msra.mxu0 %v3435
    %3479 = vmatprep.subr.bf16.mxu0 0
    %3480 = vmatpush1.bf16.msra.mxu0 %v3436
    %3481 = vmatprep.subr.bf16.mxu0 0
    %3482 = vmatpush1.bf16.msra.mxu0 %v3437
    %3483 = vmatprep.subr.bf16.mxu0 0
    %3484 = vmatpush1.bf16.msra.mxu0 %v3438
    %3485 = vmatprep.subr.bf16.mxu0 0
    %3486 = vmatpush1.bf16.msra.mxu0 %v3439
    %3487 = vmatprep.subr.bf16.mxu0 0
    %3488 = vmatpush1.bf16.msra.mxu0 %v3440
    %3489 = vmatprep.mubr.bf16.mxu0 %v3321
    %3490 = vmatmul.mubr.bf16.gmra.mrb[0].mxu0 %v3320
    %v3491 = vpop.f32.mrb[0].mxu0
    %v3492 = vadd.f32 %v3359, %v3491
    %v3493 = vpop.f32.mrb[0].mxu0
    %v3494 = vpop.f32.mrb[0].mxu0
    %v3495 = vpop.f32.mrb[0].mxu0
    %3496 = vdwg.mxu0
    %vm3497 = vcmask 58368
    %3498 = vst.msk [vmem:[#allocation12] sm:$0x3] %vm3497, %v3492
    %v3499 = vlaneseq
    %v3500 = vand.u32 %v3499, 127
    %v3501 = vsel %vm3497, %v3492, -inf
    %3502 = vmax.xlane.f32.xlu0 %v3501
    %v3503 = vpop.xlane.xlu0 %3502
    %vm3504 = vcmp.eq.f32.partialorder %v3492, %v3503
    %v3505 = vsel %vm3504, %v3500, 2147483647
    %v3506 = vsel %vm3497, %v3505, 2147483647
    %v3507 = vand.u32 %v3506, 65535
    %v3508 = vshra.s32 %v3506, 16
    %v3509 = vcvt.s32.f32 %v3507
    %v3510 = vcvt.s32.f32 %v3508
    %3511 = vmin.xlane.f32.xlu0 %v3510
    %v3512 = vpop.xlane.xlu0 %3511
    %vm3513 = vcmp.eq.f32.partialorder %v3510, %v3512
    %v3514 = vsel %vm3513, %v3509, inf
    %3515 = vmin.xlane.f32.xlu0 %v3514
    %v3516 = vpop.xlane.xlu0 %3515
    %v3517 = vcvt.f32.s32 %v3516
    %v3518 = vcvt.f32.s32 %v3512
    %v3519 = vshll.u32 %v3518, 16
    %v3520 = vadd.s32 %v3519, %v3517
    %vm3521 = vcmask 1024
    %3522 = vst.msk [vmem:[%s12] sm:$0x3] %vm3521, %v3520
    // Predicated region
    $region62: #{lstm_model_forward.1} parent=1 // pred_check
      _
    $region63: #{lstm_model_forward.1} parent=1 // pred_check_branch
      %3524 = sbr.rel (0) target = $region65
    $region64: #{lstm_model_forward.1} parent=1 // pred_region
      %s3526 = ssub.s32 32, 32
      %3527 = vsyncadd [#allocation6], %s3526
      %s3529 = sshll.u32 [#allocation12], 4
      %s3530 = int_to_ptr.vmem [resolvable:$true] %s3529
      %3532 = dma.vmem_to_hbm [thread:$0]  %s3530, 32, %s11, [#allocation6]
    $region65: #{lstm_model_forward.1} parent=1 // pred_fallthru
      _
    // Predicated region
    $region66: #{lstm_model_forward.1} parent=1 // pred_check
      _
    $region67: #{lstm_model_forward.1} parent=1 // pred_check_branch
      %3534 = sbr.rel (0) target = $region69
    $region68: #{lstm_model_forward.1} parent=1 // pred_region
      _
    $region69: #{lstm_model_forward.1} parent=1 // pred_fallthru
      _
    // Predicated region
    $region70: #{lstm_model_forward.1} parent=1 // pred_check
      _
    $region71: #{lstm_model_forward.1} parent=1 // pred_check_branch
      %3536 = sbr.rel (0) target = $region73
    $region72: #{lstm_model_forward.1} parent=1 // pred_region
      %3537 = dma.done [#allocation6], 32
    $region73: #{lstm_model_forward.1} parent=1 // pred_fallthru
      _
    // Predicated region
    $region74: #{lstm_model_forward.1} parent=1 // pred_check
      _
    $region75: #{lstm_model_forward.1} parent=1 // pred_check_branch
      %3539 = sbr.rel (0) target = $region77
    $region76: #{lstm_model_forward.1} parent=1 // pred_region
      _
    $region77: #{lstm_model_forward.1} parent=1 // pred_fallthru
      _
    %3540 = vsyncpa [#allocation5], 1
    %3541 = vsyncpa [#allocation8], 1
    %3542 = vsyncpa [#allocation11], 1
    %3543 = vsyncpa [#allocation6], 1

</llo_original>
